<compile_context>
chip_gen: v7x
topology: tpu7x:2x2x1
jax: 0.10.0
libtpu: 0.0.40
codegen_flags: <defaults>
</compile_context>

<pallas_src>
import functools

import jax
import jax.numpy as jnp
from jax.experimental import pallas as pl
from jax.experimental.pallas import tpu as pltpu  # noqa: F401  (VMEM scratch no longer needed)

# Model hyperparameters (small demo shapes consistent with the module's forward).
INPUT_SIZE = 8
HIDDEN_SIZE = 32          # 4*H = 128 -> gate block is exactly lane-width
NUM_LAYERS = 3
NUM_CLASSES = 4
BATCH = 2
SEQ = 8
BN_EPS = 1e-5
OUT_PAD = 128             # FC output padded to 128 lanes for a dense store


# ---------------------------------------------------------------------------
# Fused Pallas kernel: 3 LSTM layers (wavefront) + folded BatchNorm/Linear
# ---------------------------------------------------------------------------
def fused_lstm_kernel(x_ref,
                      wih0_ref, whh0_ref, b0_ref,
                      wih1_ref, whh1_ref, b1_ref,
                      wih2_ref, whh2_ref, b2_ref,
                      fcw_ref, fcb_ref,
                      out_ref, *, batch, seq):
    """Whole LSTMModel forward in one gridless kernel invocation.

    x_ref is time-major & flattened: (T*B, D) with row = t*B + b.
    All LSTM weights were transposed to (in, 4H) layout, their i/f/o gate
    columns pre-scaled by 0.5, and the two PyTorch biases fused, in the
    wrapper.  BatchNorm (eval) is already folded into fcw/fcb.
    """
    B, T, L = batch, seq, NUM_LAYERS
    H = whh0_ref.shape[0]

    # Per-gate activation affine (constants, hoisted): with the 0.5 column
    # pre-scale, tanh of the scaled gates gives tanh(z_g) for g and
    # tanh(z/2) for i/f/o; sigmoid(z) = 0.5*(tanh(z/2) + 1).
    lane = jax.lax.broadcasted_iota(jnp.int32, (1, 4 * H), 1)
    is_g = (lane >= 2 * H) & (lane < 3 * H)
    act_scale = jnp.where(is_g, 1.0, 0.5).astype(jnp.float32)
    act_shift = jnp.where(is_g, 0.0, 0.5).astype(jnp.float32)

    whh = (whh0_ref[...], whh1_ref[...], whh2_ref[...])
    wih = (None, wih1_ref[...], wih2_ref[...])
    bias = (None, b1_ref[...], b2_ref[...])

    def cell(gx, h, c, w_hh):
        # Only h @ W_hh is on the serial (recurrence) path; gx already holds
        # the input projection + fused (pre-scaled) biases.
        z = gx + jnp.dot(h, w_hh, preferred_element_type=jnp.float32)
        a = jnp.tanh(z) * act_scale + act_shift        # 1 EUP push, full 4H width
        i, f = a[:, 0 * H:1 * H], a[:, 1 * H:2 * H]
        g, o = a[:, 2 * H:3 * H], a[:, 3 * H:4 * H]
        c_new = f * c + i * g
        h_new = o * jnp.tanh(c_new)                    # 2nd (and last) EUP push
        return h_new, c_new

    # Layer-0 input projection hoisted over the whole sequence: one
    # (T*B, D) @ (D, 4H) matmul, off the serial path (x already time-major).
    gx0 = jnp.dot(x_ref[...], wih0_ref[...],
                  preferred_element_type=jnp.float32) + b0_ref[...]

    zeros = jnp.zeros((B, H), jnp.float32)
    h = [zeros] * L
    c = [zeros] * L
    gx_next = [None] * L   # layer l's input projection for its next timestep

    # Wavefront: super-step s runs layer l at timestep t = s - l.  Fully
    # unrolled -> one straight-line block; cells of different layers in the
    # same super-step are mutually independent, so their MXU/EUP/VPU work
    # fills each other's latency slack.
    for s in range(T + L - 1):
        for l in range(L - 1, -1, -1):     # reverse: consume gx_next[l] before
            t_idx = s - l                  # layer l-1 overwrites it this step
            if not 0 <= t_idx < T:
                continue
            gx = gx0[t_idx * B:(t_idx + 1) * B, :] if l == 0 else gx_next[l]
            h[l], c[l] = cell(gx, h[l], c[l], whh[l])
            if l + 1 < L:
                # Next layer's input projection for this timestep: depends
                # only on the h just produced; consumed next super-step, so
                # it is off the per-super-step serial chain.
                gx_next[l + 1] = (
                    jnp.dot(h[l], wih[l + 1],
                            preferred_element_type=jnp.float32) + bias[l + 1])
        # dropout(p=0.2) between LSTM layers is a no-op in eval mode.

    # Head: eval BatchNorm1d already folded into the FC weights/bias in the
    # wrapper; FC padded to 128 output lanes -> single lane-dense store.
    out_ref[...] = (jnp.dot(h[L - 1], fcw_ref[...],
                            preferred_element_type=jnp.float32) + fcb_ref[...])


# ---------------------------------------------------------------------------
# One-time weight preparation (outside the kernel / jit hot path)
# ---------------------------------------------------------------------------
def fold_params_for_kernel(params):
    """Transpose weights to (in, 4H), fuse the two LSTM biases, pre-scale the
    i/f/o gate columns by 0.5 (tanh-only gate activation trick), fold
    eval-mode BatchNorm into the FC, and pad the FC to 128 output lanes."""
    H = HIDDEN_SIZE
    gate_scale = jnp.concatenate([
        jnp.full((H,), 0.5, jnp.float32), jnp.full((H,), 0.5, jnp.float32),
        jnp.ones((H,), jnp.float32), jnp.full((H,), 0.5, jnp.float32)])

    lstm = []
    for layer in params["lstm"]:
        w_ih_t = layer["w_ih"].T * gate_scale                       # (d_in, 4H)
        w_hh_t = layer["w_hh"].T * gate_scale                       # (H, 4H)
        b = ((layer["b_ih"] + layer["b_hh"]) * gate_scale).reshape(1, 4 * H)
        lstm.append((w_ih_t, w_hh_t, b))

    # Fold BatchNorm1d (eval, running stats) into the final Linear.
    inv_std = jax.lax.rsqrt(params["bn_var"] + BN_EPS)              # (H,)
    scale = params["bn_gamma"] * inv_std
    shift = params["bn_beta"] - params["bn_mean"] * scale
    fc_w_t = params["fc_w"].T * scale[:, None]                      # (H, C)
    fc_b = shift @ params["fc_w"].T + params["fc_b"]                # (C,)

    pad = OUT_PAD - NUM_CLASSES
    fc_w_t = jnp.pad(fc_w_t, ((0, 0), (0, pad)))
    fc_b = jnp.pad(fc_b, (0, pad)).reshape(1, OUT_PAD)
    return {"lstm": lstm, "fc_w_t": fc_w_t, "fc_b": fc_b}


# ---------------------------------------------------------------------------
# Wrapper
# ---------------------------------------------------------------------------
def lstm_model_forward_pallas(x, kp):
    """x: (B, T, input_size), batch_first like the PyTorch module."""
    B, T, D = x.shape
    # Time-major flattened input (row = t*B + b), done in XLA so the kernel's
    # per-step slices are plain static sublane slices.
    x_tm = jnp.transpose(x, (1, 0, 2)).reshape(T * B, D)
    (wih0, whh0, b0), (wih1, whh1, b1), (wih2, whh2, b2) = kp["lstm"]

    out_padded = pl.pallas_call(
        functools.partial(fused_lstm_kernel, batch=B, seq=T),
        out_shape=jax.ShapeDtypeStruct((B, OUT_PAD), jnp.float32),
    )(x_tm, wih0, whh0, b0, wih1, whh1, b1, wih2, whh2, b2,
      kp["fc_w_t"], kp["fc_b"])
    return out_padded[:, :NUM_CLASSES]


lstm_model_forward = jax.jit(lstm_model_forward_pallas)


# ---------------------------------------------------------------------------
# Pure-JAX reference (PyTorch-faithful math) for correctness checking
# ---------------------------------------------------------------------------
def reference_forward(x, params):
    B, T, _ = x.shape
    h_seq = x
    for layer in params["lstm"]:
        H = layer["w_hh"].shape[1]
        w_ih_t, w_hh_t = layer["w_ih"].T, layer["w_hh"].T
        bias = layer["b_ih"] + layer["b_hh"]

        def step(carry, x_t, w_ih_t=w_ih_t, w_hh_t=w_hh_t, bias=bias, H=H):
            h, c = carry
            gates = x_t @ w_ih_t + h @ w_hh_t + bias
            i = jax.nn.sigmoid(gates[:, 0 * H:1 * H])
            f = jax.nn.sigmoid(gates[:, 1 * H:2 * H])
            g = jnp.tanh(gates[:, 2 * H:3 * H])
            o = jax.nn.sigmoid(gates[:, 3 * H:4 * H])
            c = f * c + i * g
            h = o * jnp.tanh(c)
            return (h, c), h

        init = (jnp.zeros((B, H), jnp.float32), jnp.zeros((B, H), jnp.float32))
        (_, _), hs = jax.lax.scan(step, init, jnp.transpose(h_seq, (1, 0, 2)))
        h_seq = jnp.transpose(hs, (1, 0, 2))
    h_last = h_seq[:, -1, :]
    xn = (h_last - params["bn_mean"]) * jax.lax.rsqrt(params["bn_var"] + BN_EPS)
    xn = xn * params["bn_gamma"] + params["bn_beta"]
    return xn @ params["fc_w"].T + params["fc_b"]


# ---------------------------------------------------------------------------
# Deterministic parameter init (PyTorch layout / uniform(-1/sqrt(H), 1/sqrt(H)))
# ---------------------------------------------------------------------------
def init_params(key):
    k = 1.0 / jnp.sqrt(HIDDEN_SIZE)
    lstm_layers = []
    for layer in range(NUM_LAYERS):
        d_in = INPUT_SIZE if layer == 0 else HIDDEN_SIZE
        key, k1, k2, k3, k4 = jax.random.split(key, 5)
        lstm_layers.append({
            "w_ih": jax.random.uniform(k1, (4 * HIDDEN_SIZE, d_in),
                                       jnp.float32, -k, k),
            "w_hh": jax.random.uniform(k2, (4 * HIDDEN_SIZE, HIDDEN_SIZE),
                                       jnp.float32, -k, k),
            "b_ih": jax.random.uniform(k3, (4 * HIDDEN_SIZE,), jnp.float32, -k, k),
            "b_hh": jax.random.uniform(k4, (4 * HIDDEN_SIZE,), jnp.float32, -k, k),
        })

    key, k5, k6 = jax.random.split(key, 3)
    return {
        "lstm": lstm_layers,
        # BatchNorm1d defaults: weight=1, bias=0, running_mean=0, running_var=1
        "bn_gamma": jnp.ones((HIDDEN_SIZE,), jnp.float32),
        "bn_beta": jnp.zeros((HIDDEN_SIZE,), jnp.float32),
        "bn_mean": jnp.zeros((HIDDEN_SIZE,), jnp.float32),
        "bn_var": jnp.ones((HIDDEN_SIZE,), jnp.float32),
        "fc_w": jax.random.uniform(k5, (NUM_CLASSES, HIDDEN_SIZE),
                                   jnp.float32, -k, k),
        "fc_b": jax.random.uniform(k6, (NUM_CLASSES,), jnp.float32, -k, k),
    }


if __name__ == "__main__":
    key = jax.random.PRNGKey(0)
    key, xk = jax.random.split(key)
    x = jax.random.normal(xk, (BATCH, SEQ, INPUT_SIZE), dtype=jnp.float32)
    params = init_params(key)
    kernel_params = fold_params_for_kernel(params)   # one-time weight prep

    out = lstm_model_forward(x, kernel_params)
    out = jax.block_until_ready(out)
    assert out.shape == (BATCH, NUM_CLASSES), out.shape
    assert bool(jnp.all(jnp.isfinite(out)))

    ref = reference_forward(x, params)
    assert bool(jnp.allclose(out, ref, rtol=1e-3, atol=2e-4)), (
        float(jnp.max(jnp.abs(out - ref))))

    print("KERNEL_OK")
</pallas_src>

<mosaic_0001>
module attributes {stable_mosaic.version = 11 : i64} {
  func.func @fused_lstm_kernel(%arg0: memref<16x8xf32, #tpu.memory_space<vmem>>, %arg1: memref<8x128xf32, #tpu.memory_space<vmem>>, %arg2: memref<32x128xf32, #tpu.memory_space<vmem>>, %arg3: memref<1x128xf32, #tpu.memory_space<vmem>>, %arg4: memref<32x128xf32, #tpu.memory_space<vmem>>, %arg5: memref<32x128xf32, #tpu.memory_space<vmem>>, %arg6: memref<1x128xf32, #tpu.memory_space<vmem>>, %arg7: memref<32x128xf32, #tpu.memory_space<vmem>>, %arg8: memref<32x128xf32, #tpu.memory_space<vmem>>, %arg9: memref<1x128xf32, #tpu.memory_space<vmem>>, %arg10: memref<32x128xf32, #tpu.memory_space<vmem>>, %arg11: memref<1x128xf32, #tpu.memory_space<vmem>>, %arg12: memref<2x128xf32, #tpu.memory_space<vmem>>) attributes {dimension_semantics = [], scalar_prefetch = 0 : i64, scratch_operands = 0 : i64, tpu.core_type = #tpu.core_type<tc>} {
    %0 = tpu.iota {dimensions = array<i32: 1>} : vector<1x128xi32>
    %c64_i32 = arith.constant 64 : i32
    %1 = vector.broadcast %c64_i32 : i32 to vector<1x128xi32>
    %2 = arith.cmpi sge, %0, %1 : vector<1x128xi32>
    %c96_i32 = arith.constant 96 : i32
    %3 = vector.broadcast %c96_i32 : i32 to vector<1x128xi32>
    %4 = arith.cmpi slt, %0, %3 : vector<1x128xi32>
    %5 = arith.andi %2, %4 : vector<1x128xi1>
    %cst = arith.constant 1.000000e+00 : f32
    %cst_0 = arith.constant 5.000000e-01 : f32
    %6 = vector.broadcast %cst : f32 to vector<1x128xf32>
    %7 = vector.broadcast %cst_0 : f32 to vector<1x128xf32>
    %8 = arith.select %5, %6, %7 : vector<1x128xi1>, vector<1x128xf32>
    %cst_1 = arith.constant 0.000000e+00 : f32
    %cst_2 = arith.constant 5.000000e-01 : f32
    %9 = vector.broadcast %cst_1 : f32 to vector<1x128xf32>
    %10 = vector.broadcast %cst_2 : f32 to vector<1x128xf32>
    %11 = arith.select %5, %9, %10 : vector<1x128xi1>, vector<1x128xf32>
    %c0 = arith.constant 0 : index
    %c0_3 = arith.constant 0 : index
    %12 = vector.load %arg2[%c0, %c0_3] : memref<32x128xf32, #tpu.memory_space<vmem>>, vector<32x128xf32>
    %c0_4 = arith.constant 0 : index
    %c0_5 = arith.constant 0 : index
    %13 = vector.load %arg5[%c0_4, %c0_5] : memref<32x128xf32, #tpu.memory_space<vmem>>, vector<32x128xf32>
    %c0_6 = arith.constant 0 : index
    %c0_7 = arith.constant 0 : index
    %14 = vector.load %arg8[%c0_6, %c0_7] : memref<32x128xf32, #tpu.memory_space<vmem>>, vector<32x128xf32>
    %c0_8 = arith.constant 0 : index
    %c0_9 = arith.constant 0 : index
    %15 = vector.load %arg4[%c0_8, %c0_9] : memref<32x128xf32, #tpu.memory_space<vmem>>, vector<32x128xf32>
    %c0_10 = arith.constant 0 : index
    %c0_11 = arith.constant 0 : index
    %16 = vector.load %arg7[%c0_10, %c0_11] : memref<32x128xf32, #tpu.memory_space<vmem>>, vector<32x128xf32>
    %c0_12 = arith.constant 0 : index
    %c0_13 = arith.constant 0 : index
    %17 = vector.load %arg6[%c0_12, %c0_13] : memref<1x128xf32, #tpu.memory_space<vmem>>, vector<1x128xf32>
    %c0_14 = arith.constant 0 : index
    %c0_15 = arith.constant 0 : index
    %18 = vector.load %arg9[%c0_14, %c0_15] : memref<1x128xf32, #tpu.memory_space<vmem>>, vector<1x128xf32>
    %c0_16 = arith.constant 0 : index
    %c0_17 = arith.constant 0 : index
    %19 = vector.load %arg0[%c0_16, %c0_17] : memref<16x8xf32, #tpu.memory_space<vmem>>, vector<16x8xf32>
    %c0_18 = arith.constant 0 : index
    %c0_19 = arith.constant 0 : index
    %20 = vector.load %arg1[%c0_18, %c0_19] : memref<8x128xf32, #tpu.memory_space<vmem>>, vector<8x128xf32>
    %cst_20 = arith.constant dense<0.000000e+00> : vector<16x128xf32>
    %21 = tpu.matmul %19, %20, %cst_20 {dimension_numbers = #tpu.dot_dimension_numbers<[1], [0], [0], [1], [0, 0, 1, 1], [], []>} : vector<16x8xf32>, vector<8x128xf32>, vector<16x128xf32> -> vector<16x128xf32>
    %c0_21 = arith.constant 0 : index
    %c0_22 = arith.constant 0 : index
    %22 = vector.load %arg3[%c0_21, %c0_22] : memref<1x128xf32, #tpu.memory_space<vmem>>, vector<1x128xf32>
    %23 = vector.broadcast %22 : vector<1x128xf32> to vector<16x128xf32>
    %24 = arith.addf %21, %23 : vector<16x128xf32>
    %cst_23 = arith.constant 0.000000e+00 : f32
    %25 = vector.broadcast %cst_23 : f32 to vector<2x32xf32>
    %26 = vector.extract_strided_slice %24 {offsets = [0, 0], sizes = [2, 128], strides = [1, 1]} : vector<16x128xf32> to vector<2x128xf32>
    %cst_24 = arith.constant dense<0.000000e+00> : vector<2x128xf32>
    %27 = tpu.matmul %25, %12, %cst_24 {dimension_numbers = #tpu.dot_dimension_numbers<[1], [0], [0], [1], [0, 0, 1, 1], [], []>} : vector<2x32xf32>, vector<32x128xf32>, vector<2x128xf32> -> vector<2x128xf32>
    %28 = arith.addf %26, %27 : vector<2x128xf32>
    %29 = math.tanh %28 : vector<2x128xf32>
    %30 = vector.broadcast %8 : vector<1x128xf32> to vector<2x128xf32>
    %31 = arith.mulf %29, %30 : vector<2x128xf32>
    %32 = vector.broadcast %11 : vector<1x128xf32> to vector<2x128xf32>
    %33 = arith.addf %31, %32 : vector<2x128xf32>
    %34 = vector.extract_strided_slice %33 {offsets = [0, 0], sizes = [2, 32], strides = [1, 1]} : vector<2x128xf32> to vector<2x32xf32>
    %35 = vector.extract_strided_slice %33 {offsets = [0, 32], sizes = [2, 32], strides = [1, 1]} : vector<2x128xf32> to vector<2x32xf32>
    %36 = vector.extract_strided_slice %33 {offsets = [0, 64], sizes = [2, 32], strides = [1, 1]} : vector<2x128xf32> to vector<2x32xf32>
    %37 = vector.extract_strided_slice %33 {offsets = [0, 96], sizes = [2, 32], strides = [1, 1]} : vector<2x128xf32> to vector<2x32xf32>
    %38 = arith.mulf %35, %25 : vector<2x32xf32>
    %39 = arith.mulf %34, %36 : vector<2x32xf32>
    %40 = arith.addf %38, %39 : vector<2x32xf32>
    %41 = math.tanh %40 : vector<2x32xf32>
    %42 = arith.mulf %37, %41 : vector<2x32xf32>
    %cst_25 = arith.constant dense<0.000000e+00> : vector<2x128xf32>
    %43 = tpu.matmul %42, %15, %cst_25 {dimension_numbers = #tpu.dot_dimension_numbers<[1], [0], [0], [1], [0, 0, 1, 1], [], []>} : vector<2x32xf32>, vector<32x128xf32>, vector<2x128xf32> -> vector<2x128xf32>
    %44 = vector.broadcast %17 : vector<1x128xf32> to vector<2x128xf32>
    %45 = arith.addf %43, %44 : vector<2x128xf32>
    %cst_26 = arith.constant dense<0.000000e+00> : vector<2x128xf32>
    %46 = tpu.matmul %25, %13, %cst_26 {dimension_numbers = #tpu.dot_dimension_numbers<[1], [0], [0], [1], [0, 0, 1, 1], [], []>} : vector<2x32xf32>, vector<32x128xf32>, vector<2x128xf32> -> vector<2x128xf32>
    %47 = arith.addf %45, %46 : vector<2x128xf32>
    %48 = math.tanh %47 : vector<2x128xf32>
    %49 = vector.broadcast %8 : vector<1x128xf32> to vector<2x128xf32>
    %50 = arith.mulf %48, %49 : vector<2x128xf32>
    %51 = vector.broadcast %11 : vector<1x128xf32> to vector<2x128xf32>
    %52 = arith.addf %50, %51 : vector<2x128xf32>
    %53 = vector.extract_strided_slice %52 {offsets = [0, 0], sizes = [2, 32], strides = [1, 1]} : vector<2x128xf32> to vector<2x32xf32>
    %54 = vector.extract_strided_slice %52 {offsets = [0, 32], sizes = [2, 32], strides = [1, 1]} : vector<2x128xf32> to vector<2x32xf32>
    %55 = vector.extract_strided_slice %52 {offsets = [0, 64], sizes = [2, 32], strides = [1, 1]} : vector<2x128xf32> to vector<2x32xf32>
    %56 = vector.extract_strided_slice %52 {offsets = [0, 96], sizes = [2, 32], strides = [1, 1]} : vector<2x128xf32> to vector<2x32xf32>
    %57 = arith.mulf %54, %25 : vector<2x32xf32>
    %58 = arith.mulf %53, %55 : vector<2x32xf32>
    %59 = arith.addf %57, %58 : vector<2x32xf32>
    %60 = math.tanh %59 : vector<2x32xf32>
    %61 = arith.mulf %56, %60 : vector<2x32xf32>
    %cst_27 = arith.constant dense<0.000000e+00> : vector<2x128xf32>
    %62 = tpu.matmul %61, %16, %cst_27 {dimension_numbers = #tpu.dot_dimension_numbers<[1], [0], [0], [1], [0, 0, 1, 1], [], []>} : vector<2x32xf32>, vector<32x128xf32>, vector<2x128xf32> -> vector<2x128xf32>
    %63 = vector.broadcast %18 : vector<1x128xf32> to vector<2x128xf32>
    %64 = arith.addf %62, %63 : vector<2x128xf32>
    %65 = vector.extract_strided_slice %24 {offsets = [2, 0], sizes = [2, 128], strides = [1, 1]} : vector<16x128xf32> to vector<2x128xf32>
    %cst_28 = arith.constant dense<0.000000e+00> : vector<2x128xf32>
    %66 = tpu.matmul %42, %12, %cst_28 {dimension_numbers = #tpu.dot_dimension_numbers<[1], [0], [0], [1], [0, 0, 1, 1], [], []>} : vector<2x32xf32>, vector<32x128xf32>, vector<2x128xf32> -> vector<2x128xf32>
    %67 = arith.addf %65, %66 : vector<2x128xf32>
    %68 = math.tanh %67 : vector<2x128xf32>
    %69 = vector.broadcast %8 : vector<1x128xf32> to vector<2x128xf32>
    %70 = arith.mulf %68, %69 : vector<2x128xf32>
    %71 = vector.broadcast %11 : vector<1x128xf32> to vector<2x128xf32>
    %72 = arith.addf %70, %71 : vector<2x128xf32>
    %73 = vector.extract_strided_slice %72 {offsets = [0, 0], sizes = [2, 32], strides = [1, 1]} : vector<2x128xf32> to vector<2x32xf32>
    %74 = vector.extract_strided_slice %72 {offsets = [0, 32], sizes = [2, 32], strides = [1, 1]} : vector<2x128xf32> to vector<2x32xf32>
    %75 = vector.extract_strided_slice %72 {offsets = [0, 64], sizes = [2, 32], strides = [1, 1]} : vector<2x128xf32> to vector<2x32xf32>
    %76 = vector.extract_strided_slice %72 {offsets = [0, 96], sizes = [2, 32], strides = [1, 1]} : vector<2x128xf32> to vector<2x32xf32>
    %77 = arith.mulf %74, %40 : vector<2x32xf32>
    %78 = arith.mulf %73, %75 : vector<2x32xf32>
    %79 = arith.addf %77, %78 : vector<2x32xf32>
    %80 = math.tanh %79 : vector<2x32xf32>
    %81 = arith.mulf %76, %80 : vector<2x32xf32>
    %cst_29 = arith.constant dense<0.000000e+00> : vector<2x128xf32>
    %82 = tpu.matmul %81, %15, %cst_29 {dimension_numbers = #tpu.dot_dimension_numbers<[1], [0], [0], [1], [0, 0, 1, 1], [], []>} : vector<2x32xf32>, vector<32x128xf32>, vector<2x128xf32> -> vector<2x128xf32>
    %83 = vector.broadcast %17 : vector<1x128xf32> to vector<2x128xf32>
    %84 = arith.addf %82, %83 : vector<2x128xf32>
    %cst_30 = arith.constant dense<0.000000e+00> : vector<2x128xf32>
    %85 = tpu.matmul %25, %14, %cst_30 {dimension_numbers = #tpu.dot_dimension_numbers<[1], [0], [0], [1], [0, 0, 1, 1], [], []>} : vector<2x32xf32>, vector<32x128xf32>, vector<2x128xf32> -> vector<2x128xf32>
    %86 = arith.addf %64, %85 : vector<2x128xf32>
    %87 = math.tanh %86 : vector<2x128xf32>
    %88 = vector.broadcast %8 : vector<1x128xf32> to vector<2x128xf32>
    %89 = arith.mulf %87, %88 : vector<2x128xf32>
    %90 = vector.broadcast %11 : vector<1x128xf32> to vector<2x128xf32>
    %91 = arith.addf %89, %90 : vector<2x128xf32>
    %92 = vector.extract_strided_slice %91 {offsets = [0, 0], sizes = [2, 32], strides = [1, 1]} : vector<2x128xf32> to vector<2x32xf32>
    %93 = vector.extract_strided_slice %91 {offsets = [0, 32], sizes = [2, 32], strides = [1, 1]} : vector<2x128xf32> to vector<2x32xf32>
    %94 = vector.extract_strided_slice %91 {offsets = [0, 64], sizes = [2, 32], strides = [1, 1]} : vector<2x128xf32> to vector<2x32xf32>
    %95 = vector.extract_strided_slice %91 {offsets = [0, 96], sizes = [2, 32], strides = [1, 1]} : vector<2x128xf32> to vector<2x32xf32>
    %96 = arith.mulf %93, %25 : vector<2x32xf32>
    %97 = arith.mulf %92, %94 : vector<2x32xf32>
    %98 = arith.addf %96, %97 : vector<2x32xf32>
    %99 = math.tanh %98 : vector<2x32xf32>
    %100 = arith.mulf %95, %99 : vector<2x32xf32>
    %cst_31 = arith.constant dense<0.000000e+00> : vector<2x128xf32>
    %101 = tpu.matmul %61, %13, %cst_31 {dimension_numbers = #tpu.dot_dimension_numbers<[1], [0], [0], [1], [0, 0, 1, 1], [], []>} : vector<2x32xf32>, vector<32x128xf32>, vector<2x128xf32> -> vector<2x128xf32>
    %102 = arith.addf %84, %101 : vector<2x128xf32>
    %103 = math.tanh %102 : vector<2x128xf32>
    %104 = vector.broadcast %8 : vector<1x128xf32> to vector<2x128xf32>
    %105 = arith.mulf %103, %104 : vector<2x128xf32>
    %106 = vector.broadcast %11 : vector<1x128xf32> to vector<2x128xf32>
    %107 = arith.addf %105, %106 : vector<2x128xf32>
    %108 = vector.extract_strided_slice %107 {offsets = [0, 0], sizes = [2, 32], strides = [1, 1]} : vector<2x128xf32> to vector<2x32xf32>
    %109 = vector.extract_strided_slice %107 {offsets = [0, 32], sizes = [2, 32], strides = [1, 1]} : vector<2x128xf32> to vector<2x32xf32>
    %110 = vector.extract_strided_slice %107 {offsets = [0, 64], sizes = [2, 32], strides = [1, 1]} : vector<2x128xf32> to vector<2x32xf32>
    %111 = vector.extract_strided_slice %107 {offsets = [0, 96], sizes = [2, 32], strides = [1, 1]} : vector<2x128xf32> to vector<2x32xf32>
    %112 = arith.mulf %109, %59 : vector<2x32xf32>
    %113 = arith.mulf %108, %110 : vector<2x32xf32>
    %114 = arith.addf %112, %113 : vector<2x32xf32>
    %115 = math.tanh %114 : vector<2x32xf32>
    %116 = arith.mulf %111, %115 : vector<2x32xf32>
    %cst_32 = arith.constant dense<0.000000e+00> : vector<2x128xf32>
    %117 = tpu.matmul %116, %16, %cst_32 {dimension_numbers = #tpu.dot_dimension_numbers<[1], [0], [0], [1], [0, 0, 1, 1], [], []>} : vector<2x32xf32>, vector<32x128xf32>, vector<2x128xf32> -> vector<2x128xf32>
    %118 = vector.broadcast %18 : vector<1x128xf32> to vector<2x128xf32>
    %119 = arith.addf %117, %118 : vector<2x128xf32>
    %120 = vector.extract_strided_slice %24 {offsets = [4, 0], sizes = [2, 128], strides = [1, 1]} : vector<16x128xf32> to vector<2x128xf32>
    %cst_33 = arith.constant dense<0.000000e+00> : vector<2x128xf32>
    %121 = tpu.matmul %81, %12, %cst_33 {dimension_numbers = #tpu.dot_dimension_numbers<[1], [0], [0], [1], [0, 0, 1, 1], [], []>} : vector<2x32xf32>, vector<32x128xf32>, vector<2x128xf32> -> vector<2x128xf32>
    %122 = arith.addf %120, %121 : vector<2x128xf32>
    %123 = math.tanh %122 : vector<2x128xf32>
    %124 = vector.broadcast %8 : vector<1x128xf32> to vector<2x128xf32>
    %125 = arith.mulf %123, %124 : vector<2x128xf32>
    %126 = vector.broadcast %11 : vector<1x128xf32> to vector<2x128xf32>
    %127 = arith.addf %125, %126 : vector<2x128xf32>
    %128 = vector.extract_strided_slice %127 {offsets = [0, 0], sizes = [2, 32], strides = [1, 1]} : vector<2x128xf32> to vector<2x32xf32>
    %129 = vector.extract_strided_slice %127 {offsets = [0, 32], sizes = [2, 32], strides = [1, 1]} : vector<2x128xf32> to vector<2x32xf32>
    %130 = vector.extract_strided_slice %127 {offsets = [0, 64], sizes = [2, 32], strides = [1, 1]} : vector<2x128xf32> to vector<2x32xf32>
    %131 = vector.extract_strided_slice %127 {offsets = [0, 96], sizes = [2, 32], strides = [1, 1]} : vector<2x128xf32> to vector<2x32xf32>
    %132 = arith.mulf %129, %79 : vector<2x32xf32>
    %133 = arith.mulf %128, %130 : vector<2x32xf32>
    %134 = arith.addf %132, %133 : vector<2x32xf32>
    %135 = math.tanh %134 : vector<2x32xf32>
    %136 = arith.mulf %131, %135 : vector<2x32xf32>
    %cst_34 = arith.constant dense<0.000000e+00> : vector<2x128xf32>
    %137 = tpu.matmul %136, %15, %cst_34 {dimension_numbers = #tpu.dot_dimension_numbers<[1], [0], [0], [1], [0, 0, 1, 1], [], []>} : vector<2x32xf32>, vector<32x128xf32>, vector<2x128xf32> -> vector<2x128xf32>
    %138 = vector.broadcast %17 : vector<1x128xf32> to vector<2x128xf32>
    %139 = arith.addf %137, %138 : vector<2x128xf32>
    %cst_35 = arith.constant dense<0.000000e+00> : vector<2x128xf32>
    %140 = tpu.matmul %100, %14, %cst_35 {dimension_numbers = #tpu.dot_dimension_numbers<[1], [0], [0], [1], [0, 0, 1, 1], [], []>} : vector<2x32xf32>, vector<32x128xf32>, vector<2x128xf32> -> vector<2x128xf32>
    %141 = arith.addf %119, %140 : vector<2x128xf32>
    %142 = math.tanh %141 : vector<2x128xf32>
    %143 = vector.broadcast %8 : vector<1x128xf32> to vector<2x128xf32>
    %144 = arith.mulf %142, %143 : vector<2x128xf32>
    %145 = vector.broadcast %11 : vector<1x128xf32> to vector<2x128xf32>
    %146 = arith.addf %144, %145 : vector<2x128xf32>
    %147 = vector.extract_strided_slice %146 {offsets = [0, 0], sizes = [2, 32], strides = [1, 1]} : vector<2x128xf32> to vector<2x32xf32>
    %148 = vector.extract_strided_slice %146 {offsets = [0, 32], sizes = [2, 32], strides = [1, 1]} : vector<2x128xf32> to vector<2x32xf32>
    %149 = vector.extract_strided_slice %146 {offsets = [0, 64], sizes = [2, 32], strides = [1, 1]} : vector<2x128xf32> to vector<2x32xf32>
    %150 = vector.extract_strided_slice %146 {offsets = [0, 96], sizes = [2, 32], strides = [1, 1]} : vector<2x128xf32> to vector<2x32xf32>
    %151 = arith.mulf %148, %98 : vector<2x32xf32>
    %152 = arith.mulf %147, %149 : vector<2x32xf32>
    %153 = arith.addf %151, %152 : vector<2x32xf32>
    %154 = math.tanh %153 : vector<2x32xf32>
    %155 = arith.mulf %150, %154 : vector<2x32xf32>
    %cst_36 = arith.constant dense<0.000000e+00> : vector<2x128xf32>
    %156 = tpu.matmul %116, %13, %cst_36 {dimension_numbers = #tpu.dot_dimension_numbers<[1], [0], [0], [1], [0, 0, 1, 1], [], []>} : vector<2x32xf32>, vector<32x128xf32>, vector<2x128xf32> -> vector<2x128xf32>
    %157 = arith.addf %139, %156 : vector<2x128xf32>
    %158 = math.tanh %157 : vector<2x128xf32>
    %159 = vector.broadcast %8 : vector<1x128xf32> to vector<2x128xf32>
    %160 = arith.mulf %158, %159 : vector<2x128xf32>
    %161 = vector.broadcast %11 : vector<1x128xf32> to vector<2x128xf32>
    %162 = arith.addf %160, %161 : vector<2x128xf32>
    %163 = vector.extract_strided_slice %162 {offsets = [0, 0], sizes = [2, 32], strides = [1, 1]} : vector<2x128xf32> to vector<2x32xf32>
    %164 = vector.extract_strided_slice %162 {offsets = [0, 32], sizes = [2, 32], strides = [1, 1]} : vector<2x128xf32> to vector<2x32xf32>
    %165 = vector.extract_strided_slice %162 {offsets = [0, 64], sizes = [2, 32], strides = [1, 1]} : vector<2x128xf32> to vector<2x32xf32>
    %166 = vector.extract_strided_slice %162 {offsets = [0, 96], sizes = [2, 32], strides = [1, 1]} : vector<2x128xf32> to vector<2x32xf32>
    %167 = arith.mulf %164, %114 : vector<2x32xf32>
    %168 = arith.mulf %163, %165 : vector<2x32xf32>
    %169 = arith.addf %167, %168 : vector<2x32xf32>
    %170 = math.tanh %169 : vector<2x32xf32>
    %171 = arith.mulf %166, %170 : vector<2x32xf32>
    %cst_37 = arith.constant dense<0.000000e+00> : vector<2x128xf32>
    %172 = tpu.matmul %171, %16, %cst_37 {dimension_numbers = #tpu.dot_dimension_numbers<[1], [0], [0], [1], [0, 0, 1, 1], [], []>} : vector<2x32xf32>, vector<32x128xf32>, vector<2x128xf32> -> vector<2x128xf32>
    %173 = vector.broadcast %18 : vector<1x128xf32> to vector<2x128xf32>
    %174 = arith.addf %172, %173 : vector<2x128xf32>
    %175 = vector.extract_strided_slice %24 {offsets = [6, 0], sizes = [2, 128], strides = [1, 1]} : vector<16x128xf32> to vector<2x128xf32>
    %cst_38 = arith.constant dense<0.000000e+00> : vector<2x128xf32>
    %176 = tpu.matmul %136, %12, %cst_38 {dimension_numbers = #tpu.dot_dimension_numbers<[1], [0], [0], [1], [0, 0, 1, 1], [], []>} : vector<2x32xf32>, vector<32x128xf32>, vector<2x128xf32> -> vector<2x128xf32>
    %177 = arith.addf %175, %176 : vector<2x128xf32>
    %178 = math.tanh %177 : vector<2x128xf32>
    %179 = vector.broadcast %8 : vector<1x128xf32> to vector<2x128xf32>
    %180 = arith.mulf %178, %179 : vector<2x128xf32>
    %181 = vector.broadcast %11 : vector<1x128xf32> to vector<2x128xf32>
    %182 = arith.addf %180, %181 : vector<2x128xf32>
    %183 = vector.extract_strided_slice %182 {offsets = [0, 0], sizes = [2, 32], strides = [1, 1]} : vector<2x128xf32> to vector<2x32xf32>
    %184 = vector.extract_strided_slice %182 {offsets = [0, 32], sizes = [2, 32], strides = [1, 1]} : vector<2x128xf32> to vector<2x32xf32>
    %185 = vector.extract_strided_slice %182 {offsets = [0, 64], sizes = [2, 32], strides = [1, 1]} : vector<2x128xf32> to vector<2x32xf32>
    %186 = vector.extract_strided_slice %182 {offsets = [0, 96], sizes = [2, 32], strides = [1, 1]} : vector<2x128xf32> to vector<2x32xf32>
    %187 = arith.mulf %184, %134 : vector<2x32xf32>
    %188 = arith.mulf %183, %185 : vector<2x32xf32>
    %189 = arith.addf %187, %188 : vector<2x32xf32>
    %190 = math.tanh %189 : vector<2x32xf32>
    %191 = arith.mulf %186, %190 : vector<2x32xf32>
    %cst_39 = arith.constant dense<0.000000e+00> : vector<2x128xf32>
    %192 = tpu.matmul %191, %15, %cst_39 {dimension_numbers = #tpu.dot_dimension_numbers<[1], [0], [0], [1], [0, 0, 1, 1], [], []>} : vector<2x32xf32>, vector<32x128xf32>, vector<2x128xf32> -> vector<2x128xf32>
    %193 = vector.broadcast %17 : vector<1x128xf32> to vector<2x128xf32>
    %194 = arith.addf %192, %193 : vector<2x128xf32>
    %cst_40 = arith.constant dense<0.000000e+00> : vector<2x128xf32>
    %195 = tpu.matmul %155, %14, %cst_40 {dimension_numbers = #tpu.dot_dimension_numbers<[1], [0], [0], [1], [0, 0, 1, 1], [], []>} : vector<2x32xf32>, vector<32x128xf32>, vector<2x128xf32> -> vector<2x128xf32>
    %196 = arith.addf %174, %195 : vector<2x128xf32>
    %197 = math.tanh %196 : vector<2x128xf32>
    %198 = vector.broadcast %8 : vector<1x128xf32> to vector<2x128xf32>
    %199 = arith.mulf %197, %198 : vector<2x128xf32>
    %200 = vector.broadcast %11 : vector<1x128xf32> to vector<2x128xf32>
    %201 = arith.addf %199, %200 : vector<2x128xf32>
    %202 = vector.extract_strided_slice %201 {offsets = [0, 0], sizes = [2, 32], strides = [1, 1]} : vector<2x128xf32> to vector<2x32xf32>
    %203 = vector.extract_strided_slice %201 {offsets = [0, 32], sizes = [2, 32], strides = [1, 1]} : vector<2x128xf32> to vector<2x32xf32>
    %204 = vector.extract_strided_slice %201 {offsets = [0, 64], sizes = [2, 32], strides = [1, 1]} : vector<2x128xf32> to vector<2x32xf32>
    %205 = vector.extract_strided_slice %201 {offsets = [0, 96], sizes = [2, 32], strides = [1, 1]} : vector<2x128xf32> to vector<2x32xf32>
    %206 = arith.mulf %203, %153 : vector<2x32xf32>
    %207 = arith.mulf %202, %204 : vector<2x32xf32>
    %208 = arith.addf %206, %207 : vector<2x32xf32>
    %209 = math.tanh %208 : vector<2x32xf32>
    %210 = arith.mulf %205, %209 : vector<2x32xf32>
    %cst_41 = arith.constant dense<0.000000e+00> : vector<2x128xf32>
    %211 = tpu.matmul %171, %13, %cst_41 {dimension_numbers = #tpu.dot_dimension_numbers<[1], [0], [0], [1], [0, 0, 1, 1], [], []>} : vector<2x32xf32>, vector<32x128xf32>, vector<2x128xf32> -> vector<2x128xf32>
    %212 = arith.addf %194, %211 : vector<2x128xf32>
    %213 = math.tanh %212 : vector<2x128xf32>
    %214 = vector.broadcast %8 : vector<1x128xf32> to vector<2x128xf32>
    %215 = arith.mulf %213, %214 : vector<2x128xf32>
    %216 = vector.broadcast %11 : vector<1x128xf32> to vector<2x128xf32>
    %217 = arith.addf %215, %216 : vector<2x128xf32>
    %218 = vector.extract_strided_slice %217 {offsets = [0, 0], sizes = [2, 32], strides = [1, 1]} : vector<2x128xf32> to vector<2x32xf32>
    %219 = vector.extract_strided_slice %217 {offsets = [0, 32], sizes = [2, 32], strides = [1, 1]} : vector<2x128xf32> to vector<2x32xf32>
    %220 = vector.extract_strided_slice %217 {offsets = [0, 64], sizes = [2, 32], strides = [1, 1]} : vector<2x128xf32> to vector<2x32xf32>
    %221 = vector.extract_strided_slice %217 {offsets = [0, 96], sizes = [2, 32], strides = [1, 1]} : vector<2x128xf32> to vector<2x32xf32>
    %222 = arith.mulf %219, %169 : vector<2x32xf32>
    %223 = arith.mulf %218, %220 : vector<2x32xf32>
    %224 = arith.addf %222, %223 : vector<2x32xf32>
    %225 = math.tanh %224 : vector<2x32xf32>
    %226 = arith.mulf %221, %225 : vector<2x32xf32>
    %cst_42 = arith.constant dense<0.000000e+00> : vector<2x128xf32>
    %227 = tpu.matmul %226, %16, %cst_42 {dimension_numbers = #tpu.dot_dimension_numbers<[1], [0], [0], [1], [0, 0, 1, 1], [], []>} : vector<2x32xf32>, vector<32x128xf32>, vector<2x128xf32> -> vector<2x128xf32>
    %228 = vector.broadcast %18 : vector<1x128xf32> to vector<2x128xf32>
    %229 = arith.addf %227, %228 : vector<2x128xf32>
    %230 = vector.extract_strided_slice %24 {offsets = [8, 0], sizes = [2, 128], strides = [1, 1]} : vector<16x128xf32> to vector<2x128xf32>
    %cst_43 = arith.constant dense<0.000000e+00> : vector<2x128xf32>
    %231 = tpu.matmul %191, %12, %cst_43 {dimension_numbers = #tpu.dot_dimension_numbers<[1], [0], [0], [1], [0, 0, 1, 1], [], []>} : vector<2x32xf32>, vector<32x128xf32>, vector<2x128xf32> -> vector<2x128xf32>
    %232 = arith.addf %230, %231 : vector<2x128xf32>
    %233 = math.tanh %232 : vector<2x128xf32>
    %234 = vector.broadcast %8 : vector<1x128xf32> to vector<2x128xf32>
    %235 = arith.mulf %233, %234 : vector<2x128xf32>
    %236 = vector.broadcast %11 : vector<1x128xf32> to vector<2x128xf32>
    %237 = arith.addf %235, %236 : vector<2x128xf32>
    %238 = vector.extract_strided_slice %237 {offsets = [0, 0], sizes = [2, 32], strides = [1, 1]} : vector<2x128xf32> to vector<2x32xf32>
    %239 = vector.extract_strided_slice %237 {offsets = [0, 32], sizes = [2, 32], strides = [1, 1]} : vector<2x128xf32> to vector<2x32xf32>
    %240 = vector.extract_strided_slice %237 {offsets = [0, 64], sizes = [2, 32], strides = [1, 1]} : vector<2x128xf32> to vector<2x32xf32>
    %241 = vector.extract_strided_slice %237 {offsets = [0, 96], sizes = [2, 32], strides = [1, 1]} : vector<2x128xf32> to vector<2x32xf32>
    %242 = arith.mulf %239, %189 : vector<2x32xf32>
    %243 = arith.mulf %238, %240 : vector<2x32xf32>
    %244 = arith.addf %242, %243 : vector<2x32xf32>
    %245 = math.tanh %244 : vector<2x32xf32>
    %246 = arith.mulf %241, %245 : vector<2x32xf32>
    %cst_44 = arith.constant dense<0.000000e+00> : vector<2x128xf32>
    %247 = tpu.matmul %246, %15, %cst_44 {dimension_numbers = #tpu.dot_dimension_numbers<[1], [0], [0], [1], [0, 0, 1, 1], [], []>} : vector<2x32xf32>, vector<32x128xf32>, vector<2x128xf32> -> vector<2x128xf32>
    %248 = vector.broadcast %17 : vector<1x128xf32> to vector<2x128xf32>
    %249 = arith.addf %247, %248 : vector<2x128xf32>
    %cst_45 = arith.constant dense<0.000000e+00> : vector<2x128xf32>
    %250 = tpu.matmul %210, %14, %cst_45 {dimension_numbers = #tpu.dot_dimension_numbers<[1], [0], [0], [1], [0, 0, 1, 1], [], []>} : vector<2x32xf32>, vector<32x128xf32>, vector<2x128xf32> -> vector<2x128xf32>
    %251 = arith.addf %229, %250 : vector<2x128xf32>
    %252 = math.tanh %251 : vector<2x128xf32>
    %253 = vector.broadcast %8 : vector<1x128xf32> to vector<2x128xf32>
    %254 = arith.mulf %252, %253 : vector<2x128xf32>
    %255 = vector.broadcast %11 : vector<1x128xf32> to vector<2x128xf32>
    %256 = arith.addf %254, %255 : vector<2x128xf32>
    %257 = vector.extract_strided_slice %256 {offsets = [0, 0], sizes = [2, 32], strides = [1, 1]} : vector<2x128xf32> to vector<2x32xf32>
    %258 = vector.extract_strided_slice %256 {offsets = [0, 32], sizes = [2, 32], strides = [1, 1]} : vector<2x128xf32> to vector<2x32xf32>
    %259 = vector.extract_strided_slice %256 {offsets = [0, 64], sizes = [2, 32], strides = [1, 1]} : vector<2x128xf32> to vector<2x32xf32>
    %260 = vector.extract_strided_slice %256 {offsets = [0, 96], sizes = [2, 32], strides = [1, 1]} : vector<2x128xf32> to vector<2x32xf32>
    %261 = arith.mulf %258, %208 : vector<2x32xf32>
    %262 = arith.mulf %257, %259 : vector<2x32xf32>
    %263 = arith.addf %261, %262 : vector<2x32xf32>
    %264 = math.tanh %263 : vector<2x32xf32>
    %265 = arith.mulf %260, %264 : vector<2x32xf32>
    %cst_46 = arith.constant dense<0.000000e+00> : vector<2x128xf32>
    %266 = tpu.matmul %226, %13, %cst_46 {dimension_numbers = #tpu.dot_dimension_numbers<[1], [0], [0], [1], [0, 0, 1, 1], [], []>} : vector<2x32xf32>, vector<32x128xf32>, vector<2x128xf32> -> vector<2x128xf32>
    %267 = arith.addf %249, %266 : vector<2x128xf32>
    %268 = math.tanh %267 : vector<2x128xf32>
    %269 = vector.broadcast %8 : vector<1x128xf32> to vector<2x128xf32>
    %270 = arith.mulf %268, %269 : vector<2x128xf32>
    %271 = vector.broadcast %11 : vector<1x128xf32> to vector<2x128xf32>
    %272 = arith.addf %270, %271 : vector<2x128xf32>
    %273 = vector.extract_strided_slice %272 {offsets = [0, 0], sizes = [2, 32], strides = [1, 1]} : vector<2x128xf32> to vector<2x32xf32>
    %274 = vector.extract_strided_slice %272 {offsets = [0, 32], sizes = [2, 32], strides = [1, 1]} : vector<2x128xf32> to vector<2x32xf32>
    %275 = vector.extract_strided_slice %272 {offsets = [0, 64], sizes = [2, 32], strides = [1, 1]} : vector<2x128xf32> to vector<2x32xf32>
    %276 = vector.extract_strided_slice %272 {offsets = [0, 96], sizes = [2, 32], strides = [1, 1]} : vector<2x128xf32> to vector<2x32xf32>
    %277 = arith.mulf %274, %224 : vector<2x32xf32>
    %278 = arith.mulf %273, %275 : vector<2x32xf32>
    %279 = arith.addf %277, %278 : vector<2x32xf32>
    %280 = math.tanh %279 : vector<2x32xf32>
    %281 = arith.mulf %276, %280 : vector<2x32xf32>
    %cst_47 = arith.constant dense<0.000000e+00> : vector<2x128xf32>
    %282 = tpu.matmul %281, %16, %cst_47 {dimension_numbers = #tpu.dot_dimension_numbers<[1], [0], [0], [1], [0, 0, 1, 1], [], []>} : vector<2x32xf32>, vector<32x128xf32>, vector<2x128xf32> -> vector<2x128xf32>
    %283 = vector.broadcast %18 : vector<1x128xf32> to vector<2x128xf32>
    %284 = arith.addf %282, %283 : vector<2x128xf32>
    %285 = vector.extract_strided_slice %24 {offsets = [10, 0], sizes = [2, 128], strides = [1, 1]} : vector<16x128xf32> to vector<2x128xf32>
    %cst_48 = arith.constant dense<0.000000e+00> : vector<2x128xf32>
    %286 = tpu.matmul %246, %12, %cst_48 {dimension_numbers = #tpu.dot_dimension_numbers<[1], [0], [0], [1], [0, 0, 1, 1], [], []>} : vector<2x32xf32>, vector<32x128xf32>, vector<2x128xf32> -> vector<2x128xf32>
    %287 = arith.addf %285, %286 : vector<2x128xf32>
    %288 = math.tanh %287 : vector<2x128xf32>
    %289 = vector.broadcast %8 : vector<1x128xf32> to vector<2x128xf32>
    %290 = arith.mulf %288, %289 : vector<2x128xf32>
    %291 = vector.broadcast %11 : vector<1x128xf32> to vector<2x128xf32>
    %292 = arith.addf %290, %291 : vector<2x128xf32>
    %293 = vector.extract_strided_slice %292 {offsets = [0, 0], sizes = [2, 32], strides = [1, 1]} : vector<2x128xf32> to vector<2x32xf32>
    %294 = vector.extract_strided_slice %292 {offsets = [0, 32], sizes = [2, 32], strides = [1, 1]} : vector<2x128xf32> to vector<2x32xf32>
    %295 = vector.extract_strided_slice %292 {offsets = [0, 64], sizes = [2, 32], strides = [1, 1]} : vector<2x128xf32> to vector<2x32xf32>
    %296 = vector.extract_strided_slice %292 {offsets = [0, 96], sizes = [2, 32], strides = [1, 1]} : vector<2x128xf32> to vector<2x32xf32>
    %297 = arith.mulf %294, %244 : vector<2x32xf32>
    %298 = arith.mulf %293, %295 : vector<2x32xf32>
    %299 = arith.addf %297, %298 : vector<2x32xf32>
    %300 = math.tanh %299 : vector<2x32xf32>
    %301 = arith.mulf %296, %300 : vector<2x32xf32>
    %cst_49 = arith.constant dense<0.000000e+00> : vector<2x128xf32>
    %302 = tpu.matmul %301, %15, %cst_49 {dimension_numbers = #tpu.dot_dimension_numbers<[1], [0], [0], [1], [0, 0, 1, 1], [], []>} : vector<2x32xf32>, vector<32x128xf32>, vector<2x128xf32> -> vector<2x128xf32>
    %303 = vector.broadcast %17 : vector<1x128xf32> to vector<2x128xf32>
    %304 = arith.addf %302, %303 : vector<2x128xf32>
    %cst_50 = arith.constant dense<0.000000e+00> : vector<2x128xf32>
    %305 = tpu.matmul %265, %14, %cst_50 {dimension_numbers = #tpu.dot_dimension_numbers<[1], [0], [0], [1], [0, 0, 1, 1], [], []>} : vector<2x32xf32>, vector<32x128xf32>, vector<2x128xf32> -> vector<2x128xf32>
    %306 = arith.addf %284, %305 : vector<2x128xf32>
    %307 = math.tanh %306 : vector<2x128xf32>
    %308 = vector.broadcast %8 : vector<1x128xf32> to vector<2x128xf32>
    %309 = arith.mulf %307, %308 : vector<2x128xf32>
    %310 = vector.broadcast %11 : vector<1x128xf32> to vector<2x128xf32>
    %311 = arith.addf %309, %310 : vector<2x128xf32>
    %312 = vector.extract_strided_slice %311 {offsets = [0, 0], sizes = [2, 32], strides = [1, 1]} : vector<2x128xf32> to vector<2x32xf32>
    %313 = vector.extract_strided_slice %311 {offsets = [0, 32], sizes = [2, 32], strides = [1, 1]} : vector<2x128xf32> to vector<2x32xf32>
    %314 = vector.extract_strided_slice %311 {offsets = [0, 64], sizes = [2, 32], strides = [1, 1]} : vector<2x128xf32> to vector<2x32xf32>
    %315 = vector.extract_strided_slice %311 {offsets = [0, 96], sizes = [2, 32], strides = [1, 1]} : vector<2x128xf32> to vector<2x32xf32>
    %316 = arith.mulf %313, %263 : vector<2x32xf32>
    %317 = arith.mulf %312, %314 : vector<2x32xf32>
    %318 = arith.addf %316, %317 : vector<2x32xf32>
    %319 = math.tanh %318 : vector<2x32xf32>
    %320 = arith.mulf %315, %319 : vector<2x32xf32>
    %cst_51 = arith.constant dense<0.000000e+00> : vector<2x128xf32>
    %321 = tpu.matmul %281, %13, %cst_51 {dimension_numbers = #tpu.dot_dimension_numbers<[1], [0], [0], [1], [0, 0, 1, 1], [], []>} : vector<2x32xf32>, vector<32x128xf32>, vector<2x128xf32> -> vector<2x128xf32>
    %322 = arith.addf %304, %321 : vector<2x128xf32>
    %323 = math.tanh %322 : vector<2x128xf32>
    %324 = vector.broadcast %8 : vector<1x128xf32> to vector<2x128xf32>
    %325 = arith.mulf %323, %324 : vector<2x128xf32>
    %326 = vector.broadcast %11 : vector<1x128xf32> to vector<2x128xf32>
    %327 = arith.addf %325, %326 : vector<2x128xf32>
    %328 = vector.extract_strided_slice %327 {offsets = [0, 0], sizes = [2, 32], strides = [1, 1]} : vector<2x128xf32> to vector<2x32xf32>
    %329 = vector.extract_strided_slice %327 {offsets = [0, 32], sizes = [2, 32], strides = [1, 1]} : vector<2x128xf32> to vector<2x32xf32>
    %330 = vector.extract_strided_slice %327 {offsets = [0, 64], sizes = [2, 32], strides = [1, 1]} : vector<2x128xf32> to vector<2x32xf32>
    %331 = vector.extract_strided_slice %327 {offsets = [0, 96], sizes = [2, 32], strides = [1, 1]} : vector<2x128xf32> to vector<2x32xf32>
    %332 = arith.mulf %329, %279 : vector<2x32xf32>
    %333 = arith.mulf %328, %330 : vector<2x32xf32>
    %334 = arith.addf %332, %333 : vector<2x32xf32>
    %335 = math.tanh %334 : vector<2x32xf32>
    %336 = arith.mulf %331, %335 : vector<2x32xf32>
    %cst_52 = arith.constant dense<0.000000e+00> : vector<2x128xf32>
    %337 = tpu.matmul %336, %16, %cst_52 {dimension_numbers = #tpu.dot_dimension_numbers<[1], [0], [0], [1], [0, 0, 1, 1], [], []>} : vector<2x32xf32>, vector<32x128xf32>, vector<2x128xf32> -> vector<2x128xf32>
    %338 = vector.broadcast %18 : vector<1x128xf32> to vector<2x128xf32>
    %339 = arith.addf %337, %338 : vector<2x128xf32>
    %340 = vector.extract_strided_slice %24 {offsets = [12, 0], sizes = [2, 128], strides = [1, 1]} : vector<16x128xf32> to vector<2x128xf32>
    %cst_53 = arith.constant dense<0.000000e+00> : vector<2x128xf32>
    %341 = tpu.matmul %301, %12, %cst_53 {dimension_numbers = #tpu.dot_dimension_numbers<[1], [0], [0], [1], [0, 0, 1, 1], [], []>} : vector<2x32xf32>, vector<32x128xf32>, vector<2x128xf32> -> vector<2x128xf32>
    %342 = arith.addf %340, %341 : vector<2x128xf32>
    %343 = math.tanh %342 : vector<2x128xf32>
    %344 = vector.broadcast %8 : vector<1x128xf32> to vector<2x128xf32>
    %345 = arith.mulf %343, %344 : vector<2x128xf32>
    %346 = vector.broadcast %11 : vector<1x128xf32> to vector<2x128xf32>
    %347 = arith.addf %345, %346 : vector<2x128xf32>
    %348 = vector.extract_strided_slice %347 {offsets = [0, 0], sizes = [2, 32], strides = [1, 1]} : vector<2x128xf32> to vector<2x32xf32>
    %349 = vector.extract_strided_slice %347 {offsets = [0, 32], sizes = [2, 32], strides = [1, 1]} : vector<2x128xf32> to vector<2x32xf32>
    %350 = vector.extract_strided_slice %347 {offsets = [0, 64], sizes = [2, 32], strides = [1, 1]} : vector<2x128xf32> to vector<2x32xf32>
    %351 = vector.extract_strided_slice %347 {offsets = [0, 96], sizes = [2, 32], strides = [1, 1]} : vector<2x128xf32> to vector<2x32xf32>
    %352 = arith.mulf %349, %299 : vector<2x32xf32>
    %353 = arith.mulf %348, %350 : vector<2x32xf32>
    %354 = arith.addf %352, %353 : vector<2x32xf32>
    %355 = math.tanh %354 : vector<2x32xf32>
    %356 = arith.mulf %351, %355 : vector<2x32xf32>
    %cst_54 = arith.constant dense<0.000000e+00> : vector<2x128xf32>
    %357 = tpu.matmul %356, %15, %cst_54 {dimension_numbers = #tpu.dot_dimension_numbers<[1], [0], [0], [1], [0, 0, 1, 1], [], []>} : vector<2x32xf32>, vector<32x128xf32>, vector<2x128xf32> -> vector<2x128xf32>
    %358 = vector.broadcast %17 : vector<1x128xf32> to vector<2x128xf32>
    %359 = arith.addf %357, %358 : vector<2x128xf32>
    %cst_55 = arith.constant dense<0.000000e+00> : vector<2x128xf32>
    %360 = tpu.matmul %320, %14, %cst_55 {dimension_numbers = #tpu.dot_dimension_numbers<[1], [0], [0], [1], [0, 0, 1, 1], [], []>} : vector<2x32xf32>, vector<32x128xf32>, vector<2x128xf32> -> vector<2x128xf32>
    %361 = arith.addf %339, %360 : vector<2x128xf32>
    %362 = math.tanh %361 : vector<2x128xf32>
    %363 = vector.broadcast %8 : vector<1x128xf32> to vector<2x128xf32>
    %364 = arith.mulf %362, %363 : vector<2x128xf32>
    %365 = vector.broadcast %11 : vector<1x128xf32> to vector<2x128xf32>
    %366 = arith.addf %364, %365 : vector<2x128xf32>
    %367 = vector.extract_strided_slice %366 {offsets = [0, 0], sizes = [2, 32], strides = [1, 1]} : vector<2x128xf32> to vector<2x32xf32>
    %368 = vector.extract_strided_slice %366 {offsets = [0, 32], sizes = [2, 32], strides = [1, 1]} : vector<2x128xf32> to vector<2x32xf32>
    %369 = vector.extract_strided_slice %366 {offsets = [0, 64], sizes = [2, 32], strides = [1, 1]} : vector<2x128xf32> to vector<2x32xf32>
    %370 = vector.extract_strided_slice %366 {offsets = [0, 96], sizes = [2, 32], strides = [1, 1]} : vector<2x128xf32> to vector<2x32xf32>
    %371 = arith.mulf %368, %318 : vector<2x32xf32>
    %372 = arith.mulf %367, %369 : vector<2x32xf32>
    %373 = arith.addf %371, %372 : vector<2x32xf32>
    %374 = math.tanh %373 : vector<2x32xf32>
    %375 = arith.mulf %370, %374 : vector<2x32xf32>
    %cst_56 = arith.constant dense<0.000000e+00> : vector<2x128xf32>
    %376 = tpu.matmul %336, %13, %cst_56 {dimension_numbers = #tpu.dot_dimension_numbers<[1], [0], [0], [1], [0, 0, 1, 1], [], []>} : vector<2x32xf32>, vector<32x128xf32>, vector<2x128xf32> -> vector<2x128xf32>
    %377 = arith.addf %359, %376 : vector<2x128xf32>
    %378 = math.tanh %377 : vector<2x128xf32>
    %379 = vector.broadcast %8 : vector<1x128xf32> to vector<2x128xf32>
    %380 = arith.mulf %378, %379 : vector<2x128xf32>
    %381 = vector.broadcast %11 : vector<1x128xf32> to vector<2x128xf32>
    %382 = arith.addf %380, %381 : vector<2x128xf32>
    %383 = vector.extract_strided_slice %382 {offsets = [0, 0], sizes = [2, 32], strides = [1, 1]} : vector<2x128xf32> to vector<2x32xf32>
    %384 = vector.extract_strided_slice %382 {offsets = [0, 32], sizes = [2, 32], strides = [1, 1]} : vector<2x128xf32> to vector<2x32xf32>
    %385 = vector.extract_strided_slice %382 {offsets = [0, 64], sizes = [2, 32], strides = [1, 1]} : vector<2x128xf32> to vector<2x32xf32>
    %386 = vector.extract_strided_slice %382 {offsets = [0, 96], sizes = [2, 32], strides = [1, 1]} : vector<2x128xf32> to vector<2x32xf32>
    %387 = arith.mulf %384, %334 : vector<2x32xf32>
    %388 = arith.mulf %383, %385 : vector<2x32xf32>
    %389 = arith.addf %387, %388 : vector<2x32xf32>
    %390 = math.tanh %389 : vector<2x32xf32>
    %391 = arith.mulf %386, %390 : vector<2x32xf32>
    %cst_57 = arith.constant dense<0.000000e+00> : vector<2x128xf32>
    %392 = tpu.matmul %391, %16, %cst_57 {dimension_numbers = #tpu.dot_dimension_numbers<[1], [0], [0], [1], [0, 0, 1, 1], [], []>} : vector<2x32xf32>, vector<32x128xf32>, vector<2x128xf32> -> vector<2x128xf32>
    %393 = vector.broadcast %18 : vector<1x128xf32> to vector<2x128xf32>
    %394 = arith.addf %392, %393 : vector<2x128xf32>
    %395 = vector.extract_strided_slice %24 {offsets = [14, 0], sizes = [2, 128], strides = [1, 1]} : vector<16x128xf32> to vector<2x128xf32>
    %cst_58 = arith.constant dense<0.000000e+00> : vector<2x128xf32>
    %396 = tpu.matmul %356, %12, %cst_58 {dimension_numbers = #tpu.dot_dimension_numbers<[1], [0], [0], [1], [0, 0, 1, 1], [], []>} : vector<2x32xf32>, vector<32x128xf32>, vector<2x128xf32> -> vector<2x128xf32>
    %397 = arith.addf %395, %396 : vector<2x128xf32>
    %398 = math.tanh %397 : vector<2x128xf32>
    %399 = vector.broadcast %8 : vector<1x128xf32> to vector<2x128xf32>
    %400 = arith.mulf %398, %399 : vector<2x128xf32>
    %401 = vector.broadcast %11 : vector<1x128xf32> to vector<2x128xf32>
    %402 = arith.addf %400, %401 : vector<2x128xf32>
    %403 = vector.extract_strided_slice %402 {offsets = [0, 0], sizes = [2, 32], strides = [1, 1]} : vector<2x128xf32> to vector<2x32xf32>
    %404 = vector.extract_strided_slice %402 {offsets = [0, 32], sizes = [2, 32], strides = [1, 1]} : vector<2x128xf32> to vector<2x32xf32>
    %405 = vector.extract_strided_slice %402 {offsets = [0, 64], sizes = [2, 32], strides = [1, 1]} : vector<2x128xf32> to vector<2x32xf32>
    %406 = vector.extract_strided_slice %402 {offsets = [0, 96], sizes = [2, 32], strides = [1, 1]} : vector<2x128xf32> to vector<2x32xf32>
    %407 = arith.mulf %404, %354 : vector<2x32xf32>
    %408 = arith.mulf %403, %405 : vector<2x32xf32>
    %409 = arith.addf %407, %408 : vector<2x32xf32>
    %410 = math.tanh %409 : vector<2x32xf32>
    %411 = arith.mulf %406, %410 : vector<2x32xf32>
    %cst_59 = arith.constant dense<0.000000e+00> : vector<2x128xf32>
    %412 = tpu.matmul %411, %15, %cst_59 {dimension_numbers = #tpu.dot_dimension_numbers<[1], [0], [0], [1], [0, 0, 1, 1], [], []>} : vector<2x32xf32>, vector<32x128xf32>, vector<2x128xf32> -> vector<2x128xf32>
    %413 = vector.broadcast %17 : vector<1x128xf32> to vector<2x128xf32>
    %414 = arith.addf %412, %413 : vector<2x128xf32>
    %cst_60 = arith.constant dense<0.000000e+00> : vector<2x128xf32>
    %415 = tpu.matmul %375, %14, %cst_60 {dimension_numbers = #tpu.dot_dimension_numbers<[1], [0], [0], [1], [0, 0, 1, 1], [], []>} : vector<2x32xf32>, vector<32x128xf32>, vector<2x128xf32> -> vector<2x128xf32>
    %416 = arith.addf %394, %415 : vector<2x128xf32>
    %417 = math.tanh %416 : vector<2x128xf32>
    %418 = vector.broadcast %8 : vector<1x128xf32> to vector<2x128xf32>
    %419 = arith.mulf %417, %418 : vector<2x128xf32>
    %420 = vector.broadcast %11 : vector<1x128xf32> to vector<2x128xf32>
    %421 = arith.addf %419, %420 : vector<2x128xf32>
    %422 = vector.extract_strided_slice %421 {offsets = [0, 0], sizes = [2, 32], strides = [1, 1]} : vector<2x128xf32> to vector<2x32xf32>
    %423 = vector.extract_strided_slice %421 {offsets = [0, 32], sizes = [2, 32], strides = [1, 1]} : vector<2x128xf32> to vector<2x32xf32>
    %424 = vector.extract_strided_slice %421 {offsets = [0, 64], sizes = [2, 32], strides = [1, 1]} : vector<2x128xf32> to vector<2x32xf32>
    %425 = vector.extract_strided_slice %421 {offsets = [0, 96], sizes = [2, 32], strides = [1, 1]} : vector<2x128xf32> to vector<2x32xf32>
    %426 = arith.mulf %423, %373 : vector<2x32xf32>
    %427 = arith.mulf %422, %424 : vector<2x32xf32>
    %428 = arith.addf %426, %427 : vector<2x32xf32>
    %429 = math.tanh %428 : vector<2x32xf32>
    %430 = arith.mulf %425, %429 : vector<2x32xf32>
    %cst_61 = arith.constant dense<0.000000e+00> : vector<2x128xf32>
    %431 = tpu.matmul %391, %13, %cst_61 {dimension_numbers = #tpu.dot_dimension_numbers<[1], [0], [0], [1], [0, 0, 1, 1], [], []>} : vector<2x32xf32>, vector<32x128xf32>, vector<2x128xf32> -> vector<2x128xf32>
    %432 = arith.addf %414, %431 : vector<2x128xf32>
    %433 = math.tanh %432 : vector<2x128xf32>
    %434 = vector.broadcast %8 : vector<1x128xf32> to vector<2x128xf32>
    %435 = arith.mulf %433, %434 : vector<2x128xf32>
    %436 = vector.broadcast %11 : vector<1x128xf32> to vector<2x128xf32>
    %437 = arith.addf %435, %436 : vector<2x128xf32>
    %438 = vector.extract_strided_slice %437 {offsets = [0, 0], sizes = [2, 32], strides = [1, 1]} : vector<2x128xf32> to vector<2x32xf32>
    %439 = vector.extract_strided_slice %437 {offsets = [0, 32], sizes = [2, 32], strides = [1, 1]} : vector<2x128xf32> to vector<2x32xf32>
    %440 = vector.extract_strided_slice %437 {offsets = [0, 64], sizes = [2, 32], strides = [1, 1]} : vector<2x128xf32> to vector<2x32xf32>
    %441 = vector.extract_strided_slice %437 {offsets = [0, 96], sizes = [2, 32], strides = [1, 1]} : vector<2x128xf32> to vector<2x32xf32>
    %442 = arith.mulf %439, %389 : vector<2x32xf32>
    %443 = arith.mulf %438, %440 : vector<2x32xf32>
    %444 = arith.addf %442, %443 : vector<2x32xf32>
    %445 = math.tanh %444 : vector<2x32xf32>
    %446 = arith.mulf %441, %445 : vector<2x32xf32>
    %cst_62 = arith.constant dense<0.000000e+00> : vector<2x128xf32>
    %447 = tpu.matmul %446, %16, %cst_62 {dimension_numbers = #tpu.dot_dimension_numbers<[1], [0], [0], [1], [0, 0, 1, 1], [], []>} : vector<2x32xf32>, vector<32x128xf32>, vector<2x128xf32> -> vector<2x128xf32>
    %448 = vector.broadcast %18 : vector<1x128xf32> to vector<2x128xf32>
    %449 = arith.addf %447, %448 : vector<2x128xf32>
    %cst_63 = arith.constant dense<0.000000e+00> : vector<2x128xf32>
    %450 = tpu.matmul %430, %14, %cst_63 {dimension_numbers = #tpu.dot_dimension_numbers<[1], [0], [0], [1], [0, 0, 1, 1], [], []>} : vector<2x32xf32>, vector<32x128xf32>, vector<2x128xf32> -> vector<2x128xf32>
    %451 = arith.addf %449, %450 : vector<2x128xf32>
    %452 = math.tanh %451 : vector<2x128xf32>
    %453 = vector.broadcast %8 : vector<1x128xf32> to vector<2x128xf32>
    %454 = arith.mulf %452, %453 : vector<2x128xf32>
    %455 = vector.broadcast %11 : vector<1x128xf32> to vector<2x128xf32>
    %456 = arith.addf %454, %455 : vector<2x128xf32>
    %457 = vector.extract_strided_slice %456 {offsets = [0, 0], sizes = [2, 32], strides = [1, 1]} : vector<2x128xf32> to vector<2x32xf32>
    %458 = vector.extract_strided_slice %456 {offsets = [0, 32], sizes = [2, 32], strides = [1, 1]} : vector<2x128xf32> to vector<2x32xf32>
    %459 = vector.extract_strided_slice %456 {offsets = [0, 64], sizes = [2, 32], strides = [1, 1]} : vector<2x128xf32> to vector<2x32xf32>
    %460 = vector.extract_strided_slice %456 {offsets = [0, 96], sizes = [2, 32], strides = [1, 1]} : vector<2x128xf32> to vector<2x32xf32>
    %461 = arith.mulf %458, %428 : vector<2x32xf32>
    %462 = arith.mulf %457, %459 : vector<2x32xf32>
    %463 = arith.addf %461, %462 : vector<2x32xf32>
    %464 = math.tanh %463 : vector<2x32xf32>
    %465 = arith.mulf %460, %464 : vector<2x32xf32>
    %c0_64 = arith.constant 0 : index
    %c0_65 = arith.constant 0 : index
    %466 = vector.load %arg10[%c0_64, %c0_65] : memref<32x128xf32, #tpu.memory_space<vmem>>, vector<32x128xf32>
    %cst_66 = arith.constant dense<0.000000e+00> : vector<2x128xf32>
    %467 = tpu.matmul %465, %466, %cst_66 {dimension_numbers = #tpu.dot_dimension_numbers<[1], [0], [0], [1], [0, 0, 1, 1], [], []>} : vector<2x32xf32>, vector<32x128xf32>, vector<2x128xf32> -> vector<2x128xf32>
    %c0_67 = arith.constant 0 : index
    %c0_68 = arith.constant 0 : index
    %468 = vector.load %arg11[%c0_67, %c0_68] : memref<1x128xf32, #tpu.memory_space<vmem>>, vector<1x128xf32>
    %469 = vector.broadcast %468 : vector<1x128xf32> to vector<2x128xf32>
    %470 = arith.addf %467, %469 : vector<2x128xf32>
    %c0_69 = arith.constant 0 : index
    %c0_70 = arith.constant 0 : index
    %471 = vector.load %arg12[%c0_69, %c0_70] : memref<2x128xf32, #tpu.memory_space<vmem>>, vector<2x128xf32>
    tpu.vector_store %arg12[%c0_69, %c0_70], %470 {strides = array<i32>} : memref<2x128xf32, #tpu.memory_space<vmem>>, vector<2x128xf32>,
    return
  }
}

</mosaic_0001>

<llo_original>
// kernel: lstm_model_forward_pallas.1
$region0: #{lstm_model_forward_pallas.1}
  #allocation0 [shape = 'u32[]', space=smem, size = 0x4, offset = 0x4, fixed_abs, tag = 'smem constant byte address 0x4 - core index']
  #allocation1 [shape = 'u32[144,128]{1,0:T(1,128)}', space=vmem, size = 0x12000, scoped, tag = 'internal scratch']
  %s0 = inlined_call_operand.vmem [shape: f32[16,8], index: 0, kind: input, shape index: {}]
  %s1 = inlined_call_operand.hbm [shape: f32[8,128], index: 1, kind: input, shape index: {}]
  %s2 = inlined_call_operand.vmem [shape: f32[32,128], index: 2, kind: input, shape index: {}]
  %s3 = inlined_call_operand.vmem [shape: f32[1,128], index: 3, kind: input, shape index: {}]
  %s4 = inlined_call_operand.hbm [shape: f32[32,128], index: 4, kind: input, shape index: {}]
  %s5 = inlined_call_operand.vmem [shape: f32[32,128], index: 5, kind: input, shape index: {}]
  %s6 = inlined_call_operand.vmem [shape: f32[1,128], index: 6, kind: input, shape index: {}]
  %s7 = inlined_call_operand.hbm [shape: f32[32,128], index: 7, kind: input, shape index: {}]
  %s8 = inlined_call_operand.hbm [shape: f32[32,128], index: 8, kind: input, shape index: {}]
  %s9 = inlined_call_operand.vmem [shape: f32[1,128], index: 9, kind: input, shape index: {}]
  %s10 = inlined_call_operand.hbm [shape: f32[32,128], index: 10, kind: input, shape index: {}]
  %s11 = inlined_call_operand.hbm [shape: f32[1,128], index: 11, kind: input, shape index: {}]
  %s12 = inlined_call_operand.hbm [shape: f32[2,128], index: 12, kind: output, shape index: {}]
  %s13 = sld [smem:[#allocation0]]
  $region82: #{lstm_model_forward_pallas.1} parent=0
    _
  %s15 = ssub.s32 1, %s13
  %s16 = scalar_select 0, %s15, %s13
  $region1: #{lstm_model_forward_pallas.1} parent=0
    #allocation2 [shape = 'u8[4096]{0}', space=vmem, size = 0x1000, scoped, tag = 'input window, operand 1, single buffered']
    #allocation3 [shape = 's32[1]{0}', space=sflag, size = 0x4, scoped, tag = 'scoped memory for lstm_model_forward_pallas.1']
    #allocation4 [shape = 's32[1]{0}', space=sflag, size = 0x4, scoped, tag = 'scoped memory for lstm_model_forward_pallas.1']
    #allocation5 [shape = 'u8[16384]{0}', space=vmem, size = 0x4000, scoped, tag = 'input window, operand 4, single buffered']
    #allocation6 [shape = 's32[1]{0}', space=sflag, size = 0x4, scoped, tag = 'scoped memory for lstm_model_forward_pallas.1']
    #allocation7 [shape = 'u8[16384]{0}', space=vmem, size = 0x4000, scoped, tag = 'input window, operand 7, single buffered']
    #allocation8 [shape = 'u8[16384]{0}', space=vmem, size = 0x4000, scoped, tag = 'input window, operand 8, single buffered']
    #allocation9 [shape = 's32[1]{0}', space=sflag, size = 0x4, scoped, tag = 'scoped memory for lstm_model_forward_pallas.1']
    #allocation10 [shape = 'u8[16384]{0}', space=vmem, size = 0x4000, scoped, tag = 'input window, operand 10, single buffered']
    #allocation11 [shape = 'u8[512]{0}', space=vmem, size = 0x400, scoped, tag = 'input window, operand 11, single buffered']
    #allocation12 [shape = 's32[1]{0}', space=sflag, size = 0x4, scoped, tag = 'scoped memory for lstm_model_forward_pallas.1']
    #allocation13 [shape = 'u8[1024]{0}', space=vmem, size = 0x400, scoped, tag = 'output window, operand 0, single buffered']
    %17 = vsyncpa [#allocation3], 0
    %18 = vsyncpa [#allocation6], 0
    %19 = vsyncpa [#allocation9], 0
    %20 = vsyncpa [#allocation12], 0
    %21 = vsyncpa [#allocation4], 0
    // Predicated region
    $region2: #{lstm_model_forward_pallas.1} parent=1 // pred_check
      _
    $region3: #{lstm_model_forward_pallas.1} parent=1 // pred_check_branch
      %23 = sbr.rel (0) target = $region5
    $region4: #{lstm_model_forward_pallas.1} parent=1 // pred_region
      _
    $region5: #{lstm_model_forward_pallas.1} parent=1 // pred_fallthru
      _
    // Predicated region
    $region6: #{lstm_model_forward_pallas.1} parent=1 // pred_check
      _
    $region7: #{lstm_model_forward_pallas.1} parent=1 // pred_check_branch
      %25 = sbr.rel (0) target = $region9
    $region8: #{lstm_model_forward_pallas.1} parent=1 // pred_region
      %s27 = ssub.s32 128, 128
      %28 = vsyncadd [#allocation3], %s27
      %s30 = sshll.u32 [#allocation2], 4
      %s31 = int_to_ptr.vmem [resolvable:$true] %s30
      %33 = dma.hbm_to_vmem [thread:$0]  %s1, 128, %s31, [#allocation3]
    $region9: #{lstm_model_forward_pallas.1} parent=1 // pred_fallthru
      _
    // Predicated region
    $region10: #{lstm_model_forward_pallas.1} parent=1 // pred_check
      _
    $region11: #{lstm_model_forward_pallas.1} parent=1 // pred_check_branch
      %35 = sbr.rel (0) target = $region13
    $region12: #{lstm_model_forward_pallas.1} parent=1 // pred_region
      _
    $region13: #{lstm_model_forward_pallas.1} parent=1 // pred_fallthru
      _
    // Predicated region
    $region14: #{lstm_model_forward_pallas.1} parent=1 // pred_check
      _
    $region15: #{lstm_model_forward_pallas.1} parent=1 // pred_check_branch
      %37 = sbr.rel (0) target = $region17
    $region16: #{lstm_model_forward_pallas.1} parent=1 // pred_region
      _
    $region17: #{lstm_model_forward_pallas.1} parent=1 // pred_fallthru
      _
    // Predicated region
    $region18: #{lstm_model_forward_pallas.1} parent=1 // pred_check
      _
    $region19: #{lstm_model_forward_pallas.1} parent=1 // pred_check_branch
      %39 = sbr.rel (0) target = $region21
    $region20: #{lstm_model_forward_pallas.1} parent=1 // pred_region
      %s41 = ssub.s32 512, 512
      %42 = vsyncadd [#allocation6], %s41
      %s43 = sshll.u32 [#allocation5], 4
      %s44 = int_to_ptr.vmem [resolvable:$true] %s43
      %49 = dma.hbm_to_vmem [thread:$0]  %s4, 512, %s44, [#allocation6], 128, 128, 8
    $region21: #{lstm_model_forward_pallas.1} parent=1 // pred_fallthru
      _
    // Predicated region
    $region22: #{lstm_model_forward_pallas.1} parent=1 // pred_check
      _
    $region23: #{lstm_model_forward_pallas.1} parent=1 // pred_check_branch
      %51 = sbr.rel (0) target = $region25
    $region24: #{lstm_model_forward_pallas.1} parent=1 // pred_region
      _
    $region25: #{lstm_model_forward_pallas.1} parent=1 // pred_fallthru
      _
    // Predicated region
    $region26: #{lstm_model_forward_pallas.1} parent=1 // pred_check
      _
    $region27: #{lstm_model_forward_pallas.1} parent=1 // pred_check_branch
      %53 = sbr.rel (0) target = $region29
    $region28: #{lstm_model_forward_pallas.1} parent=1 // pred_region
      _
    $region29: #{lstm_model_forward_pallas.1} parent=1 // pred_fallthru
      _
    // Predicated region
    $region30: #{lstm_model_forward_pallas.1} parent=1 // pred_check
      _
    $region31: #{lstm_model_forward_pallas.1} parent=1 // pred_check_branch
      %55 = sbr.rel (0) target = $region33
    $region32: #{lstm_model_forward_pallas.1} parent=1 // pred_region
      %s57 = ssub.s32 512, 512
      %58 = vsyncadd [#allocation6], %s57
      %s59 = sshll.u32 [#allocation7], 4
      %s60 = int_to_ptr.vmem [resolvable:$true] %s59
      %65 = dma.hbm_to_vmem [thread:$0]  %s7, 512, %s60, [#allocation6], 128, 128, 8
    $region33: #{lstm_model_forward_pallas.1} parent=1 // pred_fallthru
      _
    // Predicated region
    $region34: #{lstm_model_forward_pallas.1} parent=1 // pred_check
      _
    $region35: #{lstm_model_forward_pallas.1} parent=1 // pred_check_branch
      %67 = sbr.rel (0) target = $region37
    $region36: #{lstm_model_forward_pallas.1} parent=1 // pred_region
      %s69 = ssub.s32 512, 512
      %70 = vsyncadd [#allocation9], %s69
      %s71 = sshll.u32 [#allocation8], 4
      %s72 = int_to_ptr.vmem [resolvable:$true] %s71
      %77 = dma.hbm_to_vmem [thread:$0]  %s8, 512, %s72, [#allocation9], 128, 128, 8
    $region37: #{lstm_model_forward_pallas.1} parent=1 // pred_fallthru
      _
    // Predicated region
    $region38: #{lstm_model_forward_pallas.1} parent=1 // pred_check
      _
    $region39: #{lstm_model_forward_pallas.1} parent=1 // pred_check_branch
      %79 = sbr.rel (0) target = $region41
    $region40: #{lstm_model_forward_pallas.1} parent=1 // pred_region
      _
    $region41: #{lstm_model_forward_pallas.1} parent=1 // pred_fallthru
      _
    // Predicated region
    $region42: #{lstm_model_forward_pallas.1} parent=1 // pred_check
      _
    $region43: #{lstm_model_forward_pallas.1} parent=1 // pred_check_branch
      %81 = sbr.rel (0) target = $region45
    $region44: #{lstm_model_forward_pallas.1} parent=1 // pred_region
      %s83 = ssub.s32 512, 512
      %84 = vsyncadd [#allocation9], %s83
      %s85 = sshll.u32 [#allocation10], 4
      %s86 = int_to_ptr.vmem [resolvable:$true] %s85
      %91 = dma.hbm_to_vmem [thread:$0]  %s10, 512, %s86, [#allocation9], 128, 128, 8
    $region45: #{lstm_model_forward_pallas.1} parent=1 // pred_fallthru
      _
    // Predicated region
    $region46: #{lstm_model_forward_pallas.1} parent=1 // pred_check
      _
    $region47: #{lstm_model_forward_pallas.1} parent=1 // pred_check_branch
      %93 = sbr.rel (0) target = $region49
    $region48: #{lstm_model_forward_pallas.1} parent=1 // pred_region
      %s95 = ssub.s32 16, 16
      %96 = vsyncadd [#allocation12], %s95
      %s98 = sshll.u32 [#allocation11], 4
      %s99 = int_to_ptr.vmem [resolvable:$true] %s98
      %101 = dma.hbm_to_vmem [thread:$0]  %s11, 16, %s99, [#allocation12]
    $region49: #{lstm_model_forward_pallas.1} parent=1 // pred_fallthru
      _
    // Predicated region
    $region50: #{lstm_model_forward_pallas.1} parent=1 // pred_check
      _
    $region51: #{lstm_model_forward_pallas.1} parent=1 // pred_check_branch
      %103 = sbr.rel (0) target = $region53
    $region52: #{lstm_model_forward_pallas.1} parent=1 // pred_region
      %104 = dma.done [#allocation3], 128
    $region53: #{lstm_model_forward_pallas.1} parent=1 // pred_fallthru
      _
    // Predicated region
    $region54: #{lstm_model_forward_pallas.1} parent=1 // pred_check
      _
    $region55: #{lstm_model_forward_pallas.1} parent=1 // pred_check_branch
      %106 = sbr.rel (0) target = $region57
    $region56: #{lstm_model_forward_pallas.1} parent=1 // pred_region
      %107 = dma.done [#allocation6], 512
    $region57: #{lstm_model_forward_pallas.1} parent=1 // pred_fallthru
      _
    // Predicated region
    $region58: #{lstm_model_forward_pallas.1} parent=1 // pred_check
      _
    $region59: #{lstm_model_forward_pallas.1} parent=1 // pred_check_branch
      %109 = sbr.rel (0) target = $region61
    $region60: #{lstm_model_forward_pallas.1} parent=1 // pred_region
      %110 = dma.done [#allocation6], 512
    $region61: #{lstm_model_forward_pallas.1} parent=1 // pred_fallthru
      _
    // Predicated region
    $region62: #{lstm_model_forward_pallas.1} parent=1 // pred_check
      _
    $region63: #{lstm_model_forward_pallas.1} parent=1 // pred_check_branch
      %112 = sbr.rel (0) target = $region65
    $region64: #{lstm_model_forward_pallas.1} parent=1 // pred_region
      %113 = dma.done [#allocation9], 512
    $region65: #{lstm_model_forward_pallas.1} parent=1 // pred_fallthru
      _
    // Predicated region
    $region66: #{lstm_model_forward_pallas.1} parent=1 // pred_check
      _
    $region67: #{lstm_model_forward_pallas.1} parent=1 // pred_check_branch
      %115 = sbr.rel (0) target = $region69
    $region68: #{lstm_model_forward_pallas.1} parent=1 // pred_region
      %116 = dma.done [#allocation9], 512
    $region69: #{lstm_model_forward_pallas.1} parent=1 // pred_fallthru
      _
    // Predicated region
    $region70: #{lstm_model_forward_pallas.1} parent=1 // pred_check
      _
    $region71: #{lstm_model_forward_pallas.1} parent=1 // pred_check_branch
      %118 = sbr.rel (0) target = $region73
    $region72: #{lstm_model_forward_pallas.1} parent=1 // pred_region
      %119 = dma.done [#allocation12], 16
    $region73: #{lstm_model_forward_pallas.1} parent=1 // pred_fallthru
      _
    %v120 = vlaneseq
    %v121 = vand.u32 %v120, 127
    %vm122 = vcmp.ge.s32.totalorder %v121, 64
    %vm123 = vcmp.lt.s32.totalorder %v121, 96
    %vm124 = vmand %vm122, %vm123
    %v125 = vsel %vm124, 1.0, 0.5
    %v126 = vsel %vm124, 0.0, 0.5
    %v127 = vld [vmem:[%s2] sm:$0xff]
    %v128 = vld [vmem:[%s2 + $0x8] sm:$0xff]
    %v129 = vld [vmem:[%s2 + $0x10] sm:$0xff]
    %v130 = vld [vmem:[%s2 + $0x18] sm:$0xff]
    %v131 = vld [vmem:[%s5] sm:$0xff]
    %v132 = vld [vmem:[%s5 + $0x8] sm:$0xff]
    %v133 = vld [vmem:[%s5 + $0x10] sm:$0xff]
    %v134 = vld [vmem:[%s5 + $0x18] sm:$0xff]
    %v135 = vld [vmem:[#allocation8] sm:$0xff]
    %v136 = vld [vmem:[#allocation8 + $0x8] sm:$0xff]
    %v137 = vld [vmem:[#allocation8 + $0x10] sm:$0xff]
    %v138 = vld [vmem:[#allocation8 + $0x18] sm:$0xff]
    %v139 = vld [vmem:[#allocation5] sm:$0xff]
    %v140 = vld [vmem:[#allocation5 + $0x8] sm:$0xff]
    %v141 = vld [vmem:[#allocation5 + $0x10] sm:$0xff]
    %v142 = vld [vmem:[#allocation5 + $0x18] sm:$0xff]
    %v143 = vld [vmem:[#allocation7] sm:$0xff]
    %v144 = vld [vmem:[#allocation7 + $0x8] sm:$0xff]
    %v145 = vld [vmem:[#allocation7 + $0x10] sm:$0xff]
    %v146 = vld [vmem:[#allocation7 + $0x18] sm:$0xff]
    %v147 = vld [vmem:[%s6] sm:$0x1]
    %v148 = vld [vmem:[%s9] sm:$0x1]
    %v149 = vld [vmem:[%s0] sm:$0xff]
    %v150 = vld [vmem:[%s0 + $0x8] sm:$0xff]
    %v151 = vld [vmem:[#allocation2] sm:$0xff]
    %v152 = vld [vmem:[%s3] sm:$0x1]
    %v154 = vlaneseq
    %v155 = vshrl.u32 %v154, 7
    %v156 = vsub.s32 0, %v155
    %v157 = vrot.slane %v152, %v156
    %vm159 = vcmask 64512
    %v161 = vsel %vm159, %v149, 0
    %v164 = vsel %vm159, %v150, 0
    %166 = vmatprep.subr.mxu0 0.0
    %167 = vmatpush1.msra.mxu0 %v151
    %168 = vmatprep.subr.mxu0 0.0
    %169 = vmatpush1.msra.mxu0 0.0
    %170 = vmatprep.subr.mxu0 0.0
    %171 = vmatpush1.msra.mxu0 0.0
    %172 = vmatprep.subr.mxu0 0.0
    %173 = vmatpush1.msra.mxu0 0.0
    %174 = vmatprep.subr.mxu0 0.0
    %175 = vmatpush1.msra.mxu0 0.0
    %176 = vmatprep.subr.mxu0 0.0
    %177 = vmatpush1.msra.mxu0 0.0
    %178 = vmatprep.subr.mxu0 0.0
    %179 = vmatpush1.msra.mxu0 0.0
    %180 = vmatprep.subr.mxu0 0.0
    %181 = vmatpush1.msra.mxu0 0.0
    %182 = vmatprep.subr.mxu0 0.0
    %183 = vmatpush1.msra.mxu0 0.0
    %184 = vmatprep.subr.mxu0 0.0
    %185 = vmatpush1.msra.mxu0 0.0
    %186 = vmatprep.subr.mxu0 0.0
    %187 = vmatpush1.msra.mxu0 0.0
    %188 = vmatprep.subr.mxu0 0.0
    %189 = vmatpush1.msra.mxu0 0.0
    %190 = vmatprep.subr.mxu0 0.0
    %191 = vmatpush1.msra.mxu0 0.0
    %192 = vmatprep.subr.mxu0 0.0
    %193 = vmatpush1.msra.mxu0 0.0
    %194 = vmatprep.subr.mxu0 0.0
    %195 = vmatpush1.msra.mxu0 0.0
    %196 = vmatprep.subr.mxu0 0.0
    %197 = vmatpush1.msra.mxu0 0.0
    %198 = vmatprep.subr.mxu0 0.0
    %199 = vmatpush1.msra.mxu0 0.0
    %200 = vmatprep.subr.mxu0 0.0
    %201 = vmatpush1.msra.mxu0 0.0
    %202 = vmatprep.subr.mxu0 0.0
    %203 = vmatpush1.msra.mxu0 0.0
    %204 = vmatprep.subr.mxu0 0.0
    %205 = vmatpush1.msra.mxu0 0.0
    %206 = vmatprep.subr.mxu0 0.0
    %207 = vmatpush1.msra.mxu0 0.0
    %208 = vmatprep.subr.mxu0 0.0
    %209 = vmatpush1.msra.mxu0 0.0
    %210 = vmatprep.subr.mxu0 0.0
    %211 = vmatpush1.msra.mxu0 0.0
    %212 = vmatprep.subr.mxu0 0.0
    %213 = vmatpush1.msra.mxu0 0.0
    %214 = vmatprep.subr.mxu0 0.0
    %215 = vmatpush1.msra.mxu0 0.0
    %216 = vmatprep.subr.mxu0 0.0
    %217 = vmatpush1.msra.mxu0 0.0
    %218 = vmatprep.subr.mxu0 0.0
    %219 = vmatpush1.msra.mxu0 0.0
    %220 = vmatprep.subr.mxu0 0.0
    %221 = vmatpush1.msra.mxu0 0.0
    %222 = vmatprep.subr.mxu0 0.0
    %223 = vmatpush1.msra.mxu0 0.0
    %224 = vmatprep.subr.mxu0 0.0
    %225 = vmatpush1.msra.mxu0 0.0
    %226 = vmatprep.subr.mxu0 0.0
    %227 = vmatpush1.msra.mxu0 0.0
    %228 = vmatprep.subr.mxu0 0.0
    %229 = vmatpush1.msra.mxu0 0.0
    %230 = vmatprep.mubr.f32.mxu0 0.0
    %231 = vmatmul.mubr.f32.gmra.mrb[0].mxu0 %v161
    %v232 = vpop.f32.mrb[0].mxu0
    %v233 = vadd.f32 %v157, %v232
    %v234 = vpop.f32.mrb[0].mxu0
    %235 = vmatprep.mubr.f32.mxu0 0.0
    %236 = vmatmul.mubr.f32.gmra.mrb[0].mxu0 %v164
    %v237 = vpop.f32.mrb[0].mxu0
    %v238 = vadd.f32 %v157, %v237
    %v239 = vpop.f32.mrb[0].mxu0
    %240 = vdwg.mxu0
    %vm241 = vcmask 261120
    %v243 = vsel %vm241, 0.0, 0
    %245 = vmatprep.subr.mxu0 0.0
    %246 = vmatpush1.msra.mxu0 %v127
    %247 = vmatprep.subr.mxu0 0.0
    %248 = vmatpush1.msra.mxu0 %v128
    %249 = vmatprep.subr.mxu0 0.0
    %250 = vmatpush1.msra.mxu0 %v129
    %251 = vmatprep.subr.mxu0 0.0
    %252 = vmatpush1.msra.mxu0 %v130
    %253 = vmatprep.subr.mxu0 0.0
    %254 = vmatpush1.msra.mxu0 0.0
    %255 = vmatprep.subr.mxu0 0.0
    %256 = vmatpush1.msra.mxu0 0.0
    %257 = vmatprep.subr.mxu0 0.0
    %258 = vmatpush1.msra.mxu0 0.0
    %259 = vmatprep.subr.mxu0 0.0
    %260 = vmatpush1.msra.mxu0 0.0
    %261 = vmatprep.subr.mxu0 0.0
    %262 = vmatpush1.msra.mxu0 0.0
    %263 = vmatprep.subr.mxu0 0.0
    %264 = vmatpush1.msra.mxu0 0.0
    %265 = vmatprep.subr.mxu0 0.0
    %266 = vmatpush1.msra.mxu0 0.0
    %267 = vmatprep.subr.mxu0 0.0
    %268 = vmatpush1.msra.mxu0 0.0
    %269 = vmatprep.subr.mxu0 0.0
    %270 = vmatpush1.msra.mxu0 0.0
    %271 = vmatprep.subr.mxu0 0.0
    %272 = vmatpush1.msra.mxu0 0.0
    %273 = vmatprep.subr.mxu0 0.0
    %274 = vmatpush1.msra.mxu0 0.0
    %275 = vmatprep.subr.mxu0 0.0
    %276 = vmatpush1.msra.mxu0 0.0
    %277 = vmatprep.subr.mxu0 0.0
    %278 = vmatpush1.msra.mxu0 0.0
    %279 = vmatprep.subr.mxu0 0.0
    %280 = vmatpush1.msra.mxu0 0.0
    %281 = vmatprep.subr.mxu0 0.0
    %282 = vmatpush1.msra.mxu0 0.0
    %283 = vmatprep.subr.mxu0 0.0
    %284 = vmatpush1.msra.mxu0 0.0
    %285 = vmatprep.subr.mxu0 0.0
    %286 = vmatpush1.msra.mxu0 0.0
    %287 = vmatprep.subr.mxu0 0.0
    %288 = vmatpush1.msra.mxu0 0.0
    %289 = vmatprep.subr.mxu0 0.0
    %290 = vmatpush1.msra.mxu0 0.0
    %291 = vmatprep.subr.mxu0 0.0
    %292 = vmatpush1.msra.mxu0 0.0
    %293 = vmatprep.subr.mxu0 0.0
    %294 = vmatpush1.msra.mxu0 0.0
    %295 = vmatprep.subr.mxu0 0.0
    %296 = vmatpush1.msra.mxu0 0.0
    %297 = vmatprep.subr.mxu0 0.0
    %298 = vmatpush1.msra.mxu0 0.0
    %299 = vmatprep.subr.mxu0 0.0
    %300 = vmatpush1.msra.mxu0 0.0
    %301 = vmatprep.subr.mxu0 0.0
    %302 = vmatpush1.msra.mxu0 0.0
    %303 = vmatprep.subr.mxu0 0.0
    %304 = vmatpush1.msra.mxu0 0.0
    %305 = vmatprep.subr.mxu0 0.0
    %306 = vmatpush1.msra.mxu0 0.0
    %307 = vmatprep.subr.mxu0 0.0
    %308 = vmatpush1.msra.mxu0 0.0
    %309 = vmatprep.mubr.f32.mxu0 0.0
    %310 = vmatmul.mubr.f32.gmra.mrb[0].mxu0 %v243
    %v311 = vpop.f32.mrb[0].mxu0
    %v312 = vadd.f32 0.0, %v311
    %v313 = vpop.f32.mrb[0].mxu0
    %314 = vdwg.mxu0
    %v315 = vadd.f32 %v233, %v312
    %v316 = vtanh.pop %v315
    %v317 = vmul.f32 %v316, %v125
    %v318 = vadd.f32 %v317, %v126
    %v319 = vmul.f32 %v318, 0.0
    %321 = vrot.lane.b32.xlu0 %v318, 64
    %v322 = vpop.permute.xlu0 %321
    %v324 = vmul.f32 %v318, %v322
    %326 = vrot.lane.b32.xlu0 %v324, 32
    %v327 = vpop.permute.xlu0 %326
    %v329 = vadd.f32 %v319, %v327
    %v330 = vtanh.pop %v329
    %332 = vrot.lane.b32.xlu0 %v330, 64
    %v333 = vpop.permute.xlu0 %332
    %v335 = vmul.f32 %v318, %v333
    %v337 = vlaneseq
    %v338 = vshrl.u32 %v337, 7
    %v339 = vsub.s32 0, %v338
    %v340 = vrot.slane %v147, %v339
    %343 = vrot.lane.b32.xlu0 %v335, 32
    %v344 = vpop.permute.xlu0 %343
    %v345 = vsel %vm241, %v344, 0
    %347 = vmatprep.subr.mxu0 0.0
    %348 = vmatpush1.msra.mxu0 %v139
    %349 = vmatprep.subr.mxu0 0.0
    %350 = vmatpush1.msra.mxu0 %v140
    %351 = vmatprep.subr.mxu0 0.0
    %352 = vmatpush1.msra.mxu0 %v141
    %353 = vmatprep.subr.mxu0 0.0
    %354 = vmatpush1.msra.mxu0 %v142
    %355 = vmatprep.subr.mxu0 0.0
    %356 = vmatpush1.msra.mxu0 0.0
    %357 = vmatprep.subr.mxu0 0.0
    %358 = vmatpush1.msra.mxu0 0.0
    %359 = vmatprep.subr.mxu0 0.0
    %360 = vmatpush1.msra.mxu0 0.0
    %361 = vmatprep.subr.mxu0 0.0
    %362 = vmatpush1.msra.mxu0 0.0
    %363 = vmatprep.subr.mxu0 0.0
    %364 = vmatpush1.msra.mxu0 0.0
    %365 = vmatprep.subr.mxu0 0.0
    %366 = vmatpush1.msra.mxu0 0.0
    %367 = vmatprep.subr.mxu0 0.0
    %368 = vmatpush1.msra.mxu0 0.0
    %369 = vmatprep.subr.mxu0 0.0
    %370 = vmatpush1.msra.mxu0 0.0
    %371 = vmatprep.subr.mxu0 0.0
    %372 = vmatpush1.msra.mxu0 0.0
    %373 = vmatprep.subr.mxu0 0.0
    %374 = vmatpush1.msra.mxu0 0.0
    %375 = vmatprep.subr.mxu0 0.0
    %376 = vmatpush1.msra.mxu0 0.0
    %377 = vmatprep.subr.mxu0 0.0
    %378 = vmatpush1.msra.mxu0 0.0
    %379 = vmatprep.subr.mxu0 0.0
    %380 = vmatpush1.msra.mxu0 0.0
    %381 = vmatprep.subr.mxu0 0.0
    %382 = vmatpush1.msra.mxu0 0.0
    %383 = vmatprep.subr.mxu0 0.0
    %384 = vmatpush1.msra.mxu0 0.0
    %385 = vmatprep.subr.mxu0 0.0
    %386 = vmatpush1.msra.mxu0 0.0
    %387 = vmatprep.subr.mxu0 0.0
    %388 = vmatpush1.msra.mxu0 0.0
    %389 = vmatprep.subr.mxu0 0.0
    %390 = vmatpush1.msra.mxu0 0.0
    %391 = vmatprep.subr.mxu0 0.0
    %392 = vmatpush1.msra.mxu0 0.0
    %393 = vmatprep.subr.mxu0 0.0
    %394 = vmatpush1.msra.mxu0 0.0
    %395 = vmatprep.subr.mxu0 0.0
    %396 = vmatpush1.msra.mxu0 0.0
    %397 = vmatprep.subr.mxu0 0.0
    %398 = vmatpush1.msra.mxu0 0.0
    %399 = vmatprep.subr.mxu0 0.0
    %400 = vmatpush1.msra.mxu0 0.0
    %401 = vmatprep.subr.mxu0 0.0
    %402 = vmatpush1.msra.mxu0 0.0
    %403 = vmatprep.subr.mxu0 0.0
    %404 = vmatpush1.msra.mxu0 0.0
    %405 = vmatprep.subr.mxu0 0.0
    %406 = vmatpush1.msra.mxu0 0.0
    %407 = vmatprep.subr.mxu0 0.0
    %408 = vmatpush1.msra.mxu0 0.0
    %409 = vmatprep.subr.mxu0 0.0
    %410 = vmatpush1.msra.mxu0 0.0
    %411 = vmatprep.mubr.f32.mxu0 0.0
    %412 = vmatmul.mubr.f32.gmra.mrb[0].mxu0 %v345
    %v413 = vpop.f32.mrb[0].mxu0
    %v414 = vadd.f32 %v340, %v413
    %v415 = vpop.f32.mrb[0].mxu0
    %416 = vdwg.mxu0
    %417 = vmatprep.subr.mxu0 0.0
    %418 = vmatpush1.msra.mxu0 %v131
    %419 = vmatprep.subr.mxu0 0.0
    %420 = vmatpush1.msra.mxu0 %v132
    %421 = vmatprep.subr.mxu0 0.0
    %422 = vmatpush1.msra.mxu0 %v133
    %423 = vmatprep.subr.mxu0 0.0
    %424 = vmatpush1.msra.mxu0 %v134
    %425 = vmatprep.subr.mxu0 0.0
    %426 = vmatpush1.msra.mxu0 0.0
    %427 = vmatprep.subr.mxu0 0.0
    %428 = vmatpush1.msra.mxu0 0.0
    %429 = vmatprep.subr.mxu0 0.0
    %430 = vmatpush1.msra.mxu0 0.0
    %431 = vmatprep.subr.mxu0 0.0
    %432 = vmatpush1.msra.mxu0 0.0
    %433 = vmatprep.subr.mxu0 0.0
    %434 = vmatpush1.msra.mxu0 0.0
    %435 = vmatprep.subr.mxu0 0.0
    %436 = vmatpush1.msra.mxu0 0.0
    %437 = vmatprep.subr.mxu0 0.0
    %438 = vmatpush1.msra.mxu0 0.0
    %439 = vmatprep.subr.mxu0 0.0
    %440 = vmatpush1.msra.mxu0 0.0
    %441 = vmatprep.subr.mxu0 0.0
    %442 = vmatpush1.msra.mxu0 0.0
    %443 = vmatprep.subr.mxu0 0.0
    %444 = vmatpush1.msra.mxu0 0.0
    %445 = vmatprep.subr.mxu0 0.0
    %446 = vmatpush1.msra.mxu0 0.0
    %447 = vmatprep.subr.mxu0 0.0
    %448 = vmatpush1.msra.mxu0 0.0
    %449 = vmatprep.subr.mxu0 0.0
    %450 = vmatpush1.msra.mxu0 0.0
    %451 = vmatprep.subr.mxu0 0.0
    %452 = vmatpush1.msra.mxu0 0.0
    %453 = vmatprep.subr.mxu0 0.0
    %454 = vmatpush1.msra.mxu0 0.0
    %455 = vmatprep.subr.mxu0 0.0
    %456 = vmatpush1.msra.mxu0 0.0
    %457 = vmatprep.subr.mxu0 0.0
    %458 = vmatpush1.msra.mxu0 0.0
    %459 = vmatprep.subr.mxu0 0.0
    %460 = vmatpush1.msra.mxu0 0.0
    %461 = vmatprep.subr.mxu0 0.0
    %462 = vmatpush1.msra.mxu0 0.0
    %463 = vmatprep.subr.mxu0 0.0
    %464 = vmatpush1.msra.mxu0 0.0
    %465 = vmatprep.subr.mxu0 0.0
    %466 = vmatpush1.msra.mxu0 0.0
    %467 = vmatprep.subr.mxu0 0.0
    %468 = vmatpush1.msra.mxu0 0.0
    %469 = vmatprep.subr.mxu0 0.0
    %470 = vmatpush1.msra.mxu0 0.0
    %471 = vmatprep.subr.mxu0 0.0
    %472 = vmatpush1.msra.mxu0 0.0
    %473 = vmatprep.subr.mxu0 0.0
    %474 = vmatpush1.msra.mxu0 0.0
    %475 = vmatprep.subr.mxu0 0.0
    %476 = vmatpush1.msra.mxu0 0.0
    %477 = vmatprep.subr.mxu0 0.0
    %478 = vmatpush1.msra.mxu0 0.0
    %479 = vmatprep.subr.mxu0 0.0
    %480 = vmatpush1.msra.mxu0 0.0
    %481 = vmatprep.mubr.f32.mxu0 0.0
    %482 = vmatmul.mubr.f32.gmra.mrb[0].mxu0 %v243
    %v483 = vpop.f32.mrb[0].mxu0
    %v484 = vadd.f32 0.0, %v483
    %v485 = vpop.f32.mrb[0].mxu0
    %486 = vdwg.mxu0
    %v487 = vadd.f32 %v414, %v484
    %v488 = vtanh.pop %v487
    %v489 = vmul.f32 %v488, %v125
    %v490 = vadd.f32 %v489, %v126
    %v491 = vmul.f32 %v490, 0.0
    %493 = vrot.lane.b32.xlu0 %v490, 64
    %v494 = vpop.permute.xlu0 %493
    %v496 = vmul.f32 %v490, %v494
    %498 = vrot.lane.b32.xlu0 %v496, 32
    %v499 = vpop.permute.xlu0 %498
    %v501 = vadd.f32 %v491, %v499
    %v502 = vtanh.pop %v501
    %504 = vrot.lane.b32.xlu0 %v502, 64
    %v505 = vpop.permute.xlu0 %504
    %v507 = vmul.f32 %v490, %v505
    %v509 = vlaneseq
    %v510 = vshrl.u32 %v509, 7
    %v511 = vsub.s32 0, %v510
    %v512 = vrot.slane %v148, %v511
    %515 = vrot.lane.b32.xlu0 %v507, 32
    %v516 = vpop.permute.xlu0 %515
    %v517 = vsel %vm241, %v516, 0
    %519 = vmatprep.subr.mxu0 0.0
    %520 = vmatpush1.msra.mxu0 %v143
    %521 = vmatprep.subr.mxu0 0.0
    %522 = vmatpush1.msra.mxu0 %v144
    %523 = vmatprep.subr.mxu0 0.0
    %524 = vmatpush1.msra.mxu0 %v145
    %525 = vmatprep.subr.mxu0 0.0
    %526 = vmatpush1.msra.mxu0 %v146
    %527 = vmatprep.subr.mxu0 0.0
    %528 = vmatpush1.msra.mxu0 0.0
    %529 = vmatprep.subr.mxu0 0.0
    %530 = vmatpush1.msra.mxu0 0.0
    %531 = vmatprep.subr.mxu0 0.0
    %532 = vmatpush1.msra.mxu0 0.0
    %533 = vmatprep.subr.mxu0 0.0
    %534 = vmatpush1.msra.mxu0 0.0
    %535 = vmatprep.subr.mxu0 0.0
    %536 = vmatpush1.msra.mxu0 0.0
    %537 = vmatprep.subr.mxu0 0.0
    %538 = vmatpush1.msra.mxu0 0.0
    %539 = vmatprep.subr.mxu0 0.0
    %540 = vmatpush1.msra.mxu0 0.0
    %541 = vmatprep.subr.mxu0 0.0
    %542 = vmatpush1.msra.mxu0 0.0
    %543 = vmatprep.subr.mxu0 0.0
    %544 = vmatpush1.msra.mxu0 0.0
    %545 = vmatprep.subr.mxu0 0.0
    %546 = vmatpush1.msra.mxu0 0.0
    %547 = vmatprep.subr.mxu0 0.0
    %548 = vmatpush1.msra.mxu0 0.0
    %549 = vmatprep.subr.mxu0 0.0
    %550 = vmatpush1.msra.mxu0 0.0
    %551 = vmatprep.subr.mxu0 0.0
    %552 = vmatpush1.msra.mxu0 0.0
    %553 = vmatprep.subr.mxu0 0.0
    %554 = vmatpush1.msra.mxu0 0.0
    %555 = vmatprep.subr.mxu0 0.0
    %556 = vmatpush1.msra.mxu0 0.0
    %557 = vmatprep.subr.mxu0 0.0
    %558 = vmatpush1.msra.mxu0 0.0
    %559 = vmatprep.subr.mxu0 0.0
    %560 = vmatpush1.msra.mxu0 0.0
    %561 = vmatprep.subr.mxu0 0.0
    %562 = vmatpush1.msra.mxu0 0.0
    %563 = vmatprep.subr.mxu0 0.0
    %564 = vmatpush1.msra.mxu0 0.0
    %565 = vmatprep.subr.mxu0 0.0
    %566 = vmatpush1.msra.mxu0 0.0
    %567 = vmatprep.subr.mxu0 0.0
    %568 = vmatpush1.msra.mxu0 0.0
    %569 = vmatprep.subr.mxu0 0.0
    %570 = vmatpush1.msra.mxu0 0.0
    %571 = vmatprep.subr.mxu0 0.0
    %572 = vmatpush1.msra.mxu0 0.0
    %573 = vmatprep.subr.mxu0 0.0
    %574 = vmatpush1.msra.mxu0 0.0
    %575 = vmatprep.subr.mxu0 0.0
    %576 = vmatpush1.msra.mxu0 0.0
    %577 = vmatprep.subr.mxu0 0.0
    %578 = vmatpush1.msra.mxu0 0.0
    %579 = vmatprep.subr.mxu0 0.0
    %580 = vmatpush1.msra.mxu0 0.0
    %581 = vmatprep.subr.mxu0 0.0
    %582 = vmatpush1.msra.mxu0 0.0
    %583 = vmatprep.mubr.f32.mxu0 0.0
    %584 = vmatmul.mubr.f32.gmra.mrb[0].mxu0 %v517
    %v585 = vpop.f32.mrb[0].mxu0
    %v586 = vadd.f32 %v512, %v585
    %v587 = vpop.f32.mrb[0].mxu0
    %588 = vdwg.mxu0
    %589 = vmatprep.subr.mxu0 0.0
    %590 = vmatpush1.msra.mxu0 %v127
    %591 = vmatprep.subr.mxu0 0.0
    %592 = vmatpush1.msra.mxu0 %v128
    %593 = vmatprep.subr.mxu0 0.0
    %594 = vmatpush1.msra.mxu0 %v129
    %595 = vmatprep.subr.mxu0 0.0
    %596 = vmatpush1.msra.mxu0 %v130
    %597 = vmatprep.subr.mxu0 0.0
    %598 = vmatpush1.msra.mxu0 0.0
    %599 = vmatprep.subr.mxu0 0.0
    %600 = vmatpush1.msra.mxu0 0.0
    %601 = vmatprep.subr.mxu0 0.0
    %602 = vmatpush1.msra.mxu0 0.0
    %603 = vmatprep.subr.mxu0 0.0
    %604 = vmatpush1.msra.mxu0 0.0
    %605 = vmatprep.subr.mxu0 0.0
    %606 = vmatpush1.msra.mxu0 0.0
    %607 = vmatprep.subr.mxu0 0.0
    %608 = vmatpush1.msra.mxu0 0.0
    %609 = vmatprep.subr.mxu0 0.0
    %610 = vmatpush1.msra.mxu0 0.0
    %611 = vmatprep.subr.mxu0 0.0
    %612 = vmatpush1.msra.mxu0 0.0
    %613 = vmatprep.subr.mxu0 0.0
    %614 = vmatpush1.msra.mxu0 0.0
    %615 = vmatprep.subr.mxu0 0.0
    %616 = vmatpush1.msra.mxu0 0.0
    %617 = vmatprep.subr.mxu0 0.0
    %618 = vmatpush1.msra.mxu0 0.0
    %619 = vmatprep.subr.mxu0 0.0
    %620 = vmatpush1.msra.mxu0 0.0
    %621 = vmatprep.subr.mxu0 0.0
    %622 = vmatpush1.msra.mxu0 0.0
    %623 = vmatprep.subr.mxu0 0.0
    %624 = vmatpush1.msra.mxu0 0.0
    %625 = vmatprep.subr.mxu0 0.0
    %626 = vmatpush1.msra.mxu0 0.0
    %627 = vmatprep.subr.mxu0 0.0
    %628 = vmatpush1.msra.mxu0 0.0
    %629 = vmatprep.subr.mxu0 0.0
    %630 = vmatpush1.msra.mxu0 0.0
    %631 = vmatprep.subr.mxu0 0.0
    %632 = vmatpush1.msra.mxu0 0.0
    %633 = vmatprep.subr.mxu0 0.0
    %634 = vmatpush1.msra.mxu0 0.0
    %635 = vmatprep.subr.mxu0 0.0
    %636 = vmatpush1.msra.mxu0 0.0
    %637 = vmatprep.subr.mxu0 0.0
    %638 = vmatpush1.msra.mxu0 0.0
    %639 = vmatprep.subr.mxu0 0.0
    %640 = vmatpush1.msra.mxu0 0.0
    %641 = vmatprep.subr.mxu0 0.0
    %642 = vmatpush1.msra.mxu0 0.0
    %643 = vmatprep.subr.mxu0 0.0
    %644 = vmatpush1.msra.mxu0 0.0
    %645 = vmatprep.subr.mxu0 0.0
    %646 = vmatpush1.msra.mxu0 0.0
    %647 = vmatprep.subr.mxu0 0.0
    %648 = vmatpush1.msra.mxu0 0.0
    %649 = vmatprep.subr.mxu0 0.0
    %650 = vmatpush1.msra.mxu0 0.0
    %651 = vmatprep.subr.mxu0 0.0
    %652 = vmatpush1.msra.mxu0 0.0
    %653 = vmatprep.mubr.f32.mxu0 0.0
    %654 = vmatmul.mubr.f32.gmra.mrb[0].mxu0 %v345
    %v655 = vpop.f32.mrb[0].mxu0
    %v656 = vadd.f32 0.0, %v655
    %v657 = vpop.f32.mrb[0].mxu0
    %658 = vdwg.mxu0
    %v660 = vrot.slane %v656, 6
    %v662 = vadd.f32 %v233, %v660
    %v663 = vtanh.pop %v662
    %v664 = vmul.f32 %v663, %v125
    %v665 = vadd.f32 %v664, %v126
    %v667 = vrot.slane %v329, 6
    %v669 = vmul.f32 %v665, %v667
    %671 = vrot.lane.b32.xlu0 %v665, 64
    %v672 = vpop.permute.xlu0 %671
    %v674 = vmul.f32 %v665, %v672
    %676 = vrot.lane.b32.xlu0 %v674, 32
    %v677 = vpop.permute.xlu0 %676
    %v679 = vadd.f32 %v669, %v677
    %v680 = vtanh.pop %v679
    %682 = vrot.lane.b32.xlu0 %v680, 64
    %v683 = vpop.permute.xlu0 %682
    %v685 = vmul.f32 %v665, %v683
    %v687 = vrot.slane %v685, 2
    %688 = vrot.lane.b32.xlu0 %v687, 32
    %v689 = vpop.permute.xlu0 %688
    %v690 = vsel %vm241, %v689, 0
    %692 = vmatprep.subr.mxu0 0.0
    %693 = vmatpush1.msra.mxu0 %v139
    %694 = vmatprep.subr.mxu0 0.0
    %695 = vmatpush1.msra.mxu0 %v140
    %696 = vmatprep.subr.mxu0 0.0
    %697 = vmatpush1.msra.mxu0 %v141
    %698 = vmatprep.subr.mxu0 0.0
    %699 = vmatpush1.msra.mxu0 %v142
    %700 = vmatprep.subr.mxu0 0.0
    %701 = vmatpush1.msra.mxu0 0.0
    %702 = vmatprep.subr.mxu0 0.0
    %703 = vmatpush1.msra.mxu0 0.0
    %704 = vmatprep.subr.mxu0 0.0
    %705 = vmatpush1.msra.mxu0 0.0
    %706 = vmatprep.subr.mxu0 0.0
    %707 = vmatpush1.msra.mxu0 0.0
    %708 = vmatprep.subr.mxu0 0.0
    %709 = vmatpush1.msra.mxu0 0.0
    %710 = vmatprep.subr.mxu0 0.0
    %711 = vmatpush1.msra.mxu0 0.0
    %712 = vmatprep.subr.mxu0 0.0
    %713 = vmatpush1.msra.mxu0 0.0
    %714 = vmatprep.subr.mxu0 0.0
    %715 = vmatpush1.msra.mxu0 0.0
    %716 = vmatprep.subr.mxu0 0.0
    %717 = vmatpush1.msra.mxu0 0.0
    %718 = vmatprep.subr.mxu0 0.0
    %719 = vmatpush1.msra.mxu0 0.0
    %720 = vmatprep.subr.mxu0 0.0
    %721 = vmatpush1.msra.mxu0 0.0
    %722 = vmatprep.subr.mxu0 0.0
    %723 = vmatpush1.msra.mxu0 0.0
    %724 = vmatprep.subr.mxu0 0.0
    %725 = vmatpush1.msra.mxu0 0.0
    %726 = vmatprep.subr.mxu0 0.0
    %727 = vmatpush1.msra.mxu0 0.0
    %728 = vmatprep.subr.mxu0 0.0
    %729 = vmatpush1.msra.mxu0 0.0
    %730 = vmatprep.subr.mxu0 0.0
    %731 = vmatpush1.msra.mxu0 0.0
    %732 = vmatprep.subr.mxu0 0.0
    %733 = vmatpush1.msra.mxu0 0.0
    %734 = vmatprep.subr.mxu0 0.0
    %735 = vmatpush1.msra.mxu0 0.0
    %736 = vmatprep.subr.mxu0 0.0
    %737 = vmatpush1.msra.mxu0 0.0
    %738 = vmatprep.subr.mxu0 0.0
    %739 = vmatpush1.msra.mxu0 0.0
    %740 = vmatprep.subr.mxu0 0.0
    %741 = vmatpush1.msra.mxu0 0.0
    %742 = vmatprep.subr.mxu0 0.0
    %743 = vmatpush1.msra.mxu0 0.0
    %744 = vmatprep.subr.mxu0 0.0
    %745 = vmatpush1.msra.mxu0 0.0
    %746 = vmatprep.subr.mxu0 0.0
    %747 = vmatpush1.msra.mxu0 0.0
    %748 = vmatprep.subr.mxu0 0.0
    %749 = vmatpush1.msra.mxu0 0.0
    %750 = vmatprep.subr.mxu0 0.0
    %751 = vmatpush1.msra.mxu0 0.0
    %752 = vmatprep.subr.mxu0 0.0
    %753 = vmatpush1.msra.mxu0 0.0
    %754 = vmatprep.subr.mxu0 0.0
    %755 = vmatpush1.msra.mxu0 0.0
    %756 = vmatprep.mubr.f32.mxu0 0.0
    %757 = vmatmul.mubr.f32.gmra.mrb[0].mxu0 %v690
    %v758 = vpop.f32.mrb[0].mxu0
    %v759 = vadd.f32 %v340, %v758
    %v760 = vpop.f32.mrb[0].mxu0
    %761 = vdwg.mxu0
    %762 = vmatprep.subr.mxu0 0.0
    %763 = vmatpush1.msra.mxu0 %v135
    %764 = vmatprep.subr.mxu0 0.0
    %765 = vmatpush1.msra.mxu0 %v136
    %766 = vmatprep.subr.mxu0 0.0
    %767 = vmatpush1.msra.mxu0 %v137
    %768 = vmatprep.subr.mxu0 0.0
    %769 = vmatpush1.msra.mxu0 %v138
    %770 = vmatprep.subr.mxu0 0.0
    %771 = vmatpush1.msra.mxu0 0.0
    %772 = vmatprep.subr.mxu0 0.0
    %773 = vmatpush1.msra.mxu0 0.0
    %774 = vmatprep.subr.mxu0 0.0
    %775 = vmatpush1.msra.mxu0 0.0
    %776 = vmatprep.subr.mxu0 0.0
    %777 = vmatpush1.msra.mxu0 0.0
    %778 = vmatprep.subr.mxu0 0.0
    %779 = vmatpush1.msra.mxu0 0.0
    %780 = vmatprep.subr.mxu0 0.0
    %781 = vmatpush1.msra.mxu0 0.0
    %782 = vmatprep.subr.mxu0 0.0
    %783 = vmatpush1.msra.mxu0 0.0
    %784 = vmatprep.subr.mxu0 0.0
    %785 = vmatpush1.msra.mxu0 0.0
    %786 = vmatprep.subr.mxu0 0.0
    %787 = vmatpush1.msra.mxu0 0.0
    %788 = vmatprep.subr.mxu0 0.0
    %789 = vmatpush1.msra.mxu0 0.0
    %790 = vmatprep.subr.mxu0 0.0
    %791 = vmatpush1.msra.mxu0 0.0
    %792 = vmatprep.subr.mxu0 0.0
    %793 = vmatpush1.msra.mxu0 0.0
    %794 = vmatprep.subr.mxu0 0.0
    %795 = vmatpush1.msra.mxu0 0.0
    %796 = vmatprep.subr.mxu0 0.0
    %797 = vmatpush1.msra.mxu0 0.0
    %798 = vmatprep.subr.mxu0 0.0
    %799 = vmatpush1.msra.mxu0 0.0
    %800 = vmatprep.subr.mxu0 0.0
    %801 = vmatpush1.msra.mxu0 0.0
    %802 = vmatprep.subr.mxu0 0.0
    %803 = vmatpush1.msra.mxu0 0.0
    %804 = vmatprep.subr.mxu0 0.0
    %805 = vmatpush1.msra.mxu0 0.0
    %806 = vmatprep.subr.mxu0 0.0
    %807 = vmatpush1.msra.mxu0 0.0
    %808 = vmatprep.subr.mxu0 0.0
    %809 = vmatpush1.msra.mxu0 0.0
    %810 = vmatprep.subr.mxu0 0.0
    %811 = vmatpush1.msra.mxu0 0.0
    %812 = vmatprep.subr.mxu0 0.0
    %813 = vmatpush1.msra.mxu0 0.0
    %814 = vmatprep.subr.mxu0 0.0
    %815 = vmatpush1.msra.mxu0 0.0
    %816 = vmatprep.subr.mxu0 0.0
    %817 = vmatpush1.msra.mxu0 0.0
    %818 = vmatprep.subr.mxu0 0.0
    %819 = vmatpush1.msra.mxu0 0.0
    %820 = vmatprep.subr.mxu0 0.0
    %821 = vmatpush1.msra.mxu0 0.0
    %822 = vmatprep.subr.mxu0 0.0
    %823 = vmatpush1.msra.mxu0 0.0
    %824 = vmatprep.subr.mxu0 0.0
    %825 = vmatpush1.msra.mxu0 0.0
    %826 = vmatprep.mubr.f32.mxu0 0.0
    %827 = vmatmul.mubr.f32.gmra.mrb[0].mxu0 %v243
    %v828 = vpop.f32.mrb[0].mxu0
    %v829 = vadd.f32 0.0, %v828
    %v830 = vpop.f32.mrb[0].mxu0
    %831 = vdwg.mxu0
    %v832 = vadd.f32 %v586, %v829
    %v833 = vtanh.pop %v832
    %v834 = vmul.f32 %v833, %v125
    %v835 = vadd.f32 %v834, %v126
    %v836 = vmul.f32 %v835, 0.0
    %838 = vrot.lane.b32.xlu0 %v835, 64
    %v839 = vpop.permute.xlu0 %838
    %v841 = vmul.f32 %v835, %v839
    %843 = vrot.lane.b32.xlu0 %v841, 32
    %v844 = vpop.permute.xlu0 %843
    %v846 = vadd.f32 %v836, %v844
    %v847 = vtanh.pop %v846
    %849 = vrot.lane.b32.xlu0 %v847, 64
    %v850 = vpop.permute.xlu0 %849
    %v852 = vmul.f32 %v835, %v850
    %853 = vmatprep.subr.mxu0 0.0
    %854 = vmatpush1.msra.mxu0 %v131
    %855 = vmatprep.subr.mxu0 0.0
    %856 = vmatpush1.msra.mxu0 %v132
    %857 = vmatprep.subr.mxu0 0.0
    %858 = vmatpush1.msra.mxu0 %v133
    %859 = vmatprep.subr.mxu0 0.0
    %860 = vmatpush1.msra.mxu0 %v134
    %861 = vmatprep.subr.mxu0 0.0
    %862 = vmatpush1.msra.mxu0 0.0
    %863 = vmatprep.subr.mxu0 0.0
    %864 = vmatpush1.msra.mxu0 0.0
    %865 = vmatprep.subr.mxu0 0.0
    %866 = vmatpush1.msra.mxu0 0.0
    %867 = vmatprep.subr.mxu0 0.0
    %868 = vmatpush1.msra.mxu0 0.0
    %869 = vmatprep.subr.mxu0 0.0
    %870 = vmatpush1.msra.mxu0 0.0
    %871 = vmatprep.subr.mxu0 0.0
    %872 = vmatpush1.msra.mxu0 0.0
    %873 = vmatprep.subr.mxu0 0.0
    %874 = vmatpush1.msra.mxu0 0.0
    %875 = vmatprep.subr.mxu0 0.0
    %876 = vmatpush1.msra.mxu0 0.0
    %877 = vmatprep.subr.mxu0 0.0
    %878 = vmatpush1.msra.mxu0 0.0
    %879 = vmatprep.subr.mxu0 0.0
    %880 = vmatpush1.msra.mxu0 0.0
    %881 = vmatprep.subr.mxu0 0.0
    %882 = vmatpush1.msra.mxu0 0.0
    %883 = vmatprep.subr.mxu0 0.0
    %884 = vmatpush1.msra.mxu0 0.0
    %885 = vmatprep.subr.mxu0 0.0
    %886 = vmatpush1.msra.mxu0 0.0
    %887 = vmatprep.subr.mxu0 0.0
    %888 = vmatpush1.msra.mxu0 0.0
    %889 = vmatprep.subr.mxu0 0.0
    %890 = vmatpush1.msra.mxu0 0.0
    %891 = vmatprep.subr.mxu0 0.0
    %892 = vmatpush1.msra.mxu0 0.0
    %893 = vmatprep.subr.mxu0 0.0
    %894 = vmatpush1.msra.mxu0 0.0
    %895 = vmatprep.subr.mxu0 0.0
    %896 = vmatpush1.msra.mxu0 0.0
    %897 = vmatprep.subr.mxu0 0.0
    %898 = vmatpush1.msra.mxu0 0.0
    %899 = vmatprep.subr.mxu0 0.0
    %900 = vmatpush1.msra.mxu0 0.0
    %901 = vmatprep.subr.mxu0 0.0
    %902 = vmatpush1.msra.mxu0 0.0
    %903 = vmatprep.subr.mxu0 0.0
    %904 = vmatpush1.msra.mxu0 0.0
    %905 = vmatprep.subr.mxu0 0.0
    %906 = vmatpush1.msra.mxu0 0.0
    %907 = vmatprep.subr.mxu0 0.0
    %908 = vmatpush1.msra.mxu0 0.0
    %909 = vmatprep.subr.mxu0 0.0
    %910 = vmatpush1.msra.mxu0 0.0
    %911 = vmatprep.subr.mxu0 0.0
    %912 = vmatpush1.msra.mxu0 0.0
    %913 = vmatprep.subr.mxu0 0.0
    %914 = vmatpush1.msra.mxu0 0.0
    %915 = vmatprep.subr.mxu0 0.0
    %916 = vmatpush1.msra.mxu0 0.0
    %917 = vmatprep.mubr.f32.mxu0 0.0
    %918 = vmatmul.mubr.f32.gmra.mrb[0].mxu0 %v517
    %v919 = vpop.f32.mrb[0].mxu0
    %v920 = vadd.f32 0.0, %v919
    %v921 = vpop.f32.mrb[0].mxu0
    %922 = vdwg.mxu0
    %v923 = vadd.f32 %v759, %v920
    %v924 = vtanh.pop %v923
    %v925 = vmul.f32 %v924, %v125
    %v926 = vadd.f32 %v925, %v126
    %v927 = vmul.f32 %v926, %v501
    %929 = vrot.lane.b32.xlu0 %v926, 64
    %v930 = vpop.permute.xlu0 %929
    %v932 = vmul.f32 %v926, %v930
    %934 = vrot.lane.b32.xlu0 %v932, 32
    %v935 = vpop.permute.xlu0 %934
    %v937 = vadd.f32 %v927, %v935
    %v938 = vtanh.pop %v937
    %940 = vrot.lane.b32.xlu0 %v938, 64
    %v941 = vpop.permute.xlu0 %940
    %v943 = vmul.f32 %v926, %v941
    %945 = vrot.lane.b32.xlu0 %v943, 32
    %v946 = vpop.permute.xlu0 %945
    %v947 = vsel %vm241, %v946, 0
    %949 = vmatprep.subr.mxu0 0.0
    %950 = vmatpush1.msra.mxu0 %v143
    %951 = vmatprep.subr.mxu0 0.0
    %952 = vmatpush1.msra.mxu0 %v144
    %953 = vmatprep.subr.mxu0 0.0
    %954 = vmatpush1.msra.mxu0 %v145
    %955 = vmatprep.subr.mxu0 0.0
    %956 = vmatpush1.msra.mxu0 %v146
    %957 = vmatprep.subr.mxu0 0.0
    %958 = vmatpush1.msra.mxu0 0.0
    %959 = vmatprep.subr.mxu0 0.0
    %960 = vmatpush1.msra.mxu0 0.0
    %961 = vmatprep.subr.mxu0 0.0
    %962 = vmatpush1.msra.mxu0 0.0
    %963 = vmatprep.subr.mxu0 0.0
    %964 = vmatpush1.msra.mxu0 0.0
    %965 = vmatprep.subr.mxu0 0.0
    %966 = vmatpush1.msra.mxu0 0.0
    %967 = vmatprep.subr.mxu0 0.0
    %968 = vmatpush1.msra.mxu0 0.0
    %969 = vmatprep.subr.mxu0 0.0
    %970 = vmatpush1.msra.mxu0 0.0
    %971 = vmatprep.subr.mxu0 0.0
    %972 = vmatpush1.msra.mxu0 0.0
    %973 = vmatprep.subr.mxu0 0.0
    %974 = vmatpush1.msra.mxu0 0.0
    %975 = vmatprep.subr.mxu0 0.0
    %976 = vmatpush1.msra.mxu0 0.0
    %977 = vmatprep.subr.mxu0 0.0
    %978 = vmatpush1.msra.mxu0 0.0
    %979 = vmatprep.subr.mxu0 0.0
    %980 = vmatpush1.msra.mxu0 0.0
    %981 = vmatprep.subr.mxu0 0.0
    %982 = vmatpush1.msra.mxu0 0.0
    %983 = vmatprep.subr.mxu0 0.0
    %984 = vmatpush1.msra.mxu0 0.0
    %985 = vmatprep.subr.mxu0 0.0
    %986 = vmatpush1.msra.mxu0 0.0
    %987 = vmatprep.subr.mxu0 0.0
    %988 = vmatpush1.msra.mxu0 0.0
    %989 = vmatprep.subr.mxu0 0.0
    %990 = vmatpush1.msra.mxu0 0.0
    %991 = vmatprep.subr.mxu0 0.0
    %992 = vmatpush1.msra.mxu0 0.0
    %993 = vmatprep.subr.mxu0 0.0
    %994 = vmatpush1.msra.mxu0 0.0
    %995 = vmatprep.subr.mxu0 0.0
    %996 = vmatpush1.msra.mxu0 0.0
    %997 = vmatprep.subr.mxu0 0.0
    %998 = vmatpush1.msra.mxu0 0.0
    %999 = vmatprep.subr.mxu0 0.0
    %1000 = vmatpush1.msra.mxu0 0.0
    %1001 = vmatprep.subr.mxu0 0.0
    %1002 = vmatpush1.msra.mxu0 0.0
    %1003 = vmatprep.subr.mxu0 0.0
    %1004 = vmatpush1.msra.mxu0 0.0
    %1005 = vmatprep.subr.mxu0 0.0
    %1006 = vmatpush1.msra.mxu0 0.0
    %1007 = vmatprep.subr.mxu0 0.0
    %1008 = vmatpush1.msra.mxu0 0.0
    %1009 = vmatprep.subr.mxu0 0.0
    %1010 = vmatpush1.msra.mxu0 0.0
    %1011 = vmatprep.subr.mxu0 0.0
    %1012 = vmatpush1.msra.mxu0 0.0
    %1013 = vmatprep.mubr.f32.mxu0 0.0
    %1014 = vmatmul.mubr.f32.gmra.mrb[0].mxu0 %v947
    %v1015 = vpop.f32.mrb[0].mxu0
    %v1016 = vadd.f32 %v512, %v1015
    %v1017 = vpop.f32.mrb[0].mxu0
    %1018 = vdwg.mxu0
    %1019 = vmatprep.subr.mxu0 0.0
    %1020 = vmatpush1.msra.mxu0 %v127
    %1021 = vmatprep.subr.mxu0 0.0
    %1022 = vmatpush1.msra.mxu0 %v128
    %1023 = vmatprep.subr.mxu0 0.0
    %1024 = vmatpush1.msra.mxu0 %v129
    %1025 = vmatprep.subr.mxu0 0.0
    %1026 = vmatpush1.msra.mxu0 %v130
    %1027 = vmatprep.subr.mxu0 0.0
    %1028 = vmatpush1.msra.mxu0 0.0
    %1029 = vmatprep.subr.mxu0 0.0
    %1030 = vmatpush1.msra.mxu0 0.0
    %1031 = vmatprep.subr.mxu0 0.0
    %1032 = vmatpush1.msra.mxu0 0.0
    %1033 = vmatprep.subr.mxu0 0.0
    %1034 = vmatpush1.msra.mxu0 0.0
    %1035 = vmatprep.subr.mxu0 0.0
    %1036 = vmatpush1.msra.mxu0 0.0
    %1037 = vmatprep.subr.mxu0 0.0
    %1038 = vmatpush1.msra.mxu0 0.0
    %1039 = vmatprep.subr.mxu0 0.0
    %1040 = vmatpush1.msra.mxu0 0.0
    %1041 = vmatprep.subr.mxu0 0.0
    %1042 = vmatpush1.msra.mxu0 0.0
    %1043 = vmatprep.subr.mxu0 0.0
    %1044 = vmatpush1.msra.mxu0 0.0
    %1045 = vmatprep.subr.mxu0 0.0
    %1046 = vmatpush1.msra.mxu0 0.0
    %1047 = vmatprep.subr.mxu0 0.0
    %1048 = vmatpush1.msra.mxu0 0.0
    %1049 = vmatprep.subr.mxu0 0.0
    %1050 = vmatpush1.msra.mxu0 0.0
    %1051 = vmatprep.subr.mxu0 0.0
    %1052 = vmatpush1.msra.mxu0 0.0
    %1053 = vmatprep.subr.mxu0 0.0
    %1054 = vmatpush1.msra.mxu0 0.0
    %1055 = vmatprep.subr.mxu0 0.0
    %1056 = vmatpush1.msra.mxu0 0.0
    %1057 = vmatprep.subr.mxu0 0.0
    %1058 = vmatpush1.msra.mxu0 0.0
    %1059 = vmatprep.subr.mxu0 0.0
    %1060 = vmatpush1.msra.mxu0 0.0
    %1061 = vmatprep.subr.mxu0 0.0
    %1062 = vmatpush1.msra.mxu0 0.0
    %1063 = vmatprep.subr.mxu0 0.0
    %1064 = vmatpush1.msra.mxu0 0.0
    %1065 = vmatprep.subr.mxu0 0.0
    %1066 = vmatpush1.msra.mxu0 0.0
    %1067 = vmatprep.subr.mxu0 0.0
    %1068 = vmatpush1.msra.mxu0 0.0
    %1069 = vmatprep.subr.mxu0 0.0
    %1070 = vmatpush1.msra.mxu0 0.0
    %1071 = vmatprep.subr.mxu0 0.0
    %1072 = vmatpush1.msra.mxu0 0.0
    %1073 = vmatprep.subr.mxu0 0.0
    %1074 = vmatpush1.msra.mxu0 0.0
    %1075 = vmatprep.subr.mxu0 0.0
    %1076 = vmatpush1.msra.mxu0 0.0
    %1077 = vmatprep.subr.mxu0 0.0
    %1078 = vmatpush1.msra.mxu0 0.0
    %1079 = vmatprep.subr.mxu0 0.0
    %1080 = vmatpush1.msra.mxu0 0.0
    %1081 = vmatprep.subr.mxu0 0.0
    %1082 = vmatpush1.msra.mxu0 0.0
    %1083 = vmatprep.mubr.f32.mxu0 0.0
    %1084 = vmatmul.mubr.f32.gmra.mrb[0].mxu0 %v690
    %v1085 = vpop.f32.mrb[0].mxu0
    %v1086 = vadd.f32 0.0, %v1085
    %v1087 = vpop.f32.mrb[0].mxu0
    %1088 = vdwg.mxu0
    %v1090 = vrot.slane %v1086, 4
    %v1092 = vadd.f32 %v233, %v1090
    %v1093 = vtanh.pop %v1092
    %v1094 = vmul.f32 %v1093, %v125
    %v1095 = vadd.f32 %v1094, %v126
    %v1097 = vrot.slane %v679, 6
    %v1099 = vmul.f32 %v1095, %v1097
    %1101 = vrot.lane.b32.xlu0 %v1095, 64
    %v1102 = vpop.permute.xlu0 %1101
    %v1104 = vmul.f32 %v1095, %v1102
    %1106 = vrot.lane.b32.xlu0 %v1104, 32
    %v1107 = vpop.permute.xlu0 %1106
    %v1109 = vadd.f32 %v1099, %v1107
    %v1110 = vtanh.pop %v1109
    %1112 = vrot.lane.b32.xlu0 %v1110, 64
    %v1113 = vpop.permute.xlu0 %1112
    %v1115 = vmul.f32 %v1095, %v1113
    %v1117 = vrot.slane %v1115, 4
    %1118 = vrot.lane.b32.xlu0 %v1117, 32
    %v1119 = vpop.permute.xlu0 %1118
    %v1120 = vsel %vm241, %v1119, 0
    %1122 = vmatprep.subr.mxu0 0.0
    %1123 = vmatpush1.msra.mxu0 %v139
    %1124 = vmatprep.subr.mxu0 0.0
    %1125 = vmatpush1.msra.mxu0 %v140
    %1126 = vmatprep.subr.mxu0 0.0
    %1127 = vmatpush1.msra.mxu0 %v141
    %1128 = vmatprep.subr.mxu0 0.0
    %1129 = vmatpush1.msra.mxu0 %v142
    %1130 = vmatprep.subr.mxu0 0.0
    %1131 = vmatpush1.msra.mxu0 0.0
    %1132 = vmatprep.subr.mxu0 0.0
    %1133 = vmatpush1.msra.mxu0 0.0
    %1134 = vmatprep.subr.mxu0 0.0
    %1135 = vmatpush1.msra.mxu0 0.0
    %1136 = vmatprep.subr.mxu0 0.0
    %1137 = vmatpush1.msra.mxu0 0.0
    %1138 = vmatprep.subr.mxu0 0.0
    %1139 = vmatpush1.msra.mxu0 0.0
    %1140 = vmatprep.subr.mxu0 0.0
    %1141 = vmatpush1.msra.mxu0 0.0
    %1142 = vmatprep.subr.mxu0 0.0
    %1143 = vmatpush1.msra.mxu0 0.0
    %1144 = vmatprep.subr.mxu0 0.0
    %1145 = vmatpush1.msra.mxu0 0.0
    %1146 = vmatprep.subr.mxu0 0.0
    %1147 = vmatpush1.msra.mxu0 0.0
    %1148 = vmatprep.subr.mxu0 0.0
    %1149 = vmatpush1.msra.mxu0 0.0
    %1150 = vmatprep.subr.mxu0 0.0
    %1151 = vmatpush1.msra.mxu0 0.0
    %1152 = vmatprep.subr.mxu0 0.0
    %1153 = vmatpush1.msra.mxu0 0.0
    %1154 = vmatprep.subr.mxu0 0.0
    %1155 = vmatpush1.msra.mxu0 0.0
    %1156 = vmatprep.subr.mxu0 0.0
    %1157 = vmatpush1.msra.mxu0 0.0
    %1158 = vmatprep.subr.mxu0 0.0
    %1159 = vmatpush1.msra.mxu0 0.0
    %1160 = vmatprep.subr.mxu0 0.0
    %1161 = vmatpush1.msra.mxu0 0.0
    %1162 = vmatprep.subr.mxu0 0.0
    %1163 = vmatpush1.msra.mxu0 0.0
    %1164 = vmatprep.subr.mxu0 0.0
    %1165 = vmatpush1.msra.mxu0 0.0
    %1166 = vmatprep.subr.mxu0 0.0
    %1167 = vmatpush1.msra.mxu0 0.0
    %1168 = vmatprep.subr.mxu0 0.0
    %1169 = vmatpush1.msra.mxu0 0.0
    %1170 = vmatprep.subr.mxu0 0.0
    %1171 = vmatpush1.msra.mxu0 0.0
    %1172 = vmatprep.subr.mxu0 0.0
    %1173 = vmatpush1.msra.mxu0 0.0
    %1174 = vmatprep.subr.mxu0 0.0
    %1175 = vmatpush1.msra.mxu0 0.0
    %1176 = vmatprep.subr.mxu0 0.0
    %1177 = vmatpush1.msra.mxu0 0.0
    %1178 = vmatprep.subr.mxu0 0.0
    %1179 = vmatpush1.msra.mxu0 0.0
    %1180 = vmatprep.subr.mxu0 0.0
    %1181 = vmatpush1.msra.mxu0 0.0
    %1182 = vmatprep.subr.mxu0 0.0
    %1183 = vmatpush1.msra.mxu0 0.0
    %1184 = vmatprep.subr.mxu0 0.0
    %1185 = vmatpush1.msra.mxu0 0.0
    %1186 = vmatprep.mubr.f32.mxu0 0.0
    %1187 = vmatmul.mubr.f32.gmra.mrb[0].mxu0 %v1120
    %v1188 = vpop.f32.mrb[0].mxu0
    %v1189 = vadd.f32 %v340, %v1188
    %v1190 = vpop.f32.mrb[0].mxu0
    %1191 = vdwg.mxu0
    %1193 = vrot.lane.b32.xlu0 %v852, 32
    %v1194 = vpop.permute.xlu0 %1193
    %v1195 = vsel %vm241, %v1194, 0
    %1197 = vmatprep.subr.mxu0 0.0
    %1198 = vmatpush1.msra.mxu0 %v135
    %1199 = vmatprep.subr.mxu0 0.0
    %1200 = vmatpush1.msra.mxu0 %v136
    %1201 = vmatprep.subr.mxu0 0.0
    %1202 = vmatpush1.msra.mxu0 %v137
    %1203 = vmatprep.subr.mxu0 0.0
    %1204 = vmatpush1.msra.mxu0 %v138
    %1205 = vmatprep.subr.mxu0 0.0
    %1206 = vmatpush1.msra.mxu0 0.0
    %1207 = vmatprep.subr.mxu0 0.0
    %1208 = vmatpush1.msra.mxu0 0.0
    %1209 = vmatprep.subr.mxu0 0.0
    %1210 = vmatpush1.msra.mxu0 0.0
    %1211 = vmatprep.subr.mxu0 0.0
    %1212 = vmatpush1.msra.mxu0 0.0
    %1213 = vmatprep.subr.mxu0 0.0
    %1214 = vmatpush1.msra.mxu0 0.0
    %1215 = vmatprep.subr.mxu0 0.0
    %1216 = vmatpush1.msra.mxu0 0.0
    %1217 = vmatprep.subr.mxu0 0.0
    %1218 = vmatpush1.msra.mxu0 0.0
    %1219 = vmatprep.subr.mxu0 0.0
    %1220 = vmatpush1.msra.mxu0 0.0
    %1221 = vmatprep.subr.mxu0 0.0
    %1222 = vmatpush1.msra.mxu0 0.0
    %1223 = vmatprep.subr.mxu0 0.0
    %1224 = vmatpush1.msra.mxu0 0.0
    %1225 = vmatprep.subr.mxu0 0.0
    %1226 = vmatpush1.msra.mxu0 0.0
    %1227 = vmatprep.subr.mxu0 0.0
    %1228 = vmatpush1.msra.mxu0 0.0
    %1229 = vmatprep.subr.mxu0 0.0
    %1230 = vmatpush1.msra.mxu0 0.0
    %1231 = vmatprep.subr.mxu0 0.0
    %1232 = vmatpush1.msra.mxu0 0.0
    %1233 = vmatprep.subr.mxu0 0.0
    %1234 = vmatpush1.msra.mxu0 0.0
    %1235 = vmatprep.subr.mxu0 0.0
    %1236 = vmatpush1.msra.mxu0 0.0
    %1237 = vmatprep.subr.mxu0 0.0
    %1238 = vmatpush1.msra.mxu0 0.0
    %1239 = vmatprep.subr.mxu0 0.0
    %1240 = vmatpush1.msra.mxu0 0.0
    %1241 = vmatprep.subr.mxu0 0.0
    %1242 = vmatpush1.msra.mxu0 0.0
    %1243 = vmatprep.subr.mxu0 0.0
    %1244 = vmatpush1.msra.mxu0 0.0
    %1245 = vmatprep.subr.mxu0 0.0
    %1246 = vmatpush1.msra.mxu0 0.0
    %1247 = vmatprep.subr.mxu0 0.0
    %1248 = vmatpush1.msra.mxu0 0.0
    %1249 = vmatprep.subr.mxu0 0.0
    %1250 = vmatpush1.msra.mxu0 0.0
    %1251 = vmatprep.subr.mxu0 0.0
    %1252 = vmatpush1.msra.mxu0 0.0
    %1253 = vmatprep.subr.mxu0 0.0
    %1254 = vmatpush1.msra.mxu0 0.0
    %1255 = vmatprep.subr.mxu0 0.0
    %1256 = vmatpush1.msra.mxu0 0.0
    %1257 = vmatprep.subr.mxu0 0.0
    %1258 = vmatpush1.msra.mxu0 0.0
    %1259 = vmatprep.subr.mxu0 0.0
    %1260 = vmatpush1.msra.mxu0 0.0
    %1261 = vmatprep.mubr.f32.mxu0 0.0
    %1262 = vmatmul.mubr.f32.gmra.mrb[0].mxu0 %v1195
    %v1263 = vpop.f32.mrb[0].mxu0
    %v1264 = vadd.f32 0.0, %v1263
    %v1265 = vpop.f32.mrb[0].mxu0
    %1266 = vdwg.mxu0
    %v1267 = vadd.f32 %v1016, %v1264
    %v1268 = vtanh.pop %v1267
    %v1269 = vmul.f32 %v1268, %v125
    %v1270 = vadd.f32 %v1269, %v126
    %v1271 = vmul.f32 %v1270, %v846
    %1273 = vrot.lane.b32.xlu0 %v1270, 64
    %v1274 = vpop.permute.xlu0 %1273
    %v1276 = vmul.f32 %v1270, %v1274
    %1278 = vrot.lane.b32.xlu0 %v1276, 32
    %v1279 = vpop.permute.xlu0 %1278
    %v1281 = vadd.f32 %v1271, %v1279
    %v1282 = vtanh.pop %v1281
    %1284 = vrot.lane.b32.xlu0 %v1282, 64
    %v1285 = vpop.permute.xlu0 %1284
    %v1287 = vmul.f32 %v1270, %v1285
    %1288 = vmatprep.subr.mxu0 0.0
    %1289 = vmatpush1.msra.mxu0 %v131
    %1290 = vmatprep.subr.mxu0 0.0
    %1291 = vmatpush1.msra.mxu0 %v132
    %1292 = vmatprep.subr.mxu0 0.0
    %1293 = vmatpush1.msra.mxu0 %v133
    %1294 = vmatprep.subr.mxu0 0.0
    %1295 = vmatpush1.msra.mxu0 %v134
    %1296 = vmatprep.subr.mxu0 0.0
    %1297 = vmatpush1.msra.mxu0 0.0
    %1298 = vmatprep.subr.mxu0 0.0
    %1299 = vmatpush1.msra.mxu0 0.0
    %1300 = vmatprep.subr.mxu0 0.0
    %1301 = vmatpush1.msra.mxu0 0.0
    %1302 = vmatprep.subr.mxu0 0.0
    %1303 = vmatpush1.msra.mxu0 0.0
    %1304 = vmatprep.subr.mxu0 0.0
    %1305 = vmatpush1.msra.mxu0 0.0
    %1306 = vmatprep.subr.mxu0 0.0
    %1307 = vmatpush1.msra.mxu0 0.0
    %1308 = vmatprep.subr.mxu0 0.0
    %1309 = vmatpush1.msra.mxu0 0.0
    %1310 = vmatprep.subr.mxu0 0.0
    %1311 = vmatpush1.msra.mxu0 0.0
    %1312 = vmatprep.subr.mxu0 0.0
    %1313 = vmatpush1.msra.mxu0 0.0
    %1314 = vmatprep.subr.mxu0 0.0
    %1315 = vmatpush1.msra.mxu0 0.0
    %1316 = vmatprep.subr.mxu0 0.0
    %1317 = vmatpush1.msra.mxu0 0.0
    %1318 = vmatprep.subr.mxu0 0.0
    %1319 = vmatpush1.msra.mxu0 0.0
    %1320 = vmatprep.subr.mxu0 0.0
    %1321 = vmatpush1.msra.mxu0 0.0
    %1322 = vmatprep.subr.mxu0 0.0
    %1323 = vmatpush1.msra.mxu0 0.0
    %1324 = vmatprep.subr.mxu0 0.0
    %1325 = vmatpush1.msra.mxu0 0.0
    %1326 = vmatprep.subr.mxu0 0.0
    %1327 = vmatpush1.msra.mxu0 0.0
    %1328 = vmatprep.subr.mxu0 0.0
    %1329 = vmatpush1.msra.mxu0 0.0
    %1330 = vmatprep.subr.mxu0 0.0
    %1331 = vmatpush1.msra.mxu0 0.0
    %1332 = vmatprep.subr.mxu0 0.0
    %1333 = vmatpush1.msra.mxu0 0.0
    %1334 = vmatprep.subr.mxu0 0.0
    %1335 = vmatpush1.msra.mxu0 0.0
    %1336 = vmatprep.subr.mxu0 0.0
    %1337 = vmatpush1.msra.mxu0 0.0
    %1338 = vmatprep.subr.mxu0 0.0
    %1339 = vmatpush1.msra.mxu0 0.0
    %1340 = vmatprep.subr.mxu0 0.0
    %1341 = vmatpush1.msra.mxu0 0.0
    %1342 = vmatprep.subr.mxu0 0.0
    %1343 = vmatpush1.msra.mxu0 0.0
    %1344 = vmatprep.subr.mxu0 0.0
    %1345 = vmatpush1.msra.mxu0 0.0
    %1346 = vmatprep.subr.mxu0 0.0
    %1347 = vmatpush1.msra.mxu0 0.0
    %1348 = vmatprep.subr.mxu0 0.0
    %1349 = vmatpush1.msra.mxu0 0.0
    %1350 = vmatprep.subr.mxu0 0.0
    %1351 = vmatpush1.msra.mxu0 0.0
    %1352 = vmatprep.mubr.f32.mxu0 0.0
    %1353 = vmatmul.mubr.f32.gmra.mrb[0].mxu0 %v947
    %v1354 = vpop.f32.mrb[0].mxu0
    %v1355 = vadd.f32 0.0, %v1354
    %v1356 = vpop.f32.mrb[0].mxu0
    %1357 = vdwg.mxu0
    %v1358 = vadd.f32 %v1189, %v1355
    %v1359 = vtanh.pop %v1358
    %v1360 = vmul.f32 %v1359, %v125
    %v1361 = vadd.f32 %v1360, %v126
    %v1362 = vmul.f32 %v1361, %v937
    %1364 = vrot.lane.b32.xlu0 %v1361, 64
    %v1365 = vpop.permute.xlu0 %1364
    %v1367 = vmul.f32 %v1361, %v1365
    %1369 = vrot.lane.b32.xlu0 %v1367, 32
    %v1370 = vpop.permute.xlu0 %1369
    %v1372 = vadd.f32 %v1362, %v1370
    %v1373 = vtanh.pop %v1372
    %1375 = vrot.lane.b32.xlu0 %v1373, 64
    %v1376 = vpop.permute.xlu0 %1375
    %v1378 = vmul.f32 %v1361, %v1376
    %1380 = vrot.lane.b32.xlu0 %v1378, 32
    %v1381 = vpop.permute.xlu0 %1380
    %v1382 = vsel %vm241, %v1381, 0
    %1384 = vmatprep.subr.mxu0 0.0
    %1385 = vmatpush1.msra.mxu0 %v143
    %1386 = vmatprep.subr.mxu0 0.0
    %1387 = vmatpush1.msra.mxu0 %v144
    %1388 = vmatprep.subr.mxu0 0.0
    %1389 = vmatpush1.msra.mxu0 %v145
    %1390 = vmatprep.subr.mxu0 0.0
    %1391 = vmatpush1.msra.mxu0 %v146
    %1392 = vmatprep.subr.mxu0 0.0
    %1393 = vmatpush1.msra.mxu0 0.0
    %1394 = vmatprep.subr.mxu0 0.0
    %1395 = vmatpush1.msra.mxu0 0.0
    %1396 = vmatprep.subr.mxu0 0.0
    %1397 = vmatpush1.msra.mxu0 0.0
    %1398 = vmatprep.subr.mxu0 0.0
    %1399 = vmatpush1.msra.mxu0 0.0
    %1400 = vmatprep.subr.mxu0 0.0
    %1401 = vmatpush1.msra.mxu0 0.0
    %1402 = vmatprep.subr.mxu0 0.0
    %1403 = vmatpush1.msra.mxu0 0.0
    %1404 = vmatprep.subr.mxu0 0.0
    %1405 = vmatpush1.msra.mxu0 0.0
    %1406 = vmatprep.subr.mxu0 0.0
    %1407 = vmatpush1.msra.mxu0 0.0
    %1408 = vmatprep.subr.mxu0 0.0
    %1409 = vmatpush1.msra.mxu0 0.0
    %1410 = vmatprep.subr.mxu0 0.0
    %1411 = vmatpush1.msra.mxu0 0.0
    %1412 = vmatprep.subr.mxu0 0.0
    %1413 = vmatpush1.msra.mxu0 0.0
    %1414 = vmatprep.subr.mxu0 0.0
    %1415 = vmatpush1.msra.mxu0 0.0
    %1416 = vmatprep.subr.mxu0 0.0
    %1417 = vmatpush1.msra.mxu0 0.0
    %1418 = vmatprep.subr.mxu0 0.0
    %1419 = vmatpush1.msra.mxu0 0.0
    %1420 = vmatprep.subr.mxu0 0.0
    %1421 = vmatpush1.msra.mxu0 0.0
    %1422 = vmatprep.subr.mxu0 0.0
    %1423 = vmatpush1.msra.mxu0 0.0
    %1424 = vmatprep.subr.mxu0 0.0
    %1425 = vmatpush1.msra.mxu0 0.0
    %1426 = vmatprep.subr.mxu0 0.0
    %1427 = vmatpush1.msra.mxu0 0.0
    %1428 = vmatprep.subr.mxu0 0.0
    %1429 = vmatpush1.msra.mxu0 0.0
    %1430 = vmatprep.subr.mxu0 0.0
    %1431 = vmatpush1.msra.mxu0 0.0
    %1432 = vmatprep.subr.mxu0 0.0
    %1433 = vmatpush1.msra.mxu0 0.0
    %1434 = vmatprep.subr.mxu0 0.0
    %1435 = vmatpush1.msra.mxu0 0.0
    %1436 = vmatprep.subr.mxu0 0.0
    %1437 = vmatpush1.msra.mxu0 0.0
    %1438 = vmatprep.subr.mxu0 0.0
    %1439 = vmatpush1.msra.mxu0 0.0
    %1440 = vmatprep.subr.mxu0 0.0
    %1441 = vmatpush1.msra.mxu0 0.0
    %1442 = vmatprep.subr.mxu0 0.0
    %1443 = vmatpush1.msra.mxu0 0.0
    %1444 = vmatprep.subr.mxu0 0.0
    %1445 = vmatpush1.msra.mxu0 0.0
    %1446 = vmatprep.subr.mxu0 0.0
    %1447 = vmatpush1.msra.mxu0 0.0
    %1448 = vmatprep.mubr.f32.mxu0 0.0
    %1449 = vmatmul.mubr.f32.gmra.mrb[0].mxu0 %v1382
    %v1450 = vpop.f32.mrb[0].mxu0
    %v1451 = vadd.f32 %v512, %v1450
    %v1452 = vpop.f32.mrb[0].mxu0
    %1453 = vdwg.mxu0
    %1454 = vmatprep.subr.mxu0 0.0
    %1455 = vmatpush1.msra.mxu0 %v127
    %1456 = vmatprep.subr.mxu0 0.0
    %1457 = vmatpush1.msra.mxu0 %v128
    %1458 = vmatprep.subr.mxu0 0.0
    %1459 = vmatpush1.msra.mxu0 %v129
    %1460 = vmatprep.subr.mxu0 0.0
    %1461 = vmatpush1.msra.mxu0 %v130
    %1462 = vmatprep.subr.mxu0 0.0
    %1463 = vmatpush1.msra.mxu0 0.0
    %1464 = vmatprep.subr.mxu0 0.0
    %1465 = vmatpush1.msra.mxu0 0.0
    %1466 = vmatprep.subr.mxu0 0.0
    %1467 = vmatpush1.msra.mxu0 0.0
    %1468 = vmatprep.subr.mxu0 0.0
    %1469 = vmatpush1.msra.mxu0 0.0
    %1470 = vmatprep.subr.mxu0 0.0
    %1471 = vmatpush1.msra.mxu0 0.0
    %1472 = vmatprep.subr.mxu0 0.0
    %1473 = vmatpush1.msra.mxu0 0.0
    %1474 = vmatprep.subr.mxu0 0.0
    %1475 = vmatpush1.msra.mxu0 0.0
    %1476 = vmatprep.subr.mxu0 0.0
    %1477 = vmatpush1.msra.mxu0 0.0
    %1478 = vmatprep.subr.mxu0 0.0
    %1479 = vmatpush1.msra.mxu0 0.0
    %1480 = vmatprep.subr.mxu0 0.0
    %1481 = vmatpush1.msra.mxu0 0.0
    %1482 = vmatprep.subr.mxu0 0.0
    %1483 = vmatpush1.msra.mxu0 0.0
    %1484 = vmatprep.subr.mxu0 0.0
    %1485 = vmatpush1.msra.mxu0 0.0
    %1486 = vmatprep.subr.mxu0 0.0
    %1487 = vmatpush1.msra.mxu0 0.0
    %1488 = vmatprep.subr.mxu0 0.0
    %1489 = vmatpush1.msra.mxu0 0.0
    %1490 = vmatprep.subr.mxu0 0.0
    %1491 = vmatpush1.msra.mxu0 0.0
    %1492 = vmatprep.subr.mxu0 0.0
    %1493 = vmatpush1.msra.mxu0 0.0
    %1494 = vmatprep.subr.mxu0 0.0
    %1495 = vmatpush1.msra.mxu0 0.0
    %1496 = vmatprep.subr.mxu0 0.0
    %1497 = vmatpush1.msra.mxu0 0.0
    %1498 = vmatprep.subr.mxu0 0.0
    %1499 = vmatpush1.msra.mxu0 0.0
    %1500 = vmatprep.subr.mxu0 0.0
    %1501 = vmatpush1.msra.mxu0 0.0
    %1502 = vmatprep.subr.mxu0 0.0
    %1503 = vmatpush1.msra.mxu0 0.0
    %1504 = vmatprep.subr.mxu0 0.0
    %1505 = vmatpush1.msra.mxu0 0.0
    %1506 = vmatprep.subr.mxu0 0.0
    %1507 = vmatpush1.msra.mxu0 0.0
    %1508 = vmatprep.subr.mxu0 0.0
    %1509 = vmatpush1.msra.mxu0 0.0
    %1510 = vmatprep.subr.mxu0 0.0
    %1511 = vmatpush1.msra.mxu0 0.0
    %1512 = vmatprep.subr.mxu0 0.0
    %1513 = vmatpush1.msra.mxu0 0.0
    %1514 = vmatprep.subr.mxu0 0.0
    %1515 = vmatpush1.msra.mxu0 0.0
    %1516 = vmatprep.subr.mxu0 0.0
    %1517 = vmatpush1.msra.mxu0 0.0
    %1518 = vmatprep.mubr.f32.mxu0 0.0
    %1519 = vmatmul.mubr.f32.gmra.mrb[0].mxu0 %v1120
    %v1520 = vpop.f32.mrb[0].mxu0
    %v1521 = vadd.f32 0.0, %v1520
    %v1522 = vpop.f32.mrb[0].mxu0
    %1523 = vdwg.mxu0
    %v1525 = vrot.slane %v1521, 2
    %v1527 = vadd.f32 %v233, %v1525
    %v1528 = vtanh.pop %v1527
    %v1529 = vmul.f32 %v1528, %v125
    %v1530 = vadd.f32 %v1529, %v126
    %v1532 = vrot.slane %v1109, 6
    %v1534 = vmul.f32 %v1530, %v1532
    %1536 = vrot.lane.b32.xlu0 %v1530, 64
    %v1537 = vpop.permute.xlu0 %1536
    %v1539 = vmul.f32 %v1530, %v1537
    %1541 = vrot.lane.b32.xlu0 %v1539, 32
    %v1542 = vpop.permute.xlu0 %1541
    %v1544 = vadd.f32 %v1534, %v1542
    %v1545 = vtanh.pop %v1544
    %1547 = vrot.lane.b32.xlu0 %v1545, 64
    %v1548 = vpop.permute.xlu0 %1547
    %v1550 = vmul.f32 %v1530, %v1548
    %v1552 = vrot.slane %v1550, 6
    %1553 = vrot.lane.b32.xlu0 %v1552, 32
    %v1554 = vpop.permute.xlu0 %1553
    %v1555 = vsel %vm241, %v1554, 0
    %1557 = vmatprep.subr.mxu0 0.0
    %1558 = vmatpush1.msra.mxu0 %v139
    %1559 = vmatprep.subr.mxu0 0.0
    %1560 = vmatpush1.msra.mxu0 %v140
    %1561 = vmatprep.subr.mxu0 0.0
    %1562 = vmatpush1.msra.mxu0 %v141
    %1563 = vmatprep.subr.mxu0 0.0
    %1564 = vmatpush1.msra.mxu0 %v142
    %1565 = vmatprep.subr.mxu0 0.0
    %1566 = vmatpush1.msra.mxu0 0.0
    %1567 = vmatprep.subr.mxu0 0.0
    %1568 = vmatpush1.msra.mxu0 0.0
    %1569 = vmatprep.subr.mxu0 0.0
    %1570 = vmatpush1.msra.mxu0 0.0
    %1571 = vmatprep.subr.mxu0 0.0
    %1572 = vmatpush1.msra.mxu0 0.0
    %1573 = vmatprep.subr.mxu0 0.0
    %1574 = vmatpush1.msra.mxu0 0.0
    %1575 = vmatprep.subr.mxu0 0.0
    %1576 = vmatpush1.msra.mxu0 0.0
    %1577 = vmatprep.subr.mxu0 0.0
    %1578 = vmatpush1.msra.mxu0 0.0
    %1579 = vmatprep.subr.mxu0 0.0
    %1580 = vmatpush1.msra.mxu0 0.0
    %1581 = vmatprep.subr.mxu0 0.0
    %1582 = vmatpush1.msra.mxu0 0.0
    %1583 = vmatprep.subr.mxu0 0.0
    %1584 = vmatpush1.msra.mxu0 0.0
    %1585 = vmatprep.subr.mxu0 0.0
    %1586 = vmatpush1.msra.mxu0 0.0
    %1587 = vmatprep.subr.mxu0 0.0
    %1588 = vmatpush1.msra.mxu0 0.0
    %1589 = vmatprep.subr.mxu0 0.0
    %1590 = vmatpush1.msra.mxu0 0.0
    %1591 = vmatprep.subr.mxu0 0.0
    %1592 = vmatpush1.msra.mxu0 0.0
    %1593 = vmatprep.subr.mxu0 0.0
    %1594 = vmatpush1.msra.mxu0 0.0
    %1595 = vmatprep.subr.mxu0 0.0
    %1596 = vmatpush1.msra.mxu0 0.0
    %1597 = vmatprep.subr.mxu0 0.0
    %1598 = vmatpush1.msra.mxu0 0.0
    %1599 = vmatprep.subr.mxu0 0.0
    %1600 = vmatpush1.msra.mxu0 0.0
    %1601 = vmatprep.subr.mxu0 0.0
    %1602 = vmatpush1.msra.mxu0 0.0
    %1603 = vmatprep.subr.mxu0 0.0
    %1604 = vmatpush1.msra.mxu0 0.0
    %1605 = vmatprep.subr.mxu0 0.0
    %1606 = vmatpush1.msra.mxu0 0.0
    %1607 = vmatprep.subr.mxu0 0.0
    %1608 = vmatpush1.msra.mxu0 0.0
    %1609 = vmatprep.subr.mxu0 0.0
    %1610 = vmatpush1.msra.mxu0 0.0
    %1611 = vmatprep.subr.mxu0 0.0
    %1612 = vmatpush1.msra.mxu0 0.0
    %1613 = vmatprep.subr.mxu0 0.0
    %1614 = vmatpush1.msra.mxu0 0.0
    %1615 = vmatprep.subr.mxu0 0.0
    %1616 = vmatpush1.msra.mxu0 0.0
    %1617 = vmatprep.subr.mxu0 0.0
    %1618 = vmatpush1.msra.mxu0 0.0
    %1619 = vmatprep.subr.mxu0 0.0
    %1620 = vmatpush1.msra.mxu0 0.0
    %1621 = vmatprep.mubr.f32.mxu0 0.0
    %1622 = vmatmul.mubr.f32.gmra.mrb[0].mxu0 %v1555
    %v1623 = vpop.f32.mrb[0].mxu0
    %v1624 = vadd.f32 %v340, %v1623
    %v1625 = vpop.f32.mrb[0].mxu0
    %1626 = vdwg.mxu0
    %1628 = vrot.lane.b32.xlu0 %v1287, 32
    %v1629 = vpop.permute.xlu0 %1628
    %v1630 = vsel %vm241, %v1629, 0
    %1632 = vmatprep.subr.mxu0 0.0
    %1633 = vmatpush1.msra.mxu0 %v135
    %1634 = vmatprep.subr.mxu0 0.0
    %1635 = vmatpush1.msra.mxu0 %v136
    %1636 = vmatprep.subr.mxu0 0.0
    %1637 = vmatpush1.msra.mxu0 %v137
    %1638 = vmatprep.subr.mxu0 0.0
    %1639 = vmatpush1.msra.mxu0 %v138
    %1640 = vmatprep.subr.mxu0 0.0
    %1641 = vmatpush1.msra.mxu0 0.0
    %1642 = vmatprep.subr.mxu0 0.0
    %1643 = vmatpush1.msra.mxu0 0.0
    %1644 = vmatprep.subr.mxu0 0.0
    %1645 = vmatpush1.msra.mxu0 0.0
    %1646 = vmatprep.subr.mxu0 0.0
    %1647 = vmatpush1.msra.mxu0 0.0
    %1648 = vmatprep.subr.mxu0 0.0
    %1649 = vmatpush1.msra.mxu0 0.0
    %1650 = vmatprep.subr.mxu0 0.0
    %1651 = vmatpush1.msra.mxu0 0.0
    %1652 = vmatprep.subr.mxu0 0.0
    %1653 = vmatpush1.msra.mxu0 0.0
    %1654 = vmatprep.subr.mxu0 0.0
    %1655 = vmatpush1.msra.mxu0 0.0
    %1656 = vmatprep.subr.mxu0 0.0
    %1657 = vmatpush1.msra.mxu0 0.0
    %1658 = vmatprep.subr.mxu0 0.0
    %1659 = vmatpush1.msra.mxu0 0.0
    %1660 = vmatprep.subr.mxu0 0.0
    %1661 = vmatpush1.msra.mxu0 0.0
    %1662 = vmatprep.subr.mxu0 0.0
    %1663 = vmatpush1.msra.mxu0 0.0
    %1664 = vmatprep.subr.mxu0 0.0
    %1665 = vmatpush1.msra.mxu0 0.0
    %1666 = vmatprep.subr.mxu0 0.0
    %1667 = vmatpush1.msra.mxu0 0.0
    %1668 = vmatprep.subr.mxu0 0.0
    %1669 = vmatpush1.msra.mxu0 0.0
    %1670 = vmatprep.subr.mxu0 0.0
    %1671 = vmatpush1.msra.mxu0 0.0
    %1672 = vmatprep.subr.mxu0 0.0
    %1673 = vmatpush1.msra.mxu0 0.0
    %1674 = vmatprep.subr.mxu0 0.0
    %1675 = vmatpush1.msra.mxu0 0.0
    %1676 = vmatprep.subr.mxu0 0.0
    %1677 = vmatpush1.msra.mxu0 0.0
    %1678 = vmatprep.subr.mxu0 0.0
    %1679 = vmatpush1.msra.mxu0 0.0
    %1680 = vmatprep.subr.mxu0 0.0
    %1681 = vmatpush1.msra.mxu0 0.0
    %1682 = vmatprep.subr.mxu0 0.0
    %1683 = vmatpush1.msra.mxu0 0.0
    %1684 = vmatprep.subr.mxu0 0.0
    %1685 = vmatpush1.msra.mxu0 0.0
    %1686 = vmatprep.subr.mxu0 0.0
    %1687 = vmatpush1.msra.mxu0 0.0
    %1688 = vmatprep.subr.mxu0 0.0
    %1689 = vmatpush1.msra.mxu0 0.0
    %1690 = vmatprep.subr.mxu0 0.0
    %1691 = vmatpush1.msra.mxu0 0.0
    %1692 = vmatprep.subr.mxu0 0.0
    %1693 = vmatpush1.msra.mxu0 0.0
    %1694 = vmatprep.subr.mxu0 0.0
    %1695 = vmatpush1.msra.mxu0 0.0
    %1696 = vmatprep.mubr.f32.mxu0 0.0
    %1697 = vmatmul.mubr.f32.gmra.mrb[0].mxu0 %v1630
    %v1698 = vpop.f32.mrb[0].mxu0
    %v1699 = vadd.f32 0.0, %v1698
    %v1700 = vpop.f32.mrb[0].mxu0
    %1701 = vdwg.mxu0
    %v1702 = vadd.f32 %v1451, %v1699
    %v1703 = vtanh.pop %v1702
    %v1704 = vmul.f32 %v1703, %v125
    %v1705 = vadd.f32 %v1704, %v126
    %v1706 = vmul.f32 %v1705, %v1281
    %1708 = vrot.lane.b32.xlu0 %v1705, 64
    %v1709 = vpop.permute.xlu0 %1708
    %v1711 = vmul.f32 %v1705, %v1709
    %1713 = vrot.lane.b32.xlu0 %v1711, 32
    %v1714 = vpop.permute.xlu0 %1713
    %v1716 = vadd.f32 %v1706, %v1714
    %v1717 = vtanh.pop %v1716
    %1719 = vrot.lane.b32.xlu0 %v1717, 64
    %v1720 = vpop.permute.xlu0 %1719
    %v1722 = vmul.f32 %v1705, %v1720
    %1723 = vmatprep.subr.mxu0 0.0
    %1724 = vmatpush1.msra.mxu0 %v131
    %1725 = vmatprep.subr.mxu0 0.0
    %1726 = vmatpush1.msra.mxu0 %v132
    %1727 = vmatprep.subr.mxu0 0.0
    %1728 = vmatpush1.msra.mxu0 %v133
    %1729 = vmatprep.subr.mxu0 0.0
    %1730 = vmatpush1.msra.mxu0 %v134
    %1731 = vmatprep.subr.mxu0 0.0
    %1732 = vmatpush1.msra.mxu0 0.0
    %1733 = vmatprep.subr.mxu0 0.0
    %1734 = vmatpush1.msra.mxu0 0.0
    %1735 = vmatprep.subr.mxu0 0.0
    %1736 = vmatpush1.msra.mxu0 0.0
    %1737 = vmatprep.subr.mxu0 0.0
    %1738 = vmatpush1.msra.mxu0 0.0
    %1739 = vmatprep.subr.mxu0 0.0
    %1740 = vmatpush1.msra.mxu0 0.0
    %1741 = vmatprep.subr.mxu0 0.0
    %1742 = vmatpush1.msra.mxu0 0.0
    %1743 = vmatprep.subr.mxu0 0.0
    %1744 = vmatpush1.msra.mxu0 0.0
    %1745 = vmatprep.subr.mxu0 0.0
    %1746 = vmatpush1.msra.mxu0 0.0
    %1747 = vmatprep.subr.mxu0 0.0
    %1748 = vmatpush1.msra.mxu0 0.0
    %1749 = vmatprep.subr.mxu0 0.0
    %1750 = vmatpush1.msra.mxu0 0.0
    %1751 = vmatprep.subr.mxu0 0.0
    %1752 = vmatpush1.msra.mxu0 0.0
    %1753 = vmatprep.subr.mxu0 0.0
    %1754 = vmatpush1.msra.mxu0 0.0
    %1755 = vmatprep.subr.mxu0 0.0
    %1756 = vmatpush1.msra.mxu0 0.0
    %1757 = vmatprep.subr.mxu0 0.0
    %1758 = vmatpush1.msra.mxu0 0.0
    %1759 = vmatprep.subr.mxu0 0.0
    %1760 = vmatpush1.msra.mxu0 0.0
    %1761 = vmatprep.subr.mxu0 0.0
    %1762 = vmatpush1.msra.mxu0 0.0
    %1763 = vmatprep.subr.mxu0 0.0
    %1764 = vmatpush1.msra.mxu0 0.0
    %1765 = vmatprep.subr.mxu0 0.0
    %1766 = vmatpush1.msra.mxu0 0.0
    %1767 = vmatprep.subr.mxu0 0.0
    %1768 = vmatpush1.msra.mxu0 0.0
    %1769 = vmatprep.subr.mxu0 0.0
    %1770 = vmatpush1.msra.mxu0 0.0
    %1771 = vmatprep.subr.mxu0 0.0
    %1772 = vmatpush1.msra.mxu0 0.0
    %1773 = vmatprep.subr.mxu0 0.0
    %1774 = vmatpush1.msra.mxu0 0.0
    %1775 = vmatprep.subr.mxu0 0.0
    %1776 = vmatpush1.msra.mxu0 0.0
    %1777 = vmatprep.subr.mxu0 0.0
    %1778 = vmatpush1.msra.mxu0 0.0
    %1779 = vmatprep.subr.mxu0 0.0
    %1780 = vmatpush1.msra.mxu0 0.0
    %1781 = vmatprep.subr.mxu0 0.0
    %1782 = vmatpush1.msra.mxu0 0.0
    %1783 = vmatprep.subr.mxu0 0.0
    %1784 = vmatpush1.msra.mxu0 0.0
    %1785 = vmatprep.subr.mxu0 0.0
    %1786 = vmatpush1.msra.mxu0 0.0
    %1787 = vmatprep.mubr.f32.mxu0 0.0
    %1788 = vmatmul.mubr.f32.gmra.mrb[0].mxu0 %v1382
    %v1789 = vpop.f32.mrb[0].mxu0
    %v1790 = vadd.f32 0.0, %v1789
    %v1791 = vpop.f32.mrb[0].mxu0
    %1792 = vdwg.mxu0
    %v1793 = vadd.f32 %v1624, %v1790
    %v1794 = vtanh.pop %v1793
    %v1795 = vmul.f32 %v1794, %v125
    %v1796 = vadd.f32 %v1795, %v126
    %v1797 = vmul.f32 %v1796, %v1372
    %1799 = vrot.lane.b32.xlu0 %v1796, 64
    %v1800 = vpop.permute.xlu0 %1799
    %v1802 = vmul.f32 %v1796, %v1800
    %1804 = vrot.lane.b32.xlu0 %v1802, 32
    %v1805 = vpop.permute.xlu0 %1804
    %v1807 = vadd.f32 %v1797, %v1805
    %v1808 = vtanh.pop %v1807
    %1810 = vrot.lane.b32.xlu0 %v1808, 64
    %v1811 = vpop.permute.xlu0 %1810
    %v1813 = vmul.f32 %v1796, %v1811
    %1815 = vrot.lane.b32.xlu0 %v1813, 32
    %v1816 = vpop.permute.xlu0 %1815
    %v1817 = vsel %vm241, %v1816, 0
    %1819 = vmatprep.subr.mxu0 0.0
    %1820 = vmatpush1.msra.mxu0 %v143
    %1821 = vmatprep.subr.mxu0 0.0
    %1822 = vmatpush1.msra.mxu0 %v144
    %1823 = vmatprep.subr.mxu0 0.0
    %1824 = vmatpush1.msra.mxu0 %v145
    %1825 = vmatprep.subr.mxu0 0.0
    %1826 = vmatpush1.msra.mxu0 %v146
    %1827 = vmatprep.subr.mxu0 0.0
    %1828 = vmatpush1.msra.mxu0 0.0
    %1829 = vmatprep.subr.mxu0 0.0
    %1830 = vmatpush1.msra.mxu0 0.0
    %1831 = vmatprep.subr.mxu0 0.0
    %1832 = vmatpush1.msra.mxu0 0.0
    %1833 = vmatprep.subr.mxu0 0.0
    %1834 = vmatpush1.msra.mxu0 0.0
    %1835 = vmatprep.subr.mxu0 0.0
    %1836 = vmatpush1.msra.mxu0 0.0
    %1837 = vmatprep.subr.mxu0 0.0
    %1838 = vmatpush1.msra.mxu0 0.0
    %1839 = vmatprep.subr.mxu0 0.0
    %1840 = vmatpush1.msra.mxu0 0.0
    %1841 = vmatprep.subr.mxu0 0.0
    %1842 = vmatpush1.msra.mxu0 0.0
    %1843 = vmatprep.subr.mxu0 0.0
    %1844 = vmatpush1.msra.mxu0 0.0
    %1845 = vmatprep.subr.mxu0 0.0
    %1846 = vmatpush1.msra.mxu0 0.0
    %1847 = vmatprep.subr.mxu0 0.0
    %1848 = vmatpush1.msra.mxu0 0.0
    %1849 = vmatprep.subr.mxu0 0.0
    %1850 = vmatpush1.msra.mxu0 0.0
    %1851 = vmatprep.subr.mxu0 0.0
    %1852 = vmatpush1.msra.mxu0 0.0
    %1853 = vmatprep.subr.mxu0 0.0
    %1854 = vmatpush1.msra.mxu0 0.0
    %1855 = vmatprep.subr.mxu0 0.0
    %1856 = vmatpush1.msra.mxu0 0.0
    %1857 = vmatprep.subr.mxu0 0.0
    %1858 = vmatpush1.msra.mxu0 0.0
    %1859 = vmatprep.subr.mxu0 0.0
    %1860 = vmatpush1.msra.mxu0 0.0
    %1861 = vmatprep.subr.mxu0 0.0
    %1862 = vmatpush1.msra.mxu0 0.0
    %1863 = vmatprep.subr.mxu0 0.0
    %1864 = vmatpush1.msra.mxu0 0.0
    %1865 = vmatprep.subr.mxu0 0.0
    %1866 = vmatpush1.msra.mxu0 0.0
    %1867 = vmatprep.subr.mxu0 0.0
    %1868 = vmatpush1.msra.mxu0 0.0
    %1869 = vmatprep.subr.mxu0 0.0
    %1870 = vmatpush1.msra.mxu0 0.0
    %1871 = vmatprep.subr.mxu0 0.0
    %1872 = vmatpush1.msra.mxu0 0.0
    %1873 = vmatprep.subr.mxu0 0.0
    %1874 = vmatpush1.msra.mxu0 0.0
    %1875 = vmatprep.subr.mxu0 0.0
    %1876 = vmatpush1.msra.mxu0 0.0
    %1877 = vmatprep.subr.mxu0 0.0
    %1878 = vmatpush1.msra.mxu0 0.0
    %1879 = vmatprep.subr.mxu0 0.0
    %1880 = vmatpush1.msra.mxu0 0.0
    %1881 = vmatprep.subr.mxu0 0.0
    %1882 = vmatpush1.msra.mxu0 0.0
    %1883 = vmatprep.mubr.f32.mxu0 0.0
    %1884 = vmatmul.mubr.f32.gmra.mrb[0].mxu0 %v1817
    %v1885 = vpop.f32.mrb[0].mxu0
    %v1886 = vadd.f32 %v512, %v1885
    %v1887 = vpop.f32.mrb[0].mxu0
    %1888 = vdwg.mxu0
    %1889 = vmatprep.subr.mxu0 0.0
    %1890 = vmatpush1.msra.mxu0 %v127
    %1891 = vmatprep.subr.mxu0 0.0
    %1892 = vmatpush1.msra.mxu0 %v128
    %1893 = vmatprep.subr.mxu0 0.0
    %1894 = vmatpush1.msra.mxu0 %v129
    %1895 = vmatprep.subr.mxu0 0.0
    %1896 = vmatpush1.msra.mxu0 %v130
    %1897 = vmatprep.subr.mxu0 0.0
    %1898 = vmatpush1.msra.mxu0 0.0
    %1899 = vmatprep.subr.mxu0 0.0
    %1900 = vmatpush1.msra.mxu0 0.0
    %1901 = vmatprep.subr.mxu0 0.0
    %1902 = vmatpush1.msra.mxu0 0.0
    %1903 = vmatprep.subr.mxu0 0.0
    %1904 = vmatpush1.msra.mxu0 0.0
    %1905 = vmatprep.subr.mxu0 0.0
    %1906 = vmatpush1.msra.mxu0 0.0
    %1907 = vmatprep.subr.mxu0 0.0
    %1908 = vmatpush1.msra.mxu0 0.0
    %1909 = vmatprep.subr.mxu0 0.0
    %1910 = vmatpush1.msra.mxu0 0.0
    %1911 = vmatprep.subr.mxu0 0.0
    %1912 = vmatpush1.msra.mxu0 0.0
    %1913 = vmatprep.subr.mxu0 0.0
    %1914 = vmatpush1.msra.mxu0 0.0
    %1915 = vmatprep.subr.mxu0 0.0
    %1916 = vmatpush1.msra.mxu0 0.0
    %1917 = vmatprep.subr.mxu0 0.0
    %1918 = vmatpush1.msra.mxu0 0.0
    %1919 = vmatprep.subr.mxu0 0.0
    %1920 = vmatpush1.msra.mxu0 0.0
    %1921 = vmatprep.subr.mxu0 0.0
    %1922 = vmatpush1.msra.mxu0 0.0
    %1923 = vmatprep.subr.mxu0 0.0
    %1924 = vmatpush1.msra.mxu0 0.0
    %1925 = vmatprep.subr.mxu0 0.0
    %1926 = vmatpush1.msra.mxu0 0.0
    %1927 = vmatprep.subr.mxu0 0.0
    %1928 = vmatpush1.msra.mxu0 0.0
    %1929 = vmatprep.subr.mxu0 0.0
    %1930 = vmatpush1.msra.mxu0 0.0
    %1931 = vmatprep.subr.mxu0 0.0
    %1932 = vmatpush1.msra.mxu0 0.0
    %1933 = vmatprep.subr.mxu0 0.0
    %1934 = vmatpush1.msra.mxu0 0.0
    %1935 = vmatprep.subr.mxu0 0.0
    %1936 = vmatpush1.msra.mxu0 0.0
    %1937 = vmatprep.subr.mxu0 0.0
    %1938 = vmatpush1.msra.mxu0 0.0
    %1939 = vmatprep.subr.mxu0 0.0
    %1940 = vmatpush1.msra.mxu0 0.0
    %1941 = vmatprep.subr.mxu0 0.0
    %1942 = vmatpush1.msra.mxu0 0.0
    %1943 = vmatprep.subr.mxu0 0.0
    %1944 = vmatpush1.msra.mxu0 0.0
    %1945 = vmatprep.subr.mxu0 0.0
    %1946 = vmatpush1.msra.mxu0 0.0
    %1947 = vmatprep.subr.mxu0 0.0
    %1948 = vmatpush1.msra.mxu0 0.0
    %1949 = vmatprep.subr.mxu0 0.0
    %1950 = vmatpush1.msra.mxu0 0.0
    %1951 = vmatprep.subr.mxu0 0.0
    %1952 = vmatpush1.msra.mxu0 0.0
    %1953 = vmatprep.mubr.f32.mxu0 0.0
    %1954 = vmatmul.mubr.f32.gmra.mrb[0].mxu0 %v1555
    %v1955 = vpop.f32.mrb[0].mxu0
    %v1956 = vadd.f32 0.0, %v1955
    %v1957 = vpop.f32.mrb[0].mxu0
    %1958 = vdwg.mxu0
    %v1959 = vadd.f32 %v238, %v1956
    %v1960 = vtanh.pop %v1959
    %v1961 = vmul.f32 %v1960, %v125
    %v1962 = vadd.f32 %v1961, %v126
    %v1964 = vrot.slane %v1544, 6
    %v1966 = vmul.f32 %v1962, %v1964
    %1968 = vrot.lane.b32.xlu0 %v1962, 64
    %v1969 = vpop.permute.xlu0 %1968
    %v1971 = vmul.f32 %v1962, %v1969
    %1973 = vrot.lane.b32.xlu0 %v1971, 32
    %v1974 = vpop.permute.xlu0 %1973
    %v1976 = vadd.f32 %v1966, %v1974
    %v1977 = vtanh.pop %v1976
    %1979 = vrot.lane.b32.xlu0 %v1977, 64
    %v1980 = vpop.permute.xlu0 %1979
    %v1982 = vmul.f32 %v1962, %v1980
    %1984 = vrot.lane.b32.xlu0 %v1982, 32
    %v1985 = vpop.permute.xlu0 %1984
    %v1986 = vsel %vm241, %v1985, 0
    %1988 = vmatprep.subr.mxu0 0.0
    %1989 = vmatpush1.msra.mxu0 %v139
    %1990 = vmatprep.subr.mxu0 0.0
    %1991 = vmatpush1.msra.mxu0 %v140
    %1992 = vmatprep.subr.mxu0 0.0
    %1993 = vmatpush1.msra.mxu0 %v141
    %1994 = vmatprep.subr.mxu0 0.0
    %1995 = vmatpush1.msra.mxu0 %v142
    %1996 = vmatprep.subr.mxu0 0.0
    %1997 = vmatpush1.msra.mxu0 0.0
    %1998 = vmatprep.subr.mxu0 0.0
    %1999 = vmatpush1.msra.mxu0 0.0
    %2000 = vmatprep.subr.mxu0 0.0
    %2001 = vmatpush1.msra.mxu0 0.0
    %2002 = vmatprep.subr.mxu0 0.0
    %2003 = vmatpush1.msra.mxu0 0.0
    %2004 = vmatprep.subr.mxu0 0.0
    %2005 = vmatpush1.msra.mxu0 0.0
    %2006 = vmatprep.subr.mxu0 0.0
    %2007 = vmatpush1.msra.mxu0 0.0
    %2008 = vmatprep.subr.mxu0 0.0
    %2009 = vmatpush1.msra.mxu0 0.0
    %2010 = vmatprep.subr.mxu0 0.0
    %2011 = vmatpush1.msra.mxu0 0.0
    %2012 = vmatprep.subr.mxu0 0.0
    %2013 = vmatpush1.msra.mxu0 0.0
    %2014 = vmatprep.subr.mxu0 0.0
    %2015 = vmatpush1.msra.mxu0 0.0
    %2016 = vmatprep.subr.mxu0 0.0
    %2017 = vmatpush1.msra.mxu0 0.0
    %2018 = vmatprep.subr.mxu0 0.0
    %2019 = vmatpush1.msra.mxu0 0.0
    %2020 = vmatprep.subr.mxu0 0.0
    %2021 = vmatpush1.msra.mxu0 0.0
    %2022 = vmatprep.subr.mxu0 0.0
    %2023 = vmatpush1.msra.mxu0 0.0
    %2024 = vmatprep.subr.mxu0 0.0
    %2025 = vmatpush1.msra.mxu0 0.0
    %2026 = vmatprep.subr.mxu0 0.0
    %2027 = vmatpush1.msra.mxu0 0.0
    %2028 = vmatprep.subr.mxu0 0.0
    %2029 = vmatpush1.msra.mxu0 0.0
    %2030 = vmatprep.subr.mxu0 0.0
    %2031 = vmatpush1.msra.mxu0 0.0
    %2032 = vmatprep.subr.mxu0 0.0
    %2033 = vmatpush1.msra.mxu0 0.0
    %2034 = vmatprep.subr.mxu0 0.0
    %2035 = vmatpush1.msra.mxu0 0.0
    %2036 = vmatprep.subr.mxu0 0.0
    %2037 = vmatpush1.msra.mxu0 0.0
    %2038 = vmatprep.subr.mxu0 0.0
    %2039 = vmatpush1.msra.mxu0 0.0
    %2040 = vmatprep.subr.mxu0 0.0
    %2041 = vmatpush1.msra.mxu0 0.0
    %2042 = vmatprep.subr.mxu0 0.0
    %2043 = vmatpush1.msra.mxu0 0.0
    %2044 = vmatprep.subr.mxu0 0.0
    %2045 = vmatpush1.msra.mxu0 0.0
    %2046 = vmatprep.subr.mxu0 0.0
    %2047 = vmatpush1.msra.mxu0 0.0
    %2048 = vmatprep.subr.mxu0 0.0
    %2049 = vmatpush1.msra.mxu0 0.0
    %2050 = vmatprep.subr.mxu0 0.0
    %2051 = vmatpush1.msra.mxu0 0.0
    %2052 = vmatprep.mubr.f32.mxu0 0.0
    %2053 = vmatmul.mubr.f32.gmra.mrb[0].mxu0 %v1986
    %v2054 = vpop.f32.mrb[0].mxu0
    %v2055 = vadd.f32 %v340, %v2054
    %v2056 = vpop.f32.mrb[0].mxu0
    %2057 = vdwg.mxu0
    %2059 = vrot.lane.b32.xlu0 %v1722, 32
    %v2060 = vpop.permute.xlu0 %2059
    %v2061 = vsel %vm241, %v2060, 0
    %2063 = vmatprep.subr.mxu0 0.0
    %2064 = vmatpush1.msra.mxu0 %v135
    %2065 = vmatprep.subr.mxu0 0.0
    %2066 = vmatpush1.msra.mxu0 %v136
    %2067 = vmatprep.subr.mxu0 0.0
    %2068 = vmatpush1.msra.mxu0 %v137
    %2069 = vmatprep.subr.mxu0 0.0
    %2070 = vmatpush1.msra.mxu0 %v138
    %2071 = vmatprep.subr.mxu0 0.0
    %2072 = vmatpush1.msra.mxu0 0.0
    %2073 = vmatprep.subr.mxu0 0.0
    %2074 = vmatpush1.msra.mxu0 0.0
    %2075 = vmatprep.subr.mxu0 0.0
    %2076 = vmatpush1.msra.mxu0 0.0
    %2077 = vmatprep.subr.mxu0 0.0
    %2078 = vmatpush1.msra.mxu0 0.0
    %2079 = vmatprep.subr.mxu0 0.0
    %2080 = vmatpush1.msra.mxu0 0.0
    %2081 = vmatprep.subr.mxu0 0.0
    %2082 = vmatpush1.msra.mxu0 0.0
    %2083 = vmatprep.subr.mxu0 0.0
    %2084 = vmatpush1.msra.mxu0 0.0
    %2085 = vmatprep.subr.mxu0 0.0
    %2086 = vmatpush1.msra.mxu0 0.0
    %2087 = vmatprep.subr.mxu0 0.0
    %2088 = vmatpush1.msra.mxu0 0.0
    %2089 = vmatprep.subr.mxu0 0.0
    %2090 = vmatpush1.msra.mxu0 0.0
    %2091 = vmatprep.subr.mxu0 0.0
    %2092 = vmatpush1.msra.mxu0 0.0
    %2093 = vmatprep.subr.mxu0 0.0
    %2094 = vmatpush1.msra.mxu0 0.0
    %2095 = vmatprep.subr.mxu0 0.0
    %2096 = vmatpush1.msra.mxu0 0.0
    %2097 = vmatprep.subr.mxu0 0.0
    %2098 = vmatpush1.msra.mxu0 0.0
    %2099 = vmatprep.subr.mxu0 0.0
    %2100 = vmatpush1.msra.mxu0 0.0
    %2101 = vmatprep.subr.mxu0 0.0
    %2102 = vmatpush1.msra.mxu0 0.0
    %2103 = vmatprep.subr.mxu0 0.0
    %2104 = vmatpush1.msra.mxu0 0.0
    %2105 = vmatprep.subr.mxu0 0.0
    %2106 = vmatpush1.msra.mxu0 0.0
    %2107 = vmatprep.subr.mxu0 0.0
    %2108 = vmatpush1.msra.mxu0 0.0
    %2109 = vmatprep.subr.mxu0 0.0
    %2110 = vmatpush1.msra.mxu0 0.0
    %2111 = vmatprep.subr.mxu0 0.0
    %2112 = vmatpush1.msra.mxu0 0.0
    %2113 = vmatprep.subr.mxu0 0.0
    %2114 = vmatpush1.msra.mxu0 0.0
    %2115 = vmatprep.subr.mxu0 0.0
    %2116 = vmatpush1.msra.mxu0 0.0
    %2117 = vmatprep.subr.mxu0 0.0
    %2118 = vmatpush1.msra.mxu0 0.0
    %2119 = vmatprep.subr.mxu0 0.0
    %2120 = vmatpush1.msra.mxu0 0.0
    %2121 = vmatprep.subr.mxu0 0.0
    %2122 = vmatpush1.msra.mxu0 0.0
    %2123 = vmatprep.subr.mxu0 0.0
    %2124 = vmatpush1.msra.mxu0 0.0
    %2125 = vmatprep.subr.mxu0 0.0
    %2126 = vmatpush1.msra.mxu0 0.0
    %2127 = vmatprep.mubr.f32.mxu0 0.0
    %2128 = vmatmul.mubr.f32.gmra.mrb[0].mxu0 %v2061
    %v2129 = vpop.f32.mrb[0].mxu0
    %v2130 = vadd.f32 0.0, %v2129
    %v2131 = vpop.f32.mrb[0].mxu0
    %2132 = vdwg.mxu0
    %v2133 = vadd.f32 %v1886, %v2130
    %v2134 = vtanh.pop %v2133
    %v2135 = vmul.f32 %v2134, %v125
    %v2136 = vadd.f32 %v2135, %v126
    %v2137 = vmul.f32 %v2136, %v1716
    %2139 = vrot.lane.b32.xlu0 %v2136, 64
    %v2140 = vpop.permute.xlu0 %2139
    %v2142 = vmul.f32 %v2136, %v2140
    %2144 = vrot.lane.b32.xlu0 %v2142, 32
    %v2145 = vpop.permute.xlu0 %2144
    %v2147 = vadd.f32 %v2137, %v2145
    %v2148 = vtanh.pop %v2147
    %2150 = vrot.lane.b32.xlu0 %v2148, 64
    %v2151 = vpop.permute.xlu0 %2150
    %v2153 = vmul.f32 %v2136, %v2151
    %2154 = vmatprep.subr.mxu0 0.0
    %2155 = vmatpush1.msra.mxu0 %v131
    %2156 = vmatprep.subr.mxu0 0.0
    %2157 = vmatpush1.msra.mxu0 %v132
    %2158 = vmatprep.subr.mxu0 0.0
    %2159 = vmatpush1.msra.mxu0 %v133
    %2160 = vmatprep.subr.mxu0 0.0
    %2161 = vmatpush1.msra.mxu0 %v134
    %2162 = vmatprep.subr.mxu0 0.0
    %2163 = vmatpush1.msra.mxu0 0.0
    %2164 = vmatprep.subr.mxu0 0.0
    %2165 = vmatpush1.msra.mxu0 0.0
    %2166 = vmatprep.subr.mxu0 0.0
    %2167 = vmatpush1.msra.mxu0 0.0
    %2168 = vmatprep.subr.mxu0 0.0
    %2169 = vmatpush1.msra.mxu0 0.0
    %2170 = vmatprep.subr.mxu0 0.0
    %2171 = vmatpush1.msra.mxu0 0.0
    %2172 = vmatprep.subr.mxu0 0.0
    %2173 = vmatpush1.msra.mxu0 0.0
    %2174 = vmatprep.subr.mxu0 0.0
    %2175 = vmatpush1.msra.mxu0 0.0
    %2176 = vmatprep.subr.mxu0 0.0
    %2177 = vmatpush1.msra.mxu0 0.0
    %2178 = vmatprep.subr.mxu0 0.0
    %2179 = vmatpush1.msra.mxu0 0.0
    %2180 = vmatprep.subr.mxu0 0.0
    %2181 = vmatpush1.msra.mxu0 0.0
    %2182 = vmatprep.subr.mxu0 0.0
    %2183 = vmatpush1.msra.mxu0 0.0
    %2184 = vmatprep.subr.mxu0 0.0
    %2185 = vmatpush1.msra.mxu0 0.0
    %2186 = vmatprep.subr.mxu0 0.0
    %2187 = vmatpush1.msra.mxu0 0.0
    %2188 = vmatprep.subr.mxu0 0.0
    %2189 = vmatpush1.msra.mxu0 0.0
    %2190 = vmatprep.subr.mxu0 0.0
    %2191 = vmatpush1.msra.mxu0 0.0
    %2192 = vmatprep.subr.mxu0 0.0
    %2193 = vmatpush1.msra.mxu0 0.0
    %2194 = vmatprep.subr.mxu0 0.0
    %2195 = vmatpush1.msra.mxu0 0.0
    %2196 = vmatprep.subr.mxu0 0.0
    %2197 = vmatpush1.msra.mxu0 0.0
    %2198 = vmatprep.subr.mxu0 0.0
    %2199 = vmatpush1.msra.mxu0 0.0
    %2200 = vmatprep.subr.mxu0 0.0
    %2201 = vmatpush1.msra.mxu0 0.0
    %2202 = vmatprep.subr.mxu0 0.0
    %2203 = vmatpush1.msra.mxu0 0.0
    %2204 = vmatprep.subr.mxu0 0.0
    %2205 = vmatpush1.msra.mxu0 0.0
    %2206 = vmatprep.subr.mxu0 0.0
    %2207 = vmatpush1.msra.mxu0 0.0
    %2208 = vmatprep.subr.mxu0 0.0
    %2209 = vmatpush1.msra.mxu0 0.0
    %2210 = vmatprep.subr.mxu0 0.0
    %2211 = vmatpush1.msra.mxu0 0.0
    %2212 = vmatprep.subr.mxu0 0.0
    %2213 = vmatpush1.msra.mxu0 0.0
    %2214 = vmatprep.subr.mxu0 0.0
    %2215 = vmatpush1.msra.mxu0 0.0
    %2216 = vmatprep.subr.mxu0 0.0
    %2217 = vmatpush1.msra.mxu0 0.0
    %2218 = vmatprep.mubr.f32.mxu0 0.0
    %2219 = vmatmul.mubr.f32.gmra.mrb[0].mxu0 %v1817
    %v2220 = vpop.f32.mrb[0].mxu0
    %v2221 = vadd.f32 0.0, %v2220
    %v2222 = vpop.f32.mrb[0].mxu0
    %2223 = vdwg.mxu0
    %v2224 = vadd.f32 %v2055, %v2221
    %v2225 = vtanh.pop %v2224
    %v2226 = vmul.f32 %v2225, %v125
    %v2227 = vadd.f32 %v2226, %v126
    %v2228 = vmul.f32 %v2227, %v1807
    %2230 = vrot.lane.b32.xlu0 %v2227, 64
    %v2231 = vpop.permute.xlu0 %2230
    %v2233 = vmul.f32 %v2227, %v2231
    %2235 = vrot.lane.b32.xlu0 %v2233, 32
    %v2236 = vpop.permute.xlu0 %2235
    %v2238 = vadd.f32 %v2228, %v2236
    %v2239 = vtanh.pop %v2238
    %2241 = vrot.lane.b32.xlu0 %v2239, 64
    %v2242 = vpop.permute.xlu0 %2241
    %v2244 = vmul.f32 %v2227, %v2242
    %2246 = vrot.lane.b32.xlu0 %v2244, 32
    %v2247 = vpop.permute.xlu0 %2246
    %v2248 = vsel %vm241, %v2247, 0
    %2250 = vmatprep.subr.mxu0 0.0
    %2251 = vmatpush1.msra.mxu0 %v143
    %2252 = vmatprep.subr.mxu0 0.0
    %2253 = vmatpush1.msra.mxu0 %v144
    %2254 = vmatprep.subr.mxu0 0.0
    %2255 = vmatpush1.msra.mxu0 %v145
    %2256 = vmatprep.subr.mxu0 0.0
    %2257 = vmatpush1.msra.mxu0 %v146
    %2258 = vmatprep.subr.mxu0 0.0
    %2259 = vmatpush1.msra.mxu0 0.0
    %2260 = vmatprep.subr.mxu0 0.0
    %2261 = vmatpush1.msra.mxu0 0.0
    %2262 = vmatprep.subr.mxu0 0.0
    %2263 = vmatpush1.msra.mxu0 0.0
    %2264 = vmatprep.subr.mxu0 0.0
    %2265 = vmatpush1.msra.mxu0 0.0
    %2266 = vmatprep.subr.mxu0 0.0
    %2267 = vmatpush1.msra.mxu0 0.0
    %2268 = vmatprep.subr.mxu0 0.0
    %2269 = vmatpush1.msra.mxu0 0.0
    %2270 = vmatprep.subr.mxu0 0.0
    %2271 = vmatpush1.msra.mxu0 0.0
    %2272 = vmatprep.subr.mxu0 0.0
    %2273 = vmatpush1.msra.mxu0 0.0
    %2274 = vmatprep.subr.mxu0 0.0
    %2275 = vmatpush1.msra.mxu0 0.0
    %2276 = vmatprep.subr.mxu0 0.0
    %2277 = vmatpush1.msra.mxu0 0.0
    %2278 = vmatprep.subr.mxu0 0.0
    %2279 = vmatpush1.msra.mxu0 0.0
    %2280 = vmatprep.subr.mxu0 0.0
    %2281 = vmatpush1.msra.mxu0 0.0
    %2282 = vmatprep.subr.mxu0 0.0
    %2283 = vmatpush1.msra.mxu0 0.0
    %2284 = vmatprep.subr.mxu0 0.0
    %2285 = vmatpush1.msra.mxu0 0.0
    %2286 = vmatprep.subr.mxu0 0.0
    %2287 = vmatpush1.msra.mxu0 0.0
    %2288 = vmatprep.subr.mxu0 0.0
    %2289 = vmatpush1.msra.mxu0 0.0
    %2290 = vmatprep.subr.mxu0 0.0
    %2291 = vmatpush1.msra.mxu0 0.0
    %2292 = vmatprep.subr.mxu0 0.0
    %2293 = vmatpush1.msra.mxu0 0.0
    %2294 = vmatprep.subr.mxu0 0.0
    %2295 = vmatpush1.msra.mxu0 0.0
    %2296 = vmatprep.subr.mxu0 0.0
    %2297 = vmatpush1.msra.mxu0 0.0
    %2298 = vmatprep.subr.mxu0 0.0
    %2299 = vmatpush1.msra.mxu0 0.0
    %2300 = vmatprep.subr.mxu0 0.0
    %2301 = vmatpush1.msra.mxu0 0.0
    %2302 = vmatprep.subr.mxu0 0.0
    %2303 = vmatpush1.msra.mxu0 0.0
    %2304 = vmatprep.subr.mxu0 0.0
    %2305 = vmatpush1.msra.mxu0 0.0
    %2306 = vmatprep.subr.mxu0 0.0
    %2307 = vmatpush1.msra.mxu0 0.0
    %2308 = vmatprep.subr.mxu0 0.0
    %2309 = vmatpush1.msra.mxu0 0.0
    %2310 = vmatprep.subr.mxu0 0.0
    %2311 = vmatpush1.msra.mxu0 0.0
    %2312 = vmatprep.subr.mxu0 0.0
    %2313 = vmatpush1.msra.mxu0 0.0
    %2314 = vmatprep.mubr.f32.mxu0 0.0
    %2315 = vmatmul.mubr.f32.gmra.mrb[0].mxu0 %v2248
    %v2316 = vpop.f32.mrb[0].mxu0
    %v2317 = vadd.f32 %v512, %v2316
    %v2318 = vpop.f32.mrb[0].mxu0
    %2319 = vdwg.mxu0
    %2320 = vmatprep.subr.mxu0 0.0
    %2321 = vmatpush1.msra.mxu0 %v127
    %2322 = vmatprep.subr.mxu0 0.0
    %2323 = vmatpush1.msra.mxu0 %v128
    %2324 = vmatprep.subr.mxu0 0.0
    %2325 = vmatpush1.msra.mxu0 %v129
    %2326 = vmatprep.subr.mxu0 0.0
    %2327 = vmatpush1.msra.mxu0 %v130
    %2328 = vmatprep.subr.mxu0 0.0
    %2329 = vmatpush1.msra.mxu0 0.0
    %2330 = vmatprep.subr.mxu0 0.0
    %2331 = vmatpush1.msra.mxu0 0.0
    %2332 = vmatprep.subr.mxu0 0.0
    %2333 = vmatpush1.msra.mxu0 0.0
    %2334 = vmatprep.subr.mxu0 0.0
    %2335 = vmatpush1.msra.mxu0 0.0
    %2336 = vmatprep.subr.mxu0 0.0
    %2337 = vmatpush1.msra.mxu0 0.0
    %2338 = vmatprep.subr.mxu0 0.0
    %2339 = vmatpush1.msra.mxu0 0.0
    %2340 = vmatprep.subr.mxu0 0.0
    %2341 = vmatpush1.msra.mxu0 0.0
    %2342 = vmatprep.subr.mxu0 0.0
    %2343 = vmatpush1.msra.mxu0 0.0
    %2344 = vmatprep.subr.mxu0 0.0
    %2345 = vmatpush1.msra.mxu0 0.0
    %2346 = vmatprep.subr.mxu0 0.0
    %2347 = vmatpush1.msra.mxu0 0.0
    %2348 = vmatprep.subr.mxu0 0.0
    %2349 = vmatpush1.msra.mxu0 0.0
    %2350 = vmatprep.subr.mxu0 0.0
    %2351 = vmatpush1.msra.mxu0 0.0
    %2352 = vmatprep.subr.mxu0 0.0
    %2353 = vmatpush1.msra.mxu0 0.0
    %2354 = vmatprep.subr.mxu0 0.0
    %2355 = vmatpush1.msra.mxu0 0.0
    %2356 = vmatprep.subr.mxu0 0.0
    %2357 = vmatpush1.msra.mxu0 0.0
    %2358 = vmatprep.subr.mxu0 0.0
    %2359 = vmatpush1.msra.mxu0 0.0
    %2360 = vmatprep.subr.mxu0 0.0
    %2361 = vmatpush1.msra.mxu0 0.0
    %2362 = vmatprep.subr.mxu0 0.0
    %2363 = vmatpush1.msra.mxu0 0.0
    %2364 = vmatprep.subr.mxu0 0.0
    %2365 = vmatpush1.msra.mxu0 0.0
    %2366 = vmatprep.subr.mxu0 0.0
    %2367 = vmatpush1.msra.mxu0 0.0
    %2368 = vmatprep.subr.mxu0 0.0
    %2369 = vmatpush1.msra.mxu0 0.0
    %2370 = vmatprep.subr.mxu0 0.0
    %2371 = vmatpush1.msra.mxu0 0.0
    %2372 = vmatprep.subr.mxu0 0.0
    %2373 = vmatpush1.msra.mxu0 0.0
    %2374 = vmatprep.subr.mxu0 0.0
    %2375 = vmatpush1.msra.mxu0 0.0
    %2376 = vmatprep.subr.mxu0 0.0
    %2377 = vmatpush1.msra.mxu0 0.0
    %2378 = vmatprep.subr.mxu0 0.0
    %2379 = vmatpush1.msra.mxu0 0.0
    %2380 = vmatprep.subr.mxu0 0.0
    %2381 = vmatpush1.msra.mxu0 0.0
    %2382 = vmatprep.subr.mxu0 0.0
    %2383 = vmatpush1.msra.mxu0 0.0
    %2384 = vmatprep.mubr.f32.mxu0 0.0
    %2385 = vmatmul.mubr.f32.gmra.mrb[0].mxu0 %v1986
    %v2386 = vpop.f32.mrb[0].mxu0
    %v2387 = vadd.f32 0.0, %v2386
    %v2388 = vpop.f32.mrb[0].mxu0
    %2389 = vdwg.mxu0
    %v2391 = vrot.slane %v2387, 6
    %v2393 = vadd.f32 %v238, %v2391
    %v2394 = vtanh.pop %v2393
    %v2395 = vmul.f32 %v2394, %v125
    %v2396 = vadd.f32 %v2395, %v126
    %v2398 = vrot.slane %v1976, 6
    %v2400 = vmul.f32 %v2396, %v2398
    %2402 = vrot.lane.b32.xlu0 %v2396, 64
    %v2403 = vpop.permute.xlu0 %2402
    %v2405 = vmul.f32 %v2396, %v2403
    %2407 = vrot.lane.b32.xlu0 %v2405, 32
    %v2408 = vpop.permute.xlu0 %2407
    %v2410 = vadd.f32 %v2400, %v2408
    %v2411 = vtanh.pop %v2410
    %2413 = vrot.lane.b32.xlu0 %v2411, 64
    %v2414 = vpop.permute.xlu0 %2413
    %v2416 = vmul.f32 %v2396, %v2414
    %v2418 = vrot.slane %v2416, 2
    %2419 = vrot.lane.b32.xlu0 %v2418, 32
    %v2420 = vpop.permute.xlu0 %2419
    %v2421 = vsel %vm241, %v2420, 0
    %2423 = vmatprep.subr.mxu0 0.0
    %2424 = vmatpush1.msra.mxu0 %v139
    %2425 = vmatprep.subr.mxu0 0.0
    %2426 = vmatpush1.msra.mxu0 %v140
    %2427 = vmatprep.subr.mxu0 0.0
    %2428 = vmatpush1.msra.mxu0 %v141
    %2429 = vmatprep.subr.mxu0 0.0
    %2430 = vmatpush1.msra.mxu0 %v142
    %2431 = vmatprep.subr.mxu0 0.0
    %2432 = vmatpush1.msra.mxu0 0.0
    %2433 = vmatprep.subr.mxu0 0.0
    %2434 = vmatpush1.msra.mxu0 0.0
    %2435 = vmatprep.subr.mxu0 0.0
    %2436 = vmatpush1.msra.mxu0 0.0
    %2437 = vmatprep.subr.mxu0 0.0
    %2438 = vmatpush1.msra.mxu0 0.0
    %2439 = vmatprep.subr.mxu0 0.0
    %2440 = vmatpush1.msra.mxu0 0.0
    %2441 = vmatprep.subr.mxu0 0.0
    %2442 = vmatpush1.msra.mxu0 0.0
    %2443 = vmatprep.subr.mxu0 0.0
    %2444 = vmatpush1.msra.mxu0 0.0
    %2445 = vmatprep.subr.mxu0 0.0
    %2446 = vmatpush1.msra.mxu0 0.0
    %2447 = vmatprep.subr.mxu0 0.0
    %2448 = vmatpush1.msra.mxu0 0.0
    %2449 = vmatprep.subr.mxu0 0.0
    %2450 = vmatpush1.msra.mxu0 0.0
    %2451 = vmatprep.subr.mxu0 0.0
    %2452 = vmatpush1.msra.mxu0 0.0
    %2453 = vmatprep.subr.mxu0 0.0
    %2454 = vmatpush1.msra.mxu0 0.0
    %2455 = vmatprep.subr.mxu0 0.0
    %2456 = vmatpush1.msra.mxu0 0.0
    %2457 = vmatprep.subr.mxu0 0.0
    %2458 = vmatpush1.msra.mxu0 0.0
    %2459 = vmatprep.subr.mxu0 0.0
    %2460 = vmatpush1.msra.mxu0 0.0
    %2461 = vmatprep.subr.mxu0 0.0
    %2462 = vmatpush1.msra.mxu0 0.0
    %2463 = vmatprep.subr.mxu0 0.0
    %2464 = vmatpush1.msra.mxu0 0.0
    %2465 = vmatprep.subr.mxu0 0.0
    %2466 = vmatpush1.msra.mxu0 0.0
    %2467 = vmatprep.subr.mxu0 0.0
    %2468 = vmatpush1.msra.mxu0 0.0
    %2469 = vmatprep.subr.mxu0 0.0
    %2470 = vmatpush1.msra.mxu0 0.0
    %2471 = vmatprep.subr.mxu0 0.0
    %2472 = vmatpush1.msra.mxu0 0.0
    %2473 = vmatprep.subr.mxu0 0.0
    %2474 = vmatpush1.msra.mxu0 0.0
    %2475 = vmatprep.subr.mxu0 0.0
    %2476 = vmatpush1.msra.mxu0 0.0
    %2477 = vmatprep.subr.mxu0 0.0
    %2478 = vmatpush1.msra.mxu0 0.0
    %2479 = vmatprep.subr.mxu0 0.0
    %2480 = vmatpush1.msra.mxu0 0.0
    %2481 = vmatprep.subr.mxu0 0.0
    %2482 = vmatpush1.msra.mxu0 0.0
    %2483 = vmatprep.subr.mxu0 0.0
    %2484 = vmatpush1.msra.mxu0 0.0
    %2485 = vmatprep.subr.mxu0 0.0
    %2486 = vmatpush1.msra.mxu0 0.0
    %2487 = vmatprep.mubr.f32.mxu0 0.0
    %2488 = vmatmul.mubr.f32.gmra.mrb[0].mxu0 %v2421
    %v2489 = vpop.f32.mrb[0].mxu0
    %v2490 = vadd.f32 %v340, %v2489
    %v2491 = vpop.f32.mrb[0].mxu0
    %2492 = vdwg.mxu0
    %2494 = vrot.lane.b32.xlu0 %v2153, 32
    %v2495 = vpop.permute.xlu0 %2494
    %v2496 = vsel %vm241, %v2495, 0
    %2498 = vmatprep.subr.mxu0 0.0
    %2499 = vmatpush1.msra.mxu0 %v135
    %2500 = vmatprep.subr.mxu0 0.0
    %2501 = vmatpush1.msra.mxu0 %v136
    %2502 = vmatprep.subr.mxu0 0.0
    %2503 = vmatpush1.msra.mxu0 %v137
    %2504 = vmatprep.subr.mxu0 0.0
    %2505 = vmatpush1.msra.mxu0 %v138
    %2506 = vmatprep.subr.mxu0 0.0
    %2507 = vmatpush1.msra.mxu0 0.0
    %2508 = vmatprep.subr.mxu0 0.0
    %2509 = vmatpush1.msra.mxu0 0.0
    %2510 = vmatprep.subr.mxu0 0.0
    %2511 = vmatpush1.msra.mxu0 0.0
    %2512 = vmatprep.subr.mxu0 0.0
    %2513 = vmatpush1.msra.mxu0 0.0
    %2514 = vmatprep.subr.mxu0 0.0
    %2515 = vmatpush1.msra.mxu0 0.0
    %2516 = vmatprep.subr.mxu0 0.0
    %2517 = vmatpush1.msra.mxu0 0.0
    %2518 = vmatprep.subr.mxu0 0.0
    %2519 = vmatpush1.msra.mxu0 0.0
    %2520 = vmatprep.subr.mxu0 0.0
    %2521 = vmatpush1.msra.mxu0 0.0
    %2522 = vmatprep.subr.mxu0 0.0
    %2523 = vmatpush1.msra.mxu0 0.0
    %2524 = vmatprep.subr.mxu0 0.0
    %2525 = vmatpush1.msra.mxu0 0.0
    %2526 = vmatprep.subr.mxu0 0.0
    %2527 = vmatpush1.msra.mxu0 0.0
    %2528 = vmatprep.subr.mxu0 0.0
    %2529 = vmatpush1.msra.mxu0 0.0
    %2530 = vmatprep.subr.mxu0 0.0
    %2531 = vmatpush1.msra.mxu0 0.0
    %2532 = vmatprep.subr.mxu0 0.0
    %2533 = vmatpush1.msra.mxu0 0.0
    %2534 = vmatprep.subr.mxu0 0.0
    %2535 = vmatpush1.msra.mxu0 0.0
    %2536 = vmatprep.subr.mxu0 0.0
    %2537 = vmatpush1.msra.mxu0 0.0
    %2538 = vmatprep.subr.mxu0 0.0
    %2539 = vmatpush1.msra.mxu0 0.0
    %2540 = vmatprep.subr.mxu0 0.0
    %2541 = vmatpush1.msra.mxu0 0.0
    %2542 = vmatprep.subr.mxu0 0.0
    %2543 = vmatpush1.msra.mxu0 0.0
    %2544 = vmatprep.subr.mxu0 0.0
    %2545 = vmatpush1.msra.mxu0 0.0
    %2546 = vmatprep.subr.mxu0 0.0
    %2547 = vmatpush1.msra.mxu0 0.0
    %2548 = vmatprep.subr.mxu0 0.0
    %2549 = vmatpush1.msra.mxu0 0.0
    %2550 = vmatprep.subr.mxu0 0.0
    %2551 = vmatpush1.msra.mxu0 0.0
    %2552 = vmatprep.subr.mxu0 0.0
    %2553 = vmatpush1.msra.mxu0 0.0
    %2554 = vmatprep.subr.mxu0 0.0
    %2555 = vmatpush1.msra.mxu0 0.0
    %2556 = vmatprep.subr.mxu0 0.0
    %2557 = vmatpush1.msra.mxu0 0.0
    %2558 = vmatprep.subr.mxu0 0.0
    %2559 = vmatpush1.msra.mxu0 0.0
    %2560 = vmatprep.subr.mxu0 0.0
    %2561 = vmatpush1.msra.mxu0 0.0
    %2562 = vmatprep.mubr.f32.mxu0 0.0
    %2563 = vmatmul.mubr.f32.gmra.mrb[0].mxu0 %v2496
    %v2564 = vpop.f32.mrb[0].mxu0
    %v2565 = vadd.f32 0.0, %v2564
    %v2566 = vpop.f32.mrb[0].mxu0
    %2567 = vdwg.mxu0
    %v2568 = vadd.f32 %v2317, %v2565
    %v2569 = vtanh.pop %v2568
    %v2570 = vmul.f32 %v2569, %v125
    %v2571 = vadd.f32 %v2570, %v126
    %v2572 = vmul.f32 %v2571, %v2147
    %2574 = vrot.lane.b32.xlu0 %v2571, 64
    %v2575 = vpop.permute.xlu0 %2574
    %v2577 = vmul.f32 %v2571, %v2575
    %2579 = vrot.lane.b32.xlu0 %v2577, 32
    %v2580 = vpop.permute.xlu0 %2579
    %v2582 = vadd.f32 %v2572, %v2580
    %v2583 = vtanh.pop %v2582
    %2585 = vrot.lane.b32.xlu0 %v2583, 64
    %v2586 = vpop.permute.xlu0 %2585
    %v2588 = vmul.f32 %v2571, %v2586
    %2589 = vmatprep.subr.mxu0 0.0
    %2590 = vmatpush1.msra.mxu0 %v131
    %2591 = vmatprep.subr.mxu0 0.0
    %2592 = vmatpush1.msra.mxu0 %v132
    %2593 = vmatprep.subr.mxu0 0.0
    %2594 = vmatpush1.msra.mxu0 %v133
    %2595 = vmatprep.subr.mxu0 0.0
    %2596 = vmatpush1.msra.mxu0 %v134
    %2597 = vmatprep.subr.mxu0 0.0
    %2598 = vmatpush1.msra.mxu0 0.0
    %2599 = vmatprep.subr.mxu0 0.0
    %2600 = vmatpush1.msra.mxu0 0.0
    %2601 = vmatprep.subr.mxu0 0.0
    %2602 = vmatpush1.msra.mxu0 0.0
    %2603 = vmatprep.subr.mxu0 0.0
    %2604 = vmatpush1.msra.mxu0 0.0
    %2605 = vmatprep.subr.mxu0 0.0
    %2606 = vmatpush1.msra.mxu0 0.0
    %2607 = vmatprep.subr.mxu0 0.0
    %2608 = vmatpush1.msra.mxu0 0.0
    %2609 = vmatprep.subr.mxu0 0.0
    %2610 = vmatpush1.msra.mxu0 0.0
    %2611 = vmatprep.subr.mxu0 0.0
    %2612 = vmatpush1.msra.mxu0 0.0
    %2613 = vmatprep.subr.mxu0 0.0
    %2614 = vmatpush1.msra.mxu0 0.0
    %2615 = vmatprep.subr.mxu0 0.0
    %2616 = vmatpush1.msra.mxu0 0.0
    %2617 = vmatprep.subr.mxu0 0.0
    %2618 = vmatpush1.msra.mxu0 0.0
    %2619 = vmatprep.subr.mxu0 0.0
    %2620 = vmatpush1.msra.mxu0 0.0
    %2621 = vmatprep.subr.mxu0 0.0
    %2622 = vmatpush1.msra.mxu0 0.0
    %2623 = vmatprep.subr.mxu0 0.0
    %2624 = vmatpush1.msra.mxu0 0.0
    %2625 = vmatprep.subr.mxu0 0.0
    %2626 = vmatpush1.msra.mxu0 0.0
    %2627 = vmatprep.subr.mxu0 0.0
    %2628 = vmatpush1.msra.mxu0 0.0
    %2629 = vmatprep.subr.mxu0 0.0
    %2630 = vmatpush1.msra.mxu0 0.0
    %2631 = vmatprep.subr.mxu0 0.0
    %2632 = vmatpush1.msra.mxu0 0.0
    %2633 = vmatprep.subr.mxu0 0.0
    %2634 = vmatpush1.msra.mxu0 0.0
    %2635 = vmatprep.subr.mxu0 0.0
    %2636 = vmatpush1.msra.mxu0 0.0
    %2637 = vmatprep.subr.mxu0 0.0
    %2638 = vmatpush1.msra.mxu0 0.0
    %2639 = vmatprep.subr.mxu0 0.0
    %2640 = vmatpush1.msra.mxu0 0.0
    %2641 = vmatprep.subr.mxu0 0.0
    %2642 = vmatpush1.msra.mxu0 0.0
    %2643 = vmatprep.subr.mxu0 0.0
    %2644 = vmatpush1.msra.mxu0 0.0
    %2645 = vmatprep.subr.mxu0 0.0
    %2646 = vmatpush1.msra.mxu0 0.0
    %2647 = vmatprep.subr.mxu0 0.0
    %2648 = vmatpush1.msra.mxu0 0.0
    %2649 = vmatprep.subr.mxu0 0.0
    %2650 = vmatpush1.msra.mxu0 0.0
    %2651 = vmatprep.subr.mxu0 0.0
    %2652 = vmatpush1.msra.mxu0 0.0
    %2653 = vmatprep.mubr.f32.mxu0 0.0
    %2654 = vmatmul.mubr.f32.gmra.mrb[0].mxu0 %v2248
    %v2655 = vpop.f32.mrb[0].mxu0
    %v2656 = vadd.f32 0.0, %v2655
    %v2657 = vpop.f32.mrb[0].mxu0
    %2658 = vdwg.mxu0
    %v2659 = vadd.f32 %v2490, %v2656
    %v2660 = vtanh.pop %v2659
    %v2661 = vmul.f32 %v2660, %v125
    %v2662 = vadd.f32 %v2661, %v126
    %v2663 = vmul.f32 %v2662, %v2238
    %2665 = vrot.lane.b32.xlu0 %v2662, 64
    %v2666 = vpop.permute.xlu0 %2665
    %v2668 = vmul.f32 %v2662, %v2666
    %2670 = vrot.lane.b32.xlu0 %v2668, 32
    %v2671 = vpop.permute.xlu0 %2670
    %v2673 = vadd.f32 %v2663, %v2671
    %v2674 = vtanh.pop %v2673
    %2676 = vrot.lane.b32.xlu0 %v2674, 64
    %v2677 = vpop.permute.xlu0 %2676
    %v2679 = vmul.f32 %v2662, %v2677
    %2681 = vrot.lane.b32.xlu0 %v2679, 32
    %v2682 = vpop.permute.xlu0 %2681
    %v2683 = vsel %vm241, %v2682, 0
    %2685 = vmatprep.subr.mxu0 0.0
    %2686 = vmatpush1.msra.mxu0 %v143
    %2687 = vmatprep.subr.mxu0 0.0
    %2688 = vmatpush1.msra.mxu0 %v144
    %2689 = vmatprep.subr.mxu0 0.0
    %2690 = vmatpush1.msra.mxu0 %v145
    %2691 = vmatprep.subr.mxu0 0.0
    %2692 = vmatpush1.msra.mxu0 %v146
    %2693 = vmatprep.subr.mxu0 0.0
    %2694 = vmatpush1.msra.mxu0 0.0
    %2695 = vmatprep.subr.mxu0 0.0
    %2696 = vmatpush1.msra.mxu0 0.0
    %2697 = vmatprep.subr.mxu0 0.0
    %2698 = vmatpush1.msra.mxu0 0.0
    %2699 = vmatprep.subr.mxu0 0.0
    %2700 = vmatpush1.msra.mxu0 0.0
    %2701 = vmatprep.subr.mxu0 0.0
    %2702 = vmatpush1.msra.mxu0 0.0
    %2703 = vmatprep.subr.mxu0 0.0
    %2704 = vmatpush1.msra.mxu0 0.0
    %2705 = vmatprep.subr.mxu0 0.0
    %2706 = vmatpush1.msra.mxu0 0.0
    %2707 = vmatprep.subr.mxu0 0.0
    %2708 = vmatpush1.msra.mxu0 0.0
    %2709 = vmatprep.subr.mxu0 0.0
    %2710 = vmatpush1.msra.mxu0 0.0
    %2711 = vmatprep.subr.mxu0 0.0
    %2712 = vmatpush1.msra.mxu0 0.0
    %2713 = vmatprep.subr.mxu0 0.0
    %2714 = vmatpush1.msra.mxu0 0.0
    %2715 = vmatprep.subr.mxu0 0.0
    %2716 = vmatpush1.msra.mxu0 0.0
    %2717 = vmatprep.subr.mxu0 0.0
    %2718 = vmatpush1.msra.mxu0 0.0
    %2719 = vmatprep.subr.mxu0 0.0
    %2720 = vmatpush1.msra.mxu0 0.0
    %2721 = vmatprep.subr.mxu0 0.0
    %2722 = vmatpush1.msra.mxu0 0.0
    %2723 = vmatprep.subr.mxu0 0.0
    %2724 = vmatpush1.msra.mxu0 0.0
    %2725 = vmatprep.subr.mxu0 0.0
    %2726 = vmatpush1.msra.mxu0 0.0
    %2727 = vmatprep.subr.mxu0 0.0
    %2728 = vmatpush1.msra.mxu0 0.0
    %2729 = vmatprep.subr.mxu0 0.0
    %2730 = vmatpush1.msra.mxu0 0.0
    %2731 = vmatprep.subr.mxu0 0.0
    %2732 = vmatpush1.msra.mxu0 0.0
    %2733 = vmatprep.subr.mxu0 0.0
    %2734 = vmatpush1.msra.mxu0 0.0
    %2735 = vmatprep.subr.mxu0 0.0
    %2736 = vmatpush1.msra.mxu0 0.0
    %2737 = vmatprep.subr.mxu0 0.0
    %2738 = vmatpush1.msra.mxu0 0.0
    %2739 = vmatprep.subr.mxu0 0.0
    %2740 = vmatpush1.msra.mxu0 0.0
    %2741 = vmatprep.subr.mxu0 0.0
    %2742 = vmatpush1.msra.mxu0 0.0
    %2743 = vmatprep.subr.mxu0 0.0
    %2744 = vmatpush1.msra.mxu0 0.0
    %2745 = vmatprep.subr.mxu0 0.0
    %2746 = vmatpush1.msra.mxu0 0.0
    %2747 = vmatprep.subr.mxu0 0.0
    %2748 = vmatpush1.msra.mxu0 0.0
    %2749 = vmatprep.mubr.f32.mxu0 0.0
    %2750 = vmatmul.mubr.f32.gmra.mrb[0].mxu0 %v2683
    %v2751 = vpop.f32.mrb[0].mxu0
    %v2752 = vadd.f32 %v512, %v2751
    %v2753 = vpop.f32.mrb[0].mxu0
    %2754 = vdwg.mxu0
    %2755 = vmatprep.subr.mxu0 0.0
    %2756 = vmatpush1.msra.mxu0 %v127
    %2757 = vmatprep.subr.mxu0 0.0
    %2758 = vmatpush1.msra.mxu0 %v128
    %2759 = vmatprep.subr.mxu0 0.0
    %2760 = vmatpush1.msra.mxu0 %v129
    %2761 = vmatprep.subr.mxu0 0.0
    %2762 = vmatpush1.msra.mxu0 %v130
    %2763 = vmatprep.subr.mxu0 0.0
    %2764 = vmatpush1.msra.mxu0 0.0
    %2765 = vmatprep.subr.mxu0 0.0
    %2766 = vmatpush1.msra.mxu0 0.0
    %2767 = vmatprep.subr.mxu0 0.0
    %2768 = vmatpush1.msra.mxu0 0.0
    %2769 = vmatprep.subr.mxu0 0.0
    %2770 = vmatpush1.msra.mxu0 0.0
    %2771 = vmatprep.subr.mxu0 0.0
    %2772 = vmatpush1.msra.mxu0 0.0
    %2773 = vmatprep.subr.mxu0 0.0
    %2774 = vmatpush1.msra.mxu0 0.0
    %2775 = vmatprep.subr.mxu0 0.0
    %2776 = vmatpush1.msra.mxu0 0.0
    %2777 = vmatprep.subr.mxu0 0.0
    %2778 = vmatpush1.msra.mxu0 0.0
    %2779 = vmatprep.subr.mxu0 0.0
    %2780 = vmatpush1.msra.mxu0 0.0
    %2781 = vmatprep.subr.mxu0 0.0
    %2782 = vmatpush1.msra.mxu0 0.0
    %2783 = vmatprep.subr.mxu0 0.0
    %2784 = vmatpush1.msra.mxu0 0.0
    %2785 = vmatprep.subr.mxu0 0.0
    %2786 = vmatpush1.msra.mxu0 0.0
    %2787 = vmatprep.subr.mxu0 0.0
    %2788 = vmatpush1.msra.mxu0 0.0
    %2789 = vmatprep.subr.mxu0 0.0
    %2790 = vmatpush1.msra.mxu0 0.0
    %2791 = vmatprep.subr.mxu0 0.0
    %2792 = vmatpush1.msra.mxu0 0.0
    %2793 = vmatprep.subr.mxu0 0.0
    %2794 = vmatpush1.msra.mxu0 0.0
    %2795 = vmatprep.subr.mxu0 0.0
    %2796 = vmatpush1.msra.mxu0 0.0
    %2797 = vmatprep.subr.mxu0 0.0
    %2798 = vmatpush1.msra.mxu0 0.0
    %2799 = vmatprep.subr.mxu0 0.0
    %2800 = vmatpush1.msra.mxu0 0.0
    %2801 = vmatprep.subr.mxu0 0.0
    %2802 = vmatpush1.msra.mxu0 0.0
    %2803 = vmatprep.subr.mxu0 0.0
    %2804 = vmatpush1.msra.mxu0 0.0
    %2805 = vmatprep.subr.mxu0 0.0
    %2806 = vmatpush1.msra.mxu0 0.0
    %2807 = vmatprep.subr.mxu0 0.0
    %2808 = vmatpush1.msra.mxu0 0.0
    %2809 = vmatprep.subr.mxu0 0.0
    %2810 = vmatpush1.msra.mxu0 0.0
    %2811 = vmatprep.subr.mxu0 0.0
    %2812 = vmatpush1.msra.mxu0 0.0
    %2813 = vmatprep.subr.mxu0 0.0
    %2814 = vmatpush1.msra.mxu0 0.0
    %2815 = vmatprep.subr.mxu0 0.0
    %2816 = vmatpush1.msra.mxu0 0.0
    %2817 = vmatprep.subr.mxu0 0.0
    %2818 = vmatpush1.msra.mxu0 0.0
    %2819 = vmatprep.mubr.f32.mxu0 0.0
    %2820 = vmatmul.mubr.f32.gmra.mrb[0].mxu0 %v2421
    %v2821 = vpop.f32.mrb[0].mxu0
    %v2822 = vadd.f32 0.0, %v2821
    %v2823 = vpop.f32.mrb[0].mxu0
    %2824 = vdwg.mxu0
    %v2826 = vrot.slane %v2822, 4
    %v2828 = vadd.f32 %v238, %v2826
    %v2829 = vtanh.pop %v2828
    %v2830 = vmul.f32 %v2829, %v125
    %v2831 = vadd.f32 %v2830, %v126
    %v2833 = vrot.slane %v2410, 6
    %v2835 = vmul.f32 %v2831, %v2833
    %2837 = vrot.lane.b32.xlu0 %v2831, 64
    %v2838 = vpop.permute.xlu0 %2837
    %v2840 = vmul.f32 %v2831, %v2838
    %2842 = vrot.lane.b32.xlu0 %v2840, 32
    %v2843 = vpop.permute.xlu0 %2842
    %v2845 = vadd.f32 %v2835, %v2843
    %v2846 = vtanh.pop %v2845
    %2848 = vrot.lane.b32.xlu0 %v2846, 64
    %v2849 = vpop.permute.xlu0 %2848
    %v2851 = vmul.f32 %v2831, %v2849
    %v2853 = vrot.slane %v2851, 4
    %2854 = vrot.lane.b32.xlu0 %v2853, 32
    %v2855 = vpop.permute.xlu0 %2854
    %v2856 = vsel %vm241, %v2855, 0
    %2858 = vmatprep.subr.mxu0 0.0
    %2859 = vmatpush1.msra.mxu0 %v139
    %2860 = vmatprep.subr.mxu0 0.0
    %2861 = vmatpush1.msra.mxu0 %v140
    %2862 = vmatprep.subr.mxu0 0.0
    %2863 = vmatpush1.msra.mxu0 %v141
    %2864 = vmatprep.subr.mxu0 0.0
    %2865 = vmatpush1.msra.mxu0 %v142
    %2866 = vmatprep.subr.mxu0 0.0
    %2867 = vmatpush1.msra.mxu0 0.0
    %2868 = vmatprep.subr.mxu0 0.0
    %2869 = vmatpush1.msra.mxu0 0.0
    %2870 = vmatprep.subr.mxu0 0.0
    %2871 = vmatpush1.msra.mxu0 0.0
    %2872 = vmatprep.subr.mxu0 0.0
    %2873 = vmatpush1.msra.mxu0 0.0
    %2874 = vmatprep.subr.mxu0 0.0
    %2875 = vmatpush1.msra.mxu0 0.0
    %2876 = vmatprep.subr.mxu0 0.0
    %2877 = vmatpush1.msra.mxu0 0.0
    %2878 = vmatprep.subr.mxu0 0.0
    %2879 = vmatpush1.msra.mxu0 0.0
    %2880 = vmatprep.subr.mxu0 0.0
    %2881 = vmatpush1.msra.mxu0 0.0
    %2882 = vmatprep.subr.mxu0 0.0
    %2883 = vmatpush1.msra.mxu0 0.0
    %2884 = vmatprep.subr.mxu0 0.0
    %2885 = vmatpush1.msra.mxu0 0.0
    %2886 = vmatprep.subr.mxu0 0.0
    %2887 = vmatpush1.msra.mxu0 0.0
    %2888 = vmatprep.subr.mxu0 0.0
    %2889 = vmatpush1.msra.mxu0 0.0
    %2890 = vmatprep.subr.mxu0 0.0
    %2891 = vmatpush1.msra.mxu0 0.0
    %2892 = vmatprep.subr.mxu0 0.0
    %2893 = vmatpush1.msra.mxu0 0.0
    %2894 = vmatprep.subr.mxu0 0.0
    %2895 = vmatpush1.msra.mxu0 0.0
    %2896 = vmatprep.subr.mxu0 0.0
    %2897 = vmatpush1.msra.mxu0 0.0
    %2898 = vmatprep.subr.mxu0 0.0
    %2899 = vmatpush1.msra.mxu0 0.0
    %2900 = vmatprep.subr.mxu0 0.0
    %2901 = vmatpush1.msra.mxu0 0.0
    %2902 = vmatprep.subr.mxu0 0.0
    %2903 = vmatpush1.msra.mxu0 0.0
    %2904 = vmatprep.subr.mxu0 0.0
    %2905 = vmatpush1.msra.mxu0 0.0
    %2906 = vmatprep.subr.mxu0 0.0
    %2907 = vmatpush1.msra.mxu0 0.0
    %2908 = vmatprep.subr.mxu0 0.0
    %2909 = vmatpush1.msra.mxu0 0.0
    %2910 = vmatprep.subr.mxu0 0.0
    %2911 = vmatpush1.msra.mxu0 0.0
    %2912 = vmatprep.subr.mxu0 0.0
    %2913 = vmatpush1.msra.mxu0 0.0
    %2914 = vmatprep.subr.mxu0 0.0
    %2915 = vmatpush1.msra.mxu0 0.0
    %2916 = vmatprep.subr.mxu0 0.0
    %2917 = vmatpush1.msra.mxu0 0.0
    %2918 = vmatprep.subr.mxu0 0.0
    %2919 = vmatpush1.msra.mxu0 0.0
    %2920 = vmatprep.subr.mxu0 0.0
    %2921 = vmatpush1.msra.mxu0 0.0
    %2922 = vmatprep.mubr.f32.mxu0 0.0
    %2923 = vmatmul.mubr.f32.gmra.mrb[0].mxu0 %v2856
    %v2924 = vpop.f32.mrb[0].mxu0
    %v2925 = vadd.f32 %v340, %v2924
    %v2926 = vpop.f32.mrb[0].mxu0
    %2927 = vdwg.mxu0
    %2929 = vrot.lane.b32.xlu0 %v2588, 32
    %v2930 = vpop.permute.xlu0 %2929
    %v2931 = vsel %vm241, %v2930, 0
    %2933 = vmatprep.subr.mxu0 0.0
    %2934 = vmatpush1.msra.mxu0 %v135
    %2935 = vmatprep.subr.mxu0 0.0
    %2936 = vmatpush1.msra.mxu0 %v136
    %2937 = vmatprep.subr.mxu0 0.0
    %2938 = vmatpush1.msra.mxu0 %v137
    %2939 = vmatprep.subr.mxu0 0.0
    %2940 = vmatpush1.msra.mxu0 %v138
    %2941 = vmatprep.subr.mxu0 0.0
    %2942 = vmatpush1.msra.mxu0 0.0
    %2943 = vmatprep.subr.mxu0 0.0
    %2944 = vmatpush1.msra.mxu0 0.0
    %2945 = vmatprep.subr.mxu0 0.0
    %2946 = vmatpush1.msra.mxu0 0.0
    %2947 = vmatprep.subr.mxu0 0.0
    %2948 = vmatpush1.msra.mxu0 0.0
    %2949 = vmatprep.subr.mxu0 0.0
    %2950 = vmatpush1.msra.mxu0 0.0
    %2951 = vmatprep.subr.mxu0 0.0
    %2952 = vmatpush1.msra.mxu0 0.0
    %2953 = vmatprep.subr.mxu0 0.0
    %2954 = vmatpush1.msra.mxu0 0.0
    %2955 = vmatprep.subr.mxu0 0.0
    %2956 = vmatpush1.msra.mxu0 0.0
    %2957 = vmatprep.subr.mxu0 0.0
    %2958 = vmatpush1.msra.mxu0 0.0
    %2959 = vmatprep.subr.mxu0 0.0
    %2960 = vmatpush1.msra.mxu0 0.0
    %2961 = vmatprep.subr.mxu0 0.0
    %2962 = vmatpush1.msra.mxu0 0.0
    %2963 = vmatprep.subr.mxu0 0.0
    %2964 = vmatpush1.msra.mxu0 0.0
    %2965 = vmatprep.subr.mxu0 0.0
    %2966 = vmatpush1.msra.mxu0 0.0
    %2967 = vmatprep.subr.mxu0 0.0
    %2968 = vmatpush1.msra.mxu0 0.0
    %2969 = vmatprep.subr.mxu0 0.0
    %2970 = vmatpush1.msra.mxu0 0.0
    %2971 = vmatprep.subr.mxu0 0.0
    %2972 = vmatpush1.msra.mxu0 0.0
    %2973 = vmatprep.subr.mxu0 0.0
    %2974 = vmatpush1.msra.mxu0 0.0
    %2975 = vmatprep.subr.mxu0 0.0
    %2976 = vmatpush1.msra.mxu0 0.0
    %2977 = vmatprep.subr.mxu0 0.0
    %2978 = vmatpush1.msra.mxu0 0.0
    %2979 = vmatprep.subr.mxu0 0.0
    %2980 = vmatpush1.msra.mxu0 0.0
    %2981 = vmatprep.subr.mxu0 0.0
    %2982 = vmatpush1.msra.mxu0 0.0
    %2983 = vmatprep.subr.mxu0 0.0
    %2984 = vmatpush1.msra.mxu0 0.0
    %2985 = vmatprep.subr.mxu0 0.0
    %2986 = vmatpush1.msra.mxu0 0.0
    %2987 = vmatprep.subr.mxu0 0.0
    %2988 = vmatpush1.msra.mxu0 0.0
    %2989 = vmatprep.subr.mxu0 0.0
    %2990 = vmatpush1.msra.mxu0 0.0
    %2991 = vmatprep.subr.mxu0 0.0
    %2992 = vmatpush1.msra.mxu0 0.0
    %2993 = vmatprep.subr.mxu0 0.0
    %2994 = vmatpush1.msra.mxu0 0.0
    %2995 = vmatprep.subr.mxu0 0.0
    %2996 = vmatpush1.msra.mxu0 0.0
    %2997 = vmatprep.mubr.f32.mxu0 0.0
    %2998 = vmatmul.mubr.f32.gmra.mrb[0].mxu0 %v2931
    %v2999 = vpop.f32.mrb[0].mxu0
    %v3000 = vadd.f32 0.0, %v2999
    %v3001 = vpop.f32.mrb[0].mxu0
    %3002 = vdwg.mxu0
    %v3003 = vadd.f32 %v2752, %v3000
    %v3004 = vtanh.pop %v3003
    %v3005 = vmul.f32 %v3004, %v125
    %v3006 = vadd.f32 %v3005, %v126
    %v3007 = vmul.f32 %v3006, %v2582
    %3009 = vrot.lane.b32.xlu0 %v3006, 64
    %v3010 = vpop.permute.xlu0 %3009
    %v3012 = vmul.f32 %v3006, %v3010
    %3014 = vrot.lane.b32.xlu0 %v3012, 32
    %v3015 = vpop.permute.xlu0 %3014
    %v3017 = vadd.f32 %v3007, %v3015
    %v3018 = vtanh.pop %v3017
    %3020 = vrot.lane.b32.xlu0 %v3018, 64
    %v3021 = vpop.permute.xlu0 %3020
    %v3023 = vmul.f32 %v3006, %v3021
    %3024 = vmatprep.subr.mxu0 0.0
    %3025 = vmatpush1.msra.mxu0 %v131
    %3026 = vmatprep.subr.mxu0 0.0
    %3027 = vmatpush1.msra.mxu0 %v132
    %3028 = vmatprep.subr.mxu0 0.0
    %3029 = vmatpush1.msra.mxu0 %v133
    %3030 = vmatprep.subr.mxu0 0.0
    %3031 = vmatpush1.msra.mxu0 %v134
    %3032 = vmatprep.subr.mxu0 0.0
    %3033 = vmatpush1.msra.mxu0 0.0
    %3034 = vmatprep.subr.mxu0 0.0
    %3035 = vmatpush1.msra.mxu0 0.0
    %3036 = vmatprep.subr.mxu0 0.0
    %3037 = vmatpush1.msra.mxu0 0.0
    %3038 = vmatprep.subr.mxu0 0.0
    %3039 = vmatpush1.msra.mxu0 0.0
    %3040 = vmatprep.subr.mxu0 0.0
    %3041 = vmatpush1.msra.mxu0 0.0
    %3042 = vmatprep.subr.mxu0 0.0
    %3043 = vmatpush1.msra.mxu0 0.0
    %3044 = vmatprep.subr.mxu0 0.0
    %3045 = vmatpush1.msra.mxu0 0.0
    %3046 = vmatprep.subr.mxu0 0.0
    %3047 = vmatpush1.msra.mxu0 0.0
    %3048 = vmatprep.subr.mxu0 0.0
    %3049 = vmatpush1.msra.mxu0 0.0
    %3050 = vmatprep.subr.mxu0 0.0
    %3051 = vmatpush1.msra.mxu0 0.0
    %3052 = vmatprep.subr.mxu0 0.0
    %3053 = vmatpush1.msra.mxu0 0.0
    %3054 = vmatprep.subr.mxu0 0.0
    %3055 = vmatpush1.msra.mxu0 0.0
    %3056 = vmatprep.subr.mxu0 0.0
    %3057 = vmatpush1.msra.mxu0 0.0
    %3058 = vmatprep.subr.mxu0 0.0
    %3059 = vmatpush1.msra.mxu0 0.0
    %3060 = vmatprep.subr.mxu0 0.0
    %3061 = vmatpush1.msra.mxu0 0.0
    %3062 = vmatprep.subr.mxu0 0.0
    %3063 = vmatpush1.msra.mxu0 0.0
    %3064 = vmatprep.subr.mxu0 0.0
    %3065 = vmatpush1.msra.mxu0 0.0
    %3066 = vmatprep.subr.mxu0 0.0
    %3067 = vmatpush1.msra.mxu0 0.0
    %3068 = vmatprep.subr.mxu0 0.0
    %3069 = vmatpush1.msra.mxu0 0.0
    %3070 = vmatprep.subr.mxu0 0.0
    %3071 = vmatpush1.msra.mxu0 0.0
    %3072 = vmatprep.subr.mxu0 0.0
    %3073 = vmatpush1.msra.mxu0 0.0
    %3074 = vmatprep.subr.mxu0 0.0
    %3075 = vmatpush1.msra.mxu0 0.0
    %3076 = vmatprep.subr.mxu0 0.0
    %3077 = vmatpush1.msra.mxu0 0.0
    %3078 = vmatprep.subr.mxu0 0.0
    %3079 = vmatpush1.msra.mxu0 0.0
    %3080 = vmatprep.subr.mxu0 0.0
    %3081 = vmatpush1.msra.mxu0 0.0
    %3082 = vmatprep.subr.mxu0 0.0
    %3083 = vmatpush1.msra.mxu0 0.0
    %3084 = vmatprep.subr.mxu0 0.0
    %3085 = vmatpush1.msra.mxu0 0.0
    %3086 = vmatprep.subr.mxu0 0.0
    %3087 = vmatpush1.msra.mxu0 0.0
    %3088 = vmatprep.mubr.f32.mxu0 0.0
    %3089 = vmatmul.mubr.f32.gmra.mrb[0].mxu0 %v2683
    %v3090 = vpop.f32.mrb[0].mxu0
    %v3091 = vadd.f32 0.0, %v3090
    %v3092 = vpop.f32.mrb[0].mxu0
    %3093 = vdwg.mxu0
    %v3094 = vadd.f32 %v2925, %v3091
    %v3095 = vtanh.pop %v3094
    %v3096 = vmul.f32 %v3095, %v125
    %v3097 = vadd.f32 %v3096, %v126
    %v3098 = vmul.f32 %v3097, %v2673
    %3100 = vrot.lane.b32.xlu0 %v3097, 64
    %v3101 = vpop.permute.xlu0 %3100
    %v3103 = vmul.f32 %v3097, %v3101
    %3105 = vrot.lane.b32.xlu0 %v3103, 32
    %v3106 = vpop.permute.xlu0 %3105
    %v3108 = vadd.f32 %v3098, %v3106
    %v3109 = vtanh.pop %v3108
    %3111 = vrot.lane.b32.xlu0 %v3109, 64
    %v3112 = vpop.permute.xlu0 %3111
    %v3114 = vmul.f32 %v3097, %v3112
    %3116 = vrot.lane.b32.xlu0 %v3114, 32
    %v3117 = vpop.permute.xlu0 %3116
    %v3118 = vsel %vm241, %v3117, 0
    %3120 = vmatprep.subr.mxu0 0.0
    %3121 = vmatpush1.msra.mxu0 %v143
    %3122 = vmatprep.subr.mxu0 0.0
    %3123 = vmatpush1.msra.mxu0 %v144
    %3124 = vmatprep.subr.mxu0 0.0
    %3125 = vmatpush1.msra.mxu0 %v145
    %3126 = vmatprep.subr.mxu0 0.0
    %3127 = vmatpush1.msra.mxu0 %v146
    %3128 = vmatprep.subr.mxu0 0.0
    %3129 = vmatpush1.msra.mxu0 0.0
    %3130 = vmatprep.subr.mxu0 0.0
    %3131 = vmatpush1.msra.mxu0 0.0
    %3132 = vmatprep.subr.mxu0 0.0
    %3133 = vmatpush1.msra.mxu0 0.0
    %3134 = vmatprep.subr.mxu0 0.0
    %3135 = vmatpush1.msra.mxu0 0.0
    %3136 = vmatprep.subr.mxu0 0.0
    %3137 = vmatpush1.msra.mxu0 0.0
    %3138 = vmatprep.subr.mxu0 0.0
    %3139 = vmatpush1.msra.mxu0 0.0
    %3140 = vmatprep.subr.mxu0 0.0
    %3141 = vmatpush1.msra.mxu0 0.0
    %3142 = vmatprep.subr.mxu0 0.0
    %3143 = vmatpush1.msra.mxu0 0.0
    %3144 = vmatprep.subr.mxu0 0.0
    %3145 = vmatpush1.msra.mxu0 0.0
    %3146 = vmatprep.subr.mxu0 0.0
    %3147 = vmatpush1.msra.mxu0 0.0
    %3148 = vmatprep.subr.mxu0 0.0
    %3149 = vmatpush1.msra.mxu0 0.0
    %3150 = vmatprep.subr.mxu0 0.0
    %3151 = vmatpush1.msra.mxu0 0.0
    %3152 = vmatprep.subr.mxu0 0.0
    %3153 = vmatpush1.msra.mxu0 0.0
    %3154 = vmatprep.subr.mxu0 0.0
    %3155 = vmatpush1.msra.mxu0 0.0
    %3156 = vmatprep.subr.mxu0 0.0
    %3157 = vmatpush1.msra.mxu0 0.0
    %3158 = vmatprep.subr.mxu0 0.0
    %3159 = vmatpush1.msra.mxu0 0.0
    %3160 = vmatprep.subr.mxu0 0.0
    %3161 = vmatpush1.msra.mxu0 0.0
    %3162 = vmatprep.subr.mxu0 0.0
    %3163 = vmatpush1.msra.mxu0 0.0
    %3164 = vmatprep.subr.mxu0 0.0
    %3165 = vmatpush1.msra.mxu0 0.0
    %3166 = vmatprep.subr.mxu0 0.0
    %3167 = vmatpush1.msra.mxu0 0.0
    %3168 = vmatprep.subr.mxu0 0.0
    %3169 = vmatpush1.msra.mxu0 0.0
    %3170 = vmatprep.subr.mxu0 0.0
    %3171 = vmatpush1.msra.mxu0 0.0
    %3172 = vmatprep.subr.mxu0 0.0
    %3173 = vmatpush1.msra.mxu0 0.0
    %3174 = vmatprep.subr.mxu0 0.0
    %3175 = vmatpush1.msra.mxu0 0.0
    %3176 = vmatprep.subr.mxu0 0.0
    %3177 = vmatpush1.msra.mxu0 0.0
    %3178 = vmatprep.subr.mxu0 0.0
    %3179 = vmatpush1.msra.mxu0 0.0
    %3180 = vmatprep.subr.mxu0 0.0
    %3181 = vmatpush1.msra.mxu0 0.0
    %3182 = vmatprep.subr.mxu0 0.0
    %3183 = vmatpush1.msra.mxu0 0.0
    %3184 = vmatprep.mubr.f32.mxu0 0.0
    %3185 = vmatmul.mubr.f32.gmra.mrb[0].mxu0 %v3118
    %v3186 = vpop.f32.mrb[0].mxu0
    %v3187 = vadd.f32 %v512, %v3186
    %v3188 = vpop.f32.mrb[0].mxu0
    %3189 = vdwg.mxu0
    %3190 = vmatprep.subr.mxu0 0.0
    %3191 = vmatpush1.msra.mxu0 %v127
    %3192 = vmatprep.subr.mxu0 0.0
    %3193 = vmatpush1.msra.mxu0 %v128
    %3194 = vmatprep.subr.mxu0 0.0
    %3195 = vmatpush1.msra.mxu0 %v129
    %3196 = vmatprep.subr.mxu0 0.0
    %3197 = vmatpush1.msra.mxu0 %v130
    %3198 = vmatprep.subr.mxu0 0.0
    %3199 = vmatpush1.msra.mxu0 0.0
    %3200 = vmatprep.subr.mxu0 0.0
    %3201 = vmatpush1.msra.mxu0 0.0
    %3202 = vmatprep.subr.mxu0 0.0
    %3203 = vmatpush1.msra.mxu0 0.0
    %3204 = vmatprep.subr.mxu0 0.0
    %3205 = vmatpush1.msra.mxu0 0.0
    %3206 = vmatprep.subr.mxu0 0.0
    %3207 = vmatpush1.msra.mxu0 0.0
    %3208 = vmatprep.subr.mxu0 0.0
    %3209 = vmatpush1.msra.mxu0 0.0
    %3210 = vmatprep.subr.mxu0 0.0
    %3211 = vmatpush1.msra.mxu0 0.0
    %3212 = vmatprep.subr.mxu0 0.0
    %3213 = vmatpush1.msra.mxu0 0.0
    %3214 = vmatprep.subr.mxu0 0.0
    %3215 = vmatpush1.msra.mxu0 0.0
    %3216 = vmatprep.subr.mxu0 0.0
    %3217 = vmatpush1.msra.mxu0 0.0
    %3218 = vmatprep.subr.mxu0 0.0
    %3219 = vmatpush1.msra.mxu0 0.0
    %3220 = vmatprep.subr.mxu0 0.0
    %3221 = vmatpush1.msra.mxu0 0.0
    %3222 = vmatprep.subr.mxu0 0.0
    %3223 = vmatpush1.msra.mxu0 0.0
    %3224 = vmatprep.subr.mxu0 0.0
    %3225 = vmatpush1.msra.mxu0 0.0
    %3226 = vmatprep.subr.mxu0 0.0
    %3227 = vmatpush1.msra.mxu0 0.0
    %3228 = vmatprep.subr.mxu0 0.0
    %3229 = vmatpush1.msra.mxu0 0.0
    %3230 = vmatprep.subr.mxu0 0.0
    %3231 = vmatpush1.msra.mxu0 0.0
    %3232 = vmatprep.subr.mxu0 0.0
    %3233 = vmatpush1.msra.mxu0 0.0
    %3234 = vmatprep.subr.mxu0 0.0
    %3235 = vmatpush1.msra.mxu0 0.0
    %3236 = vmatprep.subr.mxu0 0.0
    %3237 = vmatpush1.msra.mxu0 0.0
    %3238 = vmatprep.subr.mxu0 0.0
    %3239 = vmatpush1.msra.mxu0 0.0
    %3240 = vmatprep.subr.mxu0 0.0
    %3241 = vmatpush1.msra.mxu0 0.0
    %3242 = vmatprep.subr.mxu0 0.0
    %3243 = vmatpush1.msra.mxu0 0.0
    %3244 = vmatprep.subr.mxu0 0.0
    %3245 = vmatpush1.msra.mxu0 0.0
    %3246 = vmatprep.subr.mxu0 0.0
    %3247 = vmatpush1.msra.mxu0 0.0
    %3248 = vmatprep.subr.mxu0 0.0
    %3249 = vmatpush1.msra.mxu0 0.0
    %3250 = vmatprep.subr.mxu0 0.0
    %3251 = vmatpush1.msra.mxu0 0.0
    %3252 = vmatprep.subr.mxu0 0.0
    %3253 = vmatpush1.msra.mxu0 0.0
    %3254 = vmatprep.mubr.f32.mxu0 0.0
    %3255 = vmatmul.mubr.f32.gmra.mrb[0].mxu0 %v2856
    %v3256 = vpop.f32.mrb[0].mxu0
    %v3257 = vadd.f32 0.0, %v3256
    %v3258 = vpop.f32.mrb[0].mxu0
    %3259 = vdwg.mxu0
    %v3261 = vrot.slane %v3257, 2
    %v3263 = vadd.f32 %v238, %v3261
    %v3264 = vtanh.pop %v3263
    %v3265 = vmul.f32 %v3264, %v125
    %v3266 = vadd.f32 %v3265, %v126
    %v3268 = vrot.slane %v2845, 6
    %v3270 = vmul.f32 %v3266, %v3268
    %3272 = vrot.lane.b32.xlu0 %v3266, 64
    %v3273 = vpop.permute.xlu0 %3272
    %v3275 = vmul.f32 %v3266, %v3273
    %3277 = vrot.lane.b32.xlu0 %v3275, 32
    %v3278 = vpop.permute.xlu0 %3277
    %v3280 = vadd.f32 %v3270, %v3278
    %v3281 = vtanh.pop %v3280
    %3283 = vrot.lane.b32.xlu0 %v3281, 64
    %v3284 = vpop.permute.xlu0 %3283
    %v3286 = vmul.f32 %v3266, %v3284
    %v3288 = vrot.slane %v3286, 6
    %3289 = vrot.lane.b32.xlu0 %v3288, 32
    %v3290 = vpop.permute.xlu0 %3289
    %v3291 = vsel %vm241, %v3290, 0
    %3293 = vmatprep.subr.mxu0 0.0
    %3294 = vmatpush1.msra.mxu0 %v139
    %3295 = vmatprep.subr.mxu0 0.0
    %3296 = vmatpush1.msra.mxu0 %v140
    %3297 = vmatprep.subr.mxu0 0.0
    %3298 = vmatpush1.msra.mxu0 %v141
    %3299 = vmatprep.subr.mxu0 0.0
    %3300 = vmatpush1.msra.mxu0 %v142
    %3301 = vmatprep.subr.mxu0 0.0
    %3302 = vmatpush1.msra.mxu0 0.0
    %3303 = vmatprep.subr.mxu0 0.0
    %3304 = vmatpush1.msra.mxu0 0.0
    %3305 = vmatprep.subr.mxu0 0.0
    %3306 = vmatpush1.msra.mxu0 0.0
    %3307 = vmatprep.subr.mxu0 0.0
    %3308 = vmatpush1.msra.mxu0 0.0
    %3309 = vmatprep.subr.mxu0 0.0
    %3310 = vmatpush1.msra.mxu0 0.0
    %3311 = vmatprep.subr.mxu0 0.0
    %3312 = vmatpush1.msra.mxu0 0.0
    %3313 = vmatprep.subr.mxu0 0.0
    %3314 = vmatpush1.msra.mxu0 0.0
    %3315 = vmatprep.subr.mxu0 0.0
    %3316 = vmatpush1.msra.mxu0 0.0
    %3317 = vmatprep.subr.mxu0 0.0
    %3318 = vmatpush1.msra.mxu0 0.0
    %3319 = vmatprep.subr.mxu0 0.0
    %3320 = vmatpush1.msra.mxu0 0.0
    %3321 = vmatprep.subr.mxu0 0.0
    %3322 = vmatpush1.msra.mxu0 0.0
    %3323 = vmatprep.subr.mxu0 0.0
    %3324 = vmatpush1.msra.mxu0 0.0
    %3325 = vmatprep.subr.mxu0 0.0
    %3326 = vmatpush1.msra.mxu0 0.0
    %3327 = vmatprep.subr.mxu0 0.0
    %3328 = vmatpush1.msra.mxu0 0.0
    %3329 = vmatprep.subr.mxu0 0.0
    %3330 = vmatpush1.msra.mxu0 0.0
    %3331 = vmatprep.subr.mxu0 0.0
    %3332 = vmatpush1.msra.mxu0 0.0
    %3333 = vmatprep.subr.mxu0 0.0
    %3334 = vmatpush1.msra.mxu0 0.0
    %3335 = vmatprep.subr.mxu0 0.0
    %3336 = vmatpush1.msra.mxu0 0.0
    %3337 = vmatprep.subr.mxu0 0.0
    %3338 = vmatpush1.msra.mxu0 0.0
    %3339 = vmatprep.subr.mxu0 0.0
    %3340 = vmatpush1.msra.mxu0 0.0
    %3341 = vmatprep.subr.mxu0 0.0
    %3342 = vmatpush1.msra.mxu0 0.0
    %3343 = vmatprep.subr.mxu0 0.0
    %3344 = vmatpush1.msra.mxu0 0.0
    %3345 = vmatprep.subr.mxu0 0.0
    %3346 = vmatpush1.msra.mxu0 0.0
    %3347 = vmatprep.subr.mxu0 0.0
    %3348 = vmatpush1.msra.mxu0 0.0
    %3349 = vmatprep.subr.mxu0 0.0
    %3350 = vmatpush1.msra.mxu0 0.0
    %3351 = vmatprep.subr.mxu0 0.0
    %3352 = vmatpush1.msra.mxu0 0.0
    %3353 = vmatprep.subr.mxu0 0.0
    %3354 = vmatpush1.msra.mxu0 0.0
    %3355 = vmatprep.subr.mxu0 0.0
    %3356 = vmatpush1.msra.mxu0 0.0
    %3357 = vmatprep.mubr.f32.mxu0 0.0
    %3358 = vmatmul.mubr.f32.gmra.mrb[0].mxu0 %v3291
    %v3359 = vpop.f32.mrb[0].mxu0
    %v3360 = vadd.f32 %v340, %v3359
    %v3361 = vpop.f32.mrb[0].mxu0
    %3362 = vdwg.mxu0
    %3364 = vrot.lane.b32.xlu0 %v3023, 32
    %v3365 = vpop.permute.xlu0 %3364
    %v3366 = vsel %vm241, %v3365, 0
    %3368 = vmatprep.subr.mxu0 0.0
    %3369 = vmatpush1.msra.mxu0 %v135
    %3370 = vmatprep.subr.mxu0 0.0
    %3371 = vmatpush1.msra.mxu0 %v136
    %3372 = vmatprep.subr.mxu0 0.0
    %3373 = vmatpush1.msra.mxu0 %v137
    %3374 = vmatprep.subr.mxu0 0.0
    %3375 = vmatpush1.msra.mxu0 %v138
    %3376 = vmatprep.subr.mxu0 0.0
    %3377 = vmatpush1.msra.mxu0 0.0
    %3378 = vmatprep.subr.mxu0 0.0
    %3379 = vmatpush1.msra.mxu0 0.0
    %3380 = vmatprep.subr.mxu0 0.0
    %3381 = vmatpush1.msra.mxu0 0.0
    %3382 = vmatprep.subr.mxu0 0.0
    %3383 = vmatpush1.msra.mxu0 0.0
    %3384 = vmatprep.subr.mxu0 0.0
    %3385 = vmatpush1.msra.mxu0 0.0
    %3386 = vmatprep.subr.mxu0 0.0
    %3387 = vmatpush1.msra.mxu0 0.0
    %3388 = vmatprep.subr.mxu0 0.0
    %3389 = vmatpush1.msra.mxu0 0.0
    %3390 = vmatprep.subr.mxu0 0.0
    %3391 = vmatpush1.msra.mxu0 0.0
    %3392 = vmatprep.subr.mxu0 0.0
    %3393 = vmatpush1.msra.mxu0 0.0
    %3394 = vmatprep.subr.mxu0 0.0
    %3395 = vmatpush1.msra.mxu0 0.0
    %3396 = vmatprep.subr.mxu0 0.0
    %3397 = vmatpush1.msra.mxu0 0.0
    %3398 = vmatprep.subr.mxu0 0.0
    %3399 = vmatpush1.msra.mxu0 0.0
    %3400 = vmatprep.subr.mxu0 0.0
    %3401 = vmatpush1.msra.mxu0 0.0
    %3402 = vmatprep.subr.mxu0 0.0
    %3403 = vmatpush1.msra.mxu0 0.0
    %3404 = vmatprep.subr.mxu0 0.0
    %3405 = vmatpush1.msra.mxu0 0.0
    %3406 = vmatprep.subr.mxu0 0.0
    %3407 = vmatpush1.msra.mxu0 0.0
    %3408 = vmatprep.subr.mxu0 0.0
    %3409 = vmatpush1.msra.mxu0 0.0
    %3410 = vmatprep.subr.mxu0 0.0
    %3411 = vmatpush1.msra.mxu0 0.0
    %3412 = vmatprep.subr.mxu0 0.0
    %3413 = vmatpush1.msra.mxu0 0.0
    %3414 = vmatprep.subr.mxu0 0.0
    %3415 = vmatpush1.msra.mxu0 0.0
    %3416 = vmatprep.subr.mxu0 0.0
    %3417 = vmatpush1.msra.mxu0 0.0
    %3418 = vmatprep.subr.mxu0 0.0
    %3419 = vmatpush1.msra.mxu0 0.0
    %3420 = vmatprep.subr.mxu0 0.0
    %3421 = vmatpush1.msra.mxu0 0.0
    %3422 = vmatprep.subr.mxu0 0.0
    %3423 = vmatpush1.msra.mxu0 0.0
    %3424 = vmatprep.subr.mxu0 0.0
    %3425 = vmatpush1.msra.mxu0 0.0
    %3426 = vmatprep.subr.mxu0 0.0
    %3427 = vmatpush1.msra.mxu0 0.0
    %3428 = vmatprep.subr.mxu0 0.0
    %3429 = vmatpush1.msra.mxu0 0.0
    %3430 = vmatprep.subr.mxu0 0.0
    %3431 = vmatpush1.msra.mxu0 0.0
    %3432 = vmatprep.mubr.f32.mxu0 0.0
    %3433 = vmatmul.mubr.f32.gmra.mrb[0].mxu0 %v3366
    %v3434 = vpop.f32.mrb[0].mxu0
    %v3435 = vadd.f32 0.0, %v3434
    %v3436 = vpop.f32.mrb[0].mxu0
    %3437 = vdwg.mxu0
    %v3438 = vadd.f32 %v3187, %v3435
    %v3439 = vtanh.pop %v3438
    %v3440 = vmul.f32 %v3439, %v125
    %v3441 = vadd.f32 %v3440, %v126
    %v3442 = vmul.f32 %v3441, %v3017
    %3444 = vrot.lane.b32.xlu0 %v3441, 64
    %v3445 = vpop.permute.xlu0 %3444
    %v3447 = vmul.f32 %v3441, %v3445
    %3449 = vrot.lane.b32.xlu0 %v3447, 32
    %v3450 = vpop.permute.xlu0 %3449
    %v3452 = vadd.f32 %v3442, %v3450
    %v3453 = vtanh.pop %v3452
    %3455 = vrot.lane.b32.xlu0 %v3453, 64
    %v3456 = vpop.permute.xlu0 %3455
    %v3458 = vmul.f32 %v3441, %v3456
    %3459 = vmatprep.subr.mxu0 0.0
    %3460 = vmatpush1.msra.mxu0 %v131
    %3461 = vmatprep.subr.mxu0 0.0
    %3462 = vmatpush1.msra.mxu0 %v132
    %3463 = vmatprep.subr.mxu0 0.0
    %3464 = vmatpush1.msra.mxu0 %v133
    %3465 = vmatprep.subr.mxu0 0.0
    %3466 = vmatpush1.msra.mxu0 %v134
    %3467 = vmatprep.subr.mxu0 0.0
    %3468 = vmatpush1.msra.mxu0 0.0
    %3469 = vmatprep.subr.mxu0 0.0
    %3470 = vmatpush1.msra.mxu0 0.0
    %3471 = vmatprep.subr.mxu0 0.0
    %3472 = vmatpush1.msra.mxu0 0.0
    %3473 = vmatprep.subr.mxu0 0.0
    %3474 = vmatpush1.msra.mxu0 0.0
    %3475 = vmatprep.subr.mxu0 0.0
    %3476 = vmatpush1.msra.mxu0 0.0
    %3477 = vmatprep.subr.mxu0 0.0
    %3478 = vmatpush1.msra.mxu0 0.0
    %3479 = vmatprep.subr.mxu0 0.0
    %3480 = vmatpush1.msra.mxu0 0.0
    %3481 = vmatprep.subr.mxu0 0.0
    %3482 = vmatpush1.msra.mxu0 0.0
    %3483 = vmatprep.subr.mxu0 0.0
    %3484 = vmatpush1.msra.mxu0 0.0
    %3485 = vmatprep.subr.mxu0 0.0
    %3486 = vmatpush1.msra.mxu0 0.0
    %3487 = vmatprep.subr.mxu0 0.0
    %3488 = vmatpush1.msra.mxu0 0.0
    %3489 = vmatprep.subr.mxu0 0.0
    %3490 = vmatpush1.msra.mxu0 0.0
    %3491 = vmatprep.subr.mxu0 0.0
    %3492 = vmatpush1.msra.mxu0 0.0
    %3493 = vmatprep.subr.mxu0 0.0
    %3494 = vmatpush1.msra.mxu0 0.0
    %3495 = vmatprep.subr.mxu0 0.0
    %3496 = vmatpush1.msra.mxu0 0.0
    %3497 = vmatprep.subr.mxu0 0.0
    %3498 = vmatpush1.msra.mxu0 0.0
    %3499 = vmatprep.subr.mxu0 0.0
    %3500 = vmatpush1.msra.mxu0 0.0
    %3501 = vmatprep.subr.mxu0 0.0
    %3502 = vmatpush1.msra.mxu0 0.0
    %3503 = vmatprep.subr.mxu0 0.0
    %3504 = vmatpush1.msra.mxu0 0.0
    %3505 = vmatprep.subr.mxu0 0.0
    %3506 = vmatpush1.msra.mxu0 0.0
    %3507 = vmatprep.subr.mxu0 0.0
    %3508 = vmatpush1.msra.mxu0 0.0
    %3509 = vmatprep.subr.mxu0 0.0
    %3510 = vmatpush1.msra.mxu0 0.0
    %3511 = vmatprep.subr.mxu0 0.0
    %3512 = vmatpush1.msra.mxu0 0.0
    %3513 = vmatprep.subr.mxu0 0.0
    %3514 = vmatpush1.msra.mxu0 0.0
    %3515 = vmatprep.subr.mxu0 0.0
    %3516 = vmatpush1.msra.mxu0 0.0
    %3517 = vmatprep.subr.mxu0 0.0
    %3518 = vmatpush1.msra.mxu0 0.0
    %3519 = vmatprep.subr.mxu0 0.0
    %3520 = vmatpush1.msra.mxu0 0.0
    %3521 = vmatprep.subr.mxu0 0.0
    %3522 = vmatpush1.msra.mxu0 0.0
    %3523 = vmatprep.mubr.f32.mxu0 0.0
    %3524 = vmatmul.mubr.f32.gmra.mrb[0].mxu0 %v3118
    %v3525 = vpop.f32.mrb[0].mxu0
    %v3526 = vadd.f32 0.0, %v3525
    %v3527 = vpop.f32.mrb[0].mxu0
    %3528 = vdwg.mxu0
    %v3529 = vadd.f32 %v3360, %v3526
    %v3530 = vtanh.pop %v3529
    %v3531 = vmul.f32 %v3530, %v125
    %v3532 = vadd.f32 %v3531, %v126
    %v3533 = vmul.f32 %v3532, %v3108
    %3535 = vrot.lane.b32.xlu0 %v3532, 64
    %v3536 = vpop.permute.xlu0 %3535
    %v3538 = vmul.f32 %v3532, %v3536
    %3540 = vrot.lane.b32.xlu0 %v3538, 32
    %v3541 = vpop.permute.xlu0 %3540
    %v3543 = vadd.f32 %v3533, %v3541
    %v3544 = vtanh.pop %v3543
    %3546 = vrot.lane.b32.xlu0 %v3544, 64
    %v3547 = vpop.permute.xlu0 %3546
    %v3549 = vmul.f32 %v3532, %v3547
    %3551 = vrot.lane.b32.xlu0 %v3549, 32
    %v3552 = vpop.permute.xlu0 %3551
    %v3553 = vsel %vm241, %v3552, 0
    %3555 = vmatprep.subr.mxu0 0.0
    %3556 = vmatpush1.msra.mxu0 %v143
    %3557 = vmatprep.subr.mxu0 0.0
    %3558 = vmatpush1.msra.mxu0 %v144
    %3559 = vmatprep.subr.mxu0 0.0
    %3560 = vmatpush1.msra.mxu0 %v145
    %3561 = vmatprep.subr.mxu0 0.0
    %3562 = vmatpush1.msra.mxu0 %v146
    %3563 = vmatprep.subr.mxu0 0.0
    %3564 = vmatpush1.msra.mxu0 0.0
    %3565 = vmatprep.subr.mxu0 0.0
    %3566 = vmatpush1.msra.mxu0 0.0
    %3567 = vmatprep.subr.mxu0 0.0
    %3568 = vmatpush1.msra.mxu0 0.0
    %3569 = vmatprep.subr.mxu0 0.0
    %3570 = vmatpush1.msra.mxu0 0.0
    %3571 = vmatprep.subr.mxu0 0.0
    %3572 = vmatpush1.msra.mxu0 0.0
    %3573 = vmatprep.subr.mxu0 0.0
    %3574 = vmatpush1.msra.mxu0 0.0
    %3575 = vmatprep.subr.mxu0 0.0
    %3576 = vmatpush1.msra.mxu0 0.0
    %3577 = vmatprep.subr.mxu0 0.0
    %3578 = vmatpush1.msra.mxu0 0.0
    %3579 = vmatprep.subr.mxu0 0.0
    %3580 = vmatpush1.msra.mxu0 0.0
    %3581 = vmatprep.subr.mxu0 0.0
    %3582 = vmatpush1.msra.mxu0 0.0
    %3583 = vmatprep.subr.mxu0 0.0
    %3584 = vmatpush1.msra.mxu0 0.0
    %3585 = vmatprep.subr.mxu0 0.0
    %3586 = vmatpush1.msra.mxu0 0.0
    %3587 = vmatprep.subr.mxu0 0.0
    %3588 = vmatpush1.msra.mxu0 0.0
    %3589 = vmatprep.subr.mxu0 0.0
    %3590 = vmatpush1.msra.mxu0 0.0
    %3591 = vmatprep.subr.mxu0 0.0
    %3592 = vmatpush1.msra.mxu0 0.0
    %3593 = vmatprep.subr.mxu0 0.0
    %3594 = vmatpush1.msra.mxu0 0.0
    %3595 = vmatprep.subr.mxu0 0.0
    %3596 = vmatpush1.msra.mxu0 0.0
    %3597 = vmatprep.subr.mxu0 0.0
    %3598 = vmatpush1.msra.mxu0 0.0
    %3599 = vmatprep.subr.mxu0 0.0
    %3600 = vmatpush1.msra.mxu0 0.0
    %3601 = vmatprep.subr.mxu0 0.0
    %3602 = vmatpush1.msra.mxu0 0.0
    %3603 = vmatprep.subr.mxu0 0.0
    %3604 = vmatpush1.msra.mxu0 0.0
    %3605 = vmatprep.subr.mxu0 0.0
    %3606 = vmatpush1.msra.mxu0 0.0
    %3607 = vmatprep.subr.mxu0 0.0
    %3608 = vmatpush1.msra.mxu0 0.0
    %3609 = vmatprep.subr.mxu0 0.0
    %3610 = vmatpush1.msra.mxu0 0.0
    %3611 = vmatprep.subr.mxu0 0.0
    %3612 = vmatpush1.msra.mxu0 0.0
    %3613 = vmatprep.subr.mxu0 0.0
    %3614 = vmatpush1.msra.mxu0 0.0
    %3615 = vmatprep.subr.mxu0 0.0
    %3616 = vmatpush1.msra.mxu0 0.0
    %3617 = vmatprep.subr.mxu0 0.0
    %3618 = vmatpush1.msra.mxu0 0.0
    %3619 = vmatprep.mubr.f32.mxu0 0.0
    %3620 = vmatmul.mubr.f32.gmra.mrb[0].mxu0 %v3553
    %v3621 = vpop.f32.mrb[0].mxu0
    %v3622 = vadd.f32 %v512, %v3621
    %v3623 = vpop.f32.mrb[0].mxu0
    %3624 = vdwg.mxu0
    %3626 = vrot.lane.b32.xlu0 %v3458, 32
    %v3627 = vpop.permute.xlu0 %3626
    %v3628 = vsel %vm241, %v3627, 0
    %3630 = vmatprep.subr.mxu0 0.0
    %3631 = vmatpush1.msra.mxu0 %v135
    %3632 = vmatprep.subr.mxu0 0.0
    %3633 = vmatpush1.msra.mxu0 %v136
    %3634 = vmatprep.subr.mxu0 0.0
    %3635 = vmatpush1.msra.mxu0 %v137
    %3636 = vmatprep.subr.mxu0 0.0
    %3637 = vmatpush1.msra.mxu0 %v138
    %3638 = vmatprep.subr.mxu0 0.0
    %3639 = vmatpush1.msra.mxu0 0.0
    %3640 = vmatprep.subr.mxu0 0.0
    %3641 = vmatpush1.msra.mxu0 0.0
    %3642 = vmatprep.subr.mxu0 0.0
    %3643 = vmatpush1.msra.mxu0 0.0
    %3644 = vmatprep.subr.mxu0 0.0
    %3645 = vmatpush1.msra.mxu0 0.0
    %3646 = vmatprep.subr.mxu0 0.0
    %3647 = vmatpush1.msra.mxu0 0.0
    %3648 = vmatprep.subr.mxu0 0.0
    %3649 = vmatpush1.msra.mxu0 0.0
    %3650 = vmatprep.subr.mxu0 0.0
    %3651 = vmatpush1.msra.mxu0 0.0
    %3652 = vmatprep.subr.mxu0 0.0
    %3653 = vmatpush1.msra.mxu0 0.0
    %3654 = vmatprep.subr.mxu0 0.0
    %3655 = vmatpush1.msra.mxu0 0.0
    %3656 = vmatprep.subr.mxu0 0.0
    %3657 = vmatpush1.msra.mxu0 0.0
    %3658 = vmatprep.subr.mxu0 0.0
    %3659 = vmatpush1.msra.mxu0 0.0
    %3660 = vmatprep.subr.mxu0 0.0
    %3661 = vmatpush1.msra.mxu0 0.0
    %3662 = vmatprep.subr.mxu0 0.0
    %3663 = vmatpush1.msra.mxu0 0.0
    %3664 = vmatprep.subr.mxu0 0.0
    %3665 = vmatpush1.msra.mxu0 0.0
    %3666 = vmatprep.subr.mxu0 0.0
    %3667 = vmatpush1.msra.mxu0 0.0
    %3668 = vmatprep.subr.mxu0 0.0
    %3669 = vmatpush1.msra.mxu0 0.0
    %3670 = vmatprep.subr.mxu0 0.0
    %3671 = vmatpush1.msra.mxu0 0.0
    %3672 = vmatprep.subr.mxu0 0.0
    %3673 = vmatpush1.msra.mxu0 0.0
    %3674 = vmatprep.subr.mxu0 0.0
    %3675 = vmatpush1.msra.mxu0 0.0
    %3676 = vmatprep.subr.mxu0 0.0
    %3677 = vmatpush1.msra.mxu0 0.0
    %3678 = vmatprep.subr.mxu0 0.0
    %3679 = vmatpush1.msra.mxu0 0.0
    %3680 = vmatprep.subr.mxu0 0.0
    %3681 = vmatpush1.msra.mxu0 0.0
    %3682 = vmatprep.subr.mxu0 0.0
    %3683 = vmatpush1.msra.mxu0 0.0
    %3684 = vmatprep.subr.mxu0 0.0
    %3685 = vmatpush1.msra.mxu0 0.0
    %3686 = vmatprep.subr.mxu0 0.0
    %3687 = vmatpush1.msra.mxu0 0.0
    %3688 = vmatprep.subr.mxu0 0.0
    %3689 = vmatpush1.msra.mxu0 0.0
    %3690 = vmatprep.subr.mxu0 0.0
    %3691 = vmatpush1.msra.mxu0 0.0
    %3692 = vmatprep.subr.mxu0 0.0
    %3693 = vmatpush1.msra.mxu0 0.0
    %3694 = vmatprep.mubr.f32.mxu0 0.0
    %3695 = vmatmul.mubr.f32.gmra.mrb[0].mxu0 %v3628
    %v3696 = vpop.f32.mrb[0].mxu0
    %v3697 = vadd.f32 0.0, %v3696
    %v3698 = vpop.f32.mrb[0].mxu0
    %3699 = vdwg.mxu0
    %v3700 = vadd.f32 %v3622, %v3697
    %v3701 = vtanh.pop %v3700
    %v3702 = vmul.f32 %v3701, %v125
    %v3703 = vadd.f32 %v3702, %v126
    %v3704 = vmul.f32 %v3703, %v3452
    %3706 = vrot.lane.b32.xlu0 %v3703, 64
    %v3707 = vpop.permute.xlu0 %3706
    %v3709 = vmul.f32 %v3703, %v3707
    %3711 = vrot.lane.b32.xlu0 %v3709, 32
    %v3712 = vpop.permute.xlu0 %3711
    %v3714 = vadd.f32 %v3704, %v3712
    %v3715 = vtanh.pop %v3714
    %3717 = vrot.lane.b32.xlu0 %v3715, 64
    %v3718 = vpop.permute.xlu0 %3717
    %v3720 = vmul.f32 %v3703, %v3718
    %v3721 = vld [vmem:[#allocation10] sm:$0xff]
    %v3722 = vld [vmem:[#allocation10 + $0x8] sm:$0xff]
    %v3723 = vld [vmem:[#allocation10 + $0x10] sm:$0xff]
    %v3724 = vld [vmem:[#allocation10 + $0x18] sm:$0xff]
    %v3725 = vld [vmem:[#allocation11] sm:$0x1]
    %v3727 = vlaneseq
    %v3728 = vshrl.u32 %v3727, 7
    %v3729 = vsub.s32 0, %v3728
    %v3730 = vrot.slane %v3725, %v3729
    %3733 = vrot.lane.b32.xlu0 %v3720, 32
    %v3734 = vpop.permute.xlu0 %3733
    %v3735 = vsel %vm241, %v3734, 0
    %3737 = vmatprep.subr.mxu0 0.0
    %3738 = vmatpush1.msra.mxu0 %v3721
    %3739 = vmatprep.subr.mxu0 0.0
    %3740 = vmatpush1.msra.mxu0 %v3722
    %3741 = vmatprep.subr.mxu0 0.0
    %3742 = vmatpush1.msra.mxu0 %v3723
    %3743 = vmatprep.subr.mxu0 0.0
    %3744 = vmatpush1.msra.mxu0 %v3724
    %3745 = vmatprep.subr.mxu0 0.0
    %3746 = vmatpush1.msra.mxu0 0.0
    %3747 = vmatprep.subr.mxu0 0.0
    %3748 = vmatpush1.msra.mxu0 0.0
    %3749 = vmatprep.subr.mxu0 0.0
    %3750 = vmatpush1.msra.mxu0 0.0
    %3751 = vmatprep.subr.mxu0 0.0
    %3752 = vmatpush1.msra.mxu0 0.0
    %3753 = vmatprep.subr.mxu0 0.0
    %3754 = vmatpush1.msra.mxu0 0.0
    %3755 = vmatprep.subr.mxu0 0.0
    %3756 = vmatpush1.msra.mxu0 0.0
    %3757 = vmatprep.subr.mxu0 0.0
    %3758 = vmatpush1.msra.mxu0 0.0
    %3759 = vmatprep.subr.mxu0 0.0
    %3760 = vmatpush1.msra.mxu0 0.0
    %3761 = vmatprep.subr.mxu0 0.0
    %3762 = vmatpush1.msra.mxu0 0.0
    %3763 = vmatprep.subr.mxu0 0.0
    %3764 = vmatpush1.msra.mxu0 0.0
    %3765 = vmatprep.subr.mxu0 0.0
    %3766 = vmatpush1.msra.mxu0 0.0
    %3767 = vmatprep.subr.mxu0 0.0
    %3768 = vmatpush1.msra.mxu0 0.0
    %3769 = vmatprep.subr.mxu0 0.0
    %3770 = vmatpush1.msra.mxu0 0.0
    %3771 = vmatprep.subr.mxu0 0.0
    %3772 = vmatpush1.msra.mxu0 0.0
    %3773 = vmatprep.subr.mxu0 0.0
    %3774 = vmatpush1.msra.mxu0 0.0
    %3775 = vmatprep.subr.mxu0 0.0
    %3776 = vmatpush1.msra.mxu0 0.0
    %3777 = vmatprep.subr.mxu0 0.0
    %3778 = vmatpush1.msra.mxu0 0.0
    %3779 = vmatprep.subr.mxu0 0.0
    %3780 = vmatpush1.msra.mxu0 0.0
    %3781 = vmatprep.subr.mxu0 0.0
    %3782 = vmatpush1.msra.mxu0 0.0
    %3783 = vmatprep.subr.mxu0 0.0
    %3784 = vmatpush1.msra.mxu0 0.0
    %3785 = vmatprep.subr.mxu0 0.0
    %3786 = vmatpush1.msra.mxu0 0.0
    %3787 = vmatprep.subr.mxu0 0.0
    %3788 = vmatpush1.msra.mxu0 0.0
    %3789 = vmatprep.subr.mxu0 0.0
    %3790 = vmatpush1.msra.mxu0 0.0
    %3791 = vmatprep.subr.mxu0 0.0
    %3792 = vmatpush1.msra.mxu0 0.0
    %3793 = vmatprep.subr.mxu0 0.0
    %3794 = vmatpush1.msra.mxu0 0.0
    %3795 = vmatprep.subr.mxu0 0.0
    %3796 = vmatpush1.msra.mxu0 0.0
    %3797 = vmatprep.subr.mxu0 0.0
    %3798 = vmatpush1.msra.mxu0 0.0
    %3799 = vmatprep.subr.mxu0 0.0
    %3800 = vmatpush1.msra.mxu0 0.0
    %3801 = vmatprep.mubr.f32.mxu0 0.0
    %3802 = vmatmul.mubr.f32.gmra.mrb[0].mxu0 %v3735
    %v3803 = vpop.f32.mrb[0].mxu0
    %v3804 = vadd.f32 %v3730, %v3803
    %v3805 = vpop.f32.mrb[0].mxu0
    %3806 = vdwg.mxu0
    %3807 = vst [vmem:[#allocation13] sm:$0x3] %v3804
    // Predicated region
    $region74: #{lstm_model_forward_pallas.1} parent=1 // pred_check
      _
    $region75: #{lstm_model_forward_pallas.1} parent=1 // pred_check_branch
      %3809 = sbr.rel (0) target = $region77
    $region76: #{lstm_model_forward_pallas.1} parent=1 // pred_region
      %s3811 = ssub.s32 32, 32
      %3812 = vsyncadd [#allocation4], %s3811
      %s3814 = sshll.u32 [#allocation13], 4
      %s3815 = int_to_ptr.vmem [resolvable:$true] %s3814
      %3817 = dma.vmem_to_hbm [thread:$0]  %s3815, 32, %s12, [#allocation4]
    $region77: #{lstm_model_forward_pallas.1} parent=1 // pred_fallthru
      _
    // Predicated region
    $region78: #{lstm_model_forward_pallas.1} parent=1 // pred_check
      _
    $region79: #{lstm_model_forward_pallas.1} parent=1 // pred_check_branch
      %3819 = sbr.rel (0) target = $region81
    $region80: #{lstm_model_forward_pallas.1} parent=1 // pred_region
      %3820 = dma.done [#allocation4], 32
    $region81: #{lstm_model_forward_pallas.1} parent=1 // pred_fallthru
      _
    %3821 = vsyncpa [#allocation3], 1
    %3822 = vsyncpa [#allocation6], 1
    %3823 = vsyncpa [#allocation9], 1
    %3824 = vsyncpa [#allocation12], 1
    %3825 = vsyncpa [#allocation4], 1

</llo_original>
